<compile_context>
chip_gen: v5e
topology: v5e:2x2
jax: 0.10.0
libtpu: 0.0.40
codegen_flags: <defaults>
</compile_context>

<pallas_src>
import functools

import jax
import jax.numpy as jnp
from jax import lax
from jax.experimental import pallas as pl
from jax.experimental.pallas import tpu as pltpu

_BN_EPS = 1e-5
_LRELU_SLOPE = 0.2
_OC_PAD = 128                    # lane-dense output width
_TM_CAP = 1024                   # M-tile cap (tiles small enough for v7x 64 MiB VMEM)
_VMEM_LIMIT = 32 * 1024 * 1024   # explicit scoped-VMEM limit (safe on v5e/v6e/v7x)


def _round_up(x, m):
    return ((x + m - 1) // m) * m


def _conv_bn_lrelu_kernel(patches_ref, w_ref, gamma_ref, beta_ref, out_ref,
                          stats_ref, *, inv_m):
    """Fused Conv (im2col matmul, bf16 MXU / f32 acc) + BatchNorm2d + LeakyReLU.

    grid = (2, n_tiles):
      phase 0: accumulate per-channel sum / sum-of-squares into VMEM scratch.
      phase 1: recompute the conv tile and apply normalize + LeakyReLU(0.2).
    """
    phase = pl.program_id(0)
    i = pl.program_id(1)

    conv = jnp.dot(patches_ref[...], w_ref[...],
                   preferred_element_type=jnp.float32)

    @pl.when(jnp.logical_and(phase == 0, i == 0))
    def _():
        stats_ref[...] = jnp.zeros_like(stats_ref)

    @pl.when(phase == 0)
    def _():
        stats_ref[...] += jnp.concatenate(
            [jnp.sum(conv, axis=0, keepdims=True),
             jnp.sum(conv * conv, axis=0, keepdims=True)],
            axis=0)

    @pl.when(phase == 1)
    def _():
        mean = stats_ref[0:1, :] * inv_m
        var = stats_ref[1:2, :] * inv_m - mean * mean
        scale = gamma_ref[...] * lax.rsqrt(var + _BN_EPS)
        shift = beta_ref[...] - mean * scale
        y = conv * scale + shift
        out_ref[...] = jnp.where(y >= 0, y, _LRELU_SLOPE * y)


def _im2col(x_nhwc, kh, kw, stride):
    """Extract conv patches; feature order (C, KH, KW) to match PyTorch weights."""
    B, H, W, C = x_nhwc.shape
    OH = (H - kh) // stride + 1
    OW = (W - kw) // stride + 1
    rows = []
    for i in range(kh):
        cols = []
        for j in range(kw):
            cols.append(x_nhwc[:, i:i + stride * OH:stride, j:j + stride * OW:stride, :])
        rows.append(jnp.stack(cols, axis=3))              # (B, OH, OW, KW, C)
    patches = jnp.stack(rows, axis=3)                     # (B, OH, OW, KH, KW, C)
    patches = jnp.transpose(patches, (0, 1, 2, 5, 3, 4))  # (B, OH, OW, C, KH, KW)
    return patches.reshape(B * OH * OW, C * kh * kw), (B, OH, OW)


def _conv_block_bn_lrelu(x_nhwc, w, gamma, beta, stride):
    oc, ic, kh, kw = w.shape
    patches, (B, OH, OW) = _im2col(x_nhwc, kh, kw, stride)
    M, K = patches.shape

    TM = min(_TM_CAP, _round_up(M, 16))
    M_pad = _round_up(M, TM)
    n_tiles = M_pad // TM

    # bf16 matmul operands; zero-pad M (rows) and OC (lanes -> 128).
    patches_p = jnp.pad(patches, ((0, M_pad - M), (0, 0))).astype(jnp.bfloat16)
    # PyTorch Conv2d weight (OC, IC, KH, KW) -> (K, OC_PAD), K ordered (C, KH, KW).
    # The conv bias is omitted: BatchNorm mean subtraction cancels it exactly.
    w_mat = jnp.transpose(w.reshape(oc, ic * kh * kw))
    w_mat = jnp.pad(w_mat, ((0, 0), (0, _OC_PAD - oc))).astype(jnp.bfloat16)
    gamma_p = jnp.pad(gamma.reshape(1, oc), ((0, 0), (0, _OC_PAD - oc)))
    beta_p = jnp.pad(beta.reshape(1, oc), ((0, 0), (0, _OC_PAD - oc)))

    out = pl.pallas_call(
        functools.partial(_conv_bn_lrelu_kernel, inv_m=1.0 / M),
        out_shape=jax.ShapeDtypeStruct((M_pad, _OC_PAD), jnp.float32),
        grid_spec=pltpu.PrefetchScalarGridSpec(
            num_scalar_prefetch=0,
            grid=(2, n_tiles),
            in_specs=[pl.BlockSpec((TM, K), lambda p, i: (i, 0)),
                      pl.BlockSpec((K, _OC_PAD), lambda p, i: (0, 0)),
                      pl.BlockSpec((1, _OC_PAD), lambda p, i: (0, 0)),
                      pl.BlockSpec((1, _OC_PAD), lambda p, i: (0, 0))],
            # Phase 0 never writes the output: keep it pinned on block 0 so no
            # garbage tiles are ever flushed to HBM; phase 1 walks the M tiles.
            out_specs=pl.BlockSpec((TM, _OC_PAD), lambda p, i: (p * i, 0)),
            scratch_shapes=[pltpu.VMEM((2, _OC_PAD), jnp.float32)]),
        compiler_params=pltpu.CompilerParams(
            dimension_semantics=("arbitrary", "arbitrary"),
            vmem_limit_bytes=_VMEM_LIMIT),
    )(patches_p, w_mat, gamma_p, beta_p)

    return out[:M, :oc].reshape(B, OH, OW, oc)


def _final_conv(x_nhwc, w, b, stride):
    # Tiny (M=B, K, OC=n_classes) matmul: launch overhead dwarfs compute, so do
    # it directly in the wrapper (per perf review) instead of a pallas_call.
    oc, ic, kh, kw = w.shape
    patches, (B, OH, OW) = _im2col(x_nhwc, kh, kw, stride)
    w_mat = jnp.transpose(w.reshape(oc, ic * kh * kw))
    out = jnp.dot(patches, w_mat, preferred_element_type=jnp.float32) + b
    return out.reshape(B, OH, OW, oc)


def init_params(key, im_chan=3, n_classes=2, hidden_dim=64):
    """Deterministic parameter init matching the module's shapes (kernel 4x4)."""
    specs = [
        (im_chan, hidden_dim),             # block 1
        (hidden_dim, hidden_dim * 2),      # block 2
        (hidden_dim * 2, hidden_dim * 4),  # block 3 (stride 3)
        (hidden_dim * 4, n_classes),       # final block
    ]
    params = []
    for ic, oc in specs:
        key, kw_, kb_ = jax.random.split(key, 3)
        fan_in = ic * 4 * 4
        bound = 1.0 / (fan_in ** 0.5)
        w = jax.random.uniform(kw_, (oc, ic, 4, 4), jnp.float32, -bound, bound)
        b = jax.random.uniform(kb_, (oc,), jnp.float32, -bound, bound)
        gamma = jnp.ones((oc,), jnp.float32)   # BatchNorm2d default weight
        beta = jnp.zeros((oc,), jnp.float32)   # BatchNorm2d default bias
        params.append((w, b, gamma, beta))
    return params


@jax.jit
def classifier_forward(image_nchw, params):
    # PyTorch forward takes NCHW images; convert to NHWC for the kernels.
    x = jnp.transpose(image_nchw, (0, 2, 3, 1)).astype(jnp.float32)
    strides = (2, 2, 3, 2)
    n_blocks = len(params)
    for idx, (p, s) in enumerate(zip(params, strides)):
        w, b, gamma, beta = p
        if idx < n_blocks - 1:
            x = _conv_block_bn_lrelu(x, w, gamma, beta, s)
        else:
            x = _final_conv(x, w, b, s)
    # Match PyTorch's class_pred.view(B, -1) on an NCHW conv output.
    x = jnp.transpose(x, (0, 3, 1, 2))
    return x.reshape(x.shape[0], -1)


if __name__ == "__main__":
    key = jax.random.PRNGKey(0)
    k_img, k_par = jax.random.split(key)

    im_chan, n_classes, hidden_dim = 3, 2, 16
    batch, spatial = 2, 64  # 64 -> 31 -> 14 -> 4 -> 1 through the four conv blocks

    image = jax.random.normal(k_img, (batch, im_chan, spatial, spatial), jnp.float32)
    params = init_params(k_par, im_chan=im_chan, n_classes=n_classes, hidden_dim=hidden_dim)

    out = classifier_forward(image, params)
    jax.block_until_ready(out)
    assert out.shape == (batch, n_classes), out.shape
    print("KERNEL_OK")
</pallas_src>

<mosaic_0001>
module attributes {stable_mosaic.version = 11 : i64} {
  func.func @_conv_bn_lrelu_kernel(%arg0: i32, %arg1: i32, %arg2: memref<1024x48xbf16, #tpu.memory_space<vmem>>, %arg3: memref<48x128xbf16, #tpu.memory_space<vmem>>, %arg4: memref<1x128xf32, #tpu.memory_space<vmem>>, %arg5: memref<1x128xf32, #tpu.memory_space<vmem>>, %arg6: memref<1024x128xf32, #tpu.memory_space<vmem>>, %arg7: memref<2x128xf32, #tpu.memory_space<vmem>>) attributes {dimension_semantics = [#tpu.dimension_semantics<arbitrary>, #tpu.dimension_semantics<arbitrary>], iteration_bounds = array<i64: 2, 2>, scalar_prefetch = 0 : i64, scratch_operands = 1 : i64, tpu.core_type = #tpu.core_type<tc>, window_params = [{transform_indices = @transform_0, window_bounds = array<i64: 1024, 48>}, {pipeline_mode = #tpu.pipeline_mode<synchronous>, transform_indices = @transform_1, window_bounds = array<i64: 48, 128>}, {pipeline_mode = #tpu.pipeline_mode<synchronous>, transform_indices = @transform_2, window_bounds = array<i64: 1, 128>}, {pipeline_mode = #tpu.pipeline_mode<synchronous>, transform_indices = @transform_3, window_bounds = array<i64: 1, 128>}, {transform_indices = @transform_4, window_bounds = array<i64: 1024, 128>}]} {
    %c0 = arith.constant 0 : index
    %c0_0 = arith.constant 0 : index
    %0 = vector.load %arg2[%c0, %c0_0] : memref<1024x48xbf16, #tpu.memory_space<vmem>>, vector<1024x48xbf16>
    %c0_1 = arith.constant 0 : index
    %c0_2 = arith.constant 0 : index
    %1 = vector.load %arg3[%c0_1, %c0_2] : memref<48x128xbf16, #tpu.memory_space<vmem>>, vector<48x128xbf16>
    %cst = arith.constant dense<0.000000e+00> : vector<1024x128xf32>
    %2 = tpu.matmul %0, %1, %cst {dimension_numbers = #tpu.dot_dimension_numbers<[1], [0], [0], [1], [0, 0, 1, 1], [], []>} : vector<1024x48xbf16>, vector<48x128xbf16>, vector<1024x128xf32> -> vector<1024x128xf32>
    %c0_i32 = arith.constant 0 : i32
    %3 = arith.cmpi eq, %arg0, %c0_i32 : i32
    %c0_i32_3 = arith.constant 0 : i32
    %4 = arith.cmpi eq, %arg1, %c0_i32_3 : i32
    %5 = arith.andi %3, %4 : i1
    %6 = arith.extui %5 : i1 to i32
    %c0_i32_4 = arith.constant 0 : i32
    %7 = arith.cmpi ne, %6, %c0_i32_4 : i32
    scf.if %7 {
      %cst_8 = arith.constant 0.000000e+00 : f32
      %14 = vector.broadcast %cst_8 : f32 to vector<2x128xf32>
      %c0_9 = arith.constant 0 : index
      %c0_10 = arith.constant 0 : index
      %15 = vector.load %arg7[%c0_9, %c0_10] : memref<2x128xf32, #tpu.memory_space<vmem>>, vector<2x128xf32>
      tpu.vector_store %arg7[%c0_9, %c0_10], %14 {strides = array<i32>} : memref<2x128xf32, #tpu.memory_space<vmem>>, vector<2x128xf32>,
    } else {
    }
    %c0_i32_5 = arith.constant 0 : i32
    %8 = arith.cmpi eq, %arg0, %c0_i32_5 : i32
    %9 = arith.extui %8 : i1 to i32
    %c0_i32_6 = arith.constant 0 : i32
    %10 = arith.cmpi ne, %9, %c0_i32_6 : i32
    scf.if %10 {
      %c0_8 = arith.constant 0 : index
      %c0_9 = arith.constant 0 : index
      %14 = vector.load %arg7[%c0_8, %c0_9] : memref<2x128xf32, #tpu.memory_space<vmem>>, vector<2x128xf32>
      %cst_10 = arith.constant dense<0.000000e+00> : vector<128xf32>
      %15 = vector.multi_reduction <add>, %2, %cst_10 [0] : vector<1024x128xf32> to vector<128xf32>
      %16 = vector.shape_cast %15 : vector<128xf32> to vector<1x128xf32>
      %17 = arith.mulf %2, %2 : vector<1024x128xf32>
      %cst_11 = arith.constant dense<0.000000e+00> : vector<128xf32>
      %18 = vector.multi_reduction <add>, %17, %cst_11 [0] : vector<1024x128xf32> to vector<128xf32>
      %19 = vector.shape_cast %18 : vector<128xf32> to vector<1x128xf32>
      %20 = tpu.concatenate %16, %19 in 0 : vector<1x128xf32>, vector<1x128xf32> -> vector<2x128xf32>
      %21 = arith.addf %14, %20 : vector<2x128xf32>
      %c0_12 = arith.constant 0 : index
      %c0_13 = arith.constant 0 : index
      %22 = vector.load %arg7[%c0_12, %c0_13] : memref<2x128xf32, #tpu.memory_space<vmem>>, vector<2x128xf32>
      tpu.vector_store %arg7[%c0_12, %c0_13], %21 {strides = array<i32>} : memref<2x128xf32, #tpu.memory_space<vmem>>, vector<2x128xf32>,
    } else {
    }
    %c1_i32 = arith.constant 1 : i32
    %11 = arith.cmpi eq, %arg0, %c1_i32 : i32
    %12 = arith.extui %11 : i1 to i32
    %c0_i32_7 = arith.constant 0 : i32
    %13 = arith.cmpi ne, %12, %c0_i32_7 : i32
    scf.if %13 {
      %c0_8 = arith.constant 0 : index
      %c0_9 = arith.constant 0 : index
      %14 = vector.load %arg7[%c0_8, %c0_9] : memref<2x128xf32, #tpu.memory_space<vmem>>, vector<1x128xf32>
      %cst_10 = arith.constant 5.20291389E-4 : f32
      %15 = vector.broadcast %cst_10 : f32 to vector<1x128xf32>
      %16 = arith.mulf %14, %15 : vector<1x128xf32>
      %c1 = arith.constant 1 : index
      %c0_11 = arith.constant 0 : index
      %17 = vector.load %arg7[%c1, %c0_11] : memref<2x128xf32, #tpu.memory_space<vmem>>, vector<1x128xf32>
      %cst_12 = arith.constant 5.20291389E-4 : f32
      %18 = vector.broadcast %cst_12 : f32 to vector<1x128xf32>
      %19 = arith.mulf %17, %18 : vector<1x128xf32>
      %20 = arith.mulf %16, %16 : vector<1x128xf32>
      %21 = arith.subf %19, %20 : vector<1x128xf32>
      %c0_13 = arith.constant 0 : index
      %c0_14 = arith.constant 0 : index
      %22 = vector.load %arg4[%c0_13, %c0_14] : memref<1x128xf32, #tpu.memory_space<vmem>>, vector<1x128xf32>
      %cst_15 = arith.constant 9.99999974E-6 : f32
      %23 = vector.broadcast %cst_15 : f32 to vector<1x128xf32>
      %24 = arith.addf %21, %23 : vector<1x128xf32>
      %25 = math.rsqrt %24 : vector<1x128xf32>
      %26 = arith.mulf %22, %25 : vector<1x128xf32>
      %c0_16 = arith.constant 0 : index
      %c0_17 = arith.constant 0 : index
      %27 = vector.load %arg5[%c0_16, %c0_17] : memref<1x128xf32, #tpu.memory_space<vmem>>, vector<1x128xf32>
      %28 = arith.mulf %16, %26 : vector<1x128xf32>
      %29 = arith.subf %27, %28 : vector<1x128xf32>
      %30 = vector.broadcast %26 : vector<1x128xf32> to vector<1024x128xf32>
      %31 = arith.mulf %2, %30 : vector<1024x128xf32>
      %32 = vector.broadcast %29 : vector<1x128xf32> to vector<1024x128xf32>
      %33 = arith.addf %31, %32 : vector<1024x128xf32>
      %cst_18 = arith.constant 0.000000e+00 : f32
      %34 = vector.broadcast %cst_18 : f32 to vector<1024x128xf32>
      %35 = arith.cmpf oge, %33, %34 : vector<1024x128xf32>
      %cst_19 = arith.constant 2.000000e-01 : f32
      %36 = vector.broadcast %cst_19 : f32 to vector<1024x128xf32>
      %37 = arith.mulf %36, %33 : vector<1024x128xf32>
      %38 = arith.select %35, %33, %37 : vector<1024x128xi1>, vector<1024x128xf32>
      %c0_20 = arith.constant 0 : index
      %c0_21 = arith.constant 0 : index
      %39 = vector.load %arg6[%c0_20, %c0_21] : memref<1024x128xf32, #tpu.memory_space<vmem>>, vector<1024x128xf32>
      tpu.vector_store %arg6[%c0_20, %c0_21], %38 {strides = array<i32>} : memref<1024x128xf32, #tpu.memory_space<vmem>>, vector<1024x128xf32>,
    } else {
    }
    return
  }
  func.func @transform_0(%arg0: i32, %arg1: i32) -> (i32, i32) {
    %c0_i32 = arith.constant 0 : i32
    %c0_i32_0 = arith.constant 0 : i32
    return %arg1, %c0_i32 : i32, i32
  }
  func.func @transform_1(%arg0: i32, %arg1: i32) -> (i32, i32) {
    %c0_i32 = arith.constant 0 : i32
    %c0_i32_0 = arith.constant 0 : i32
    %c0_i32_1 = arith.constant 0 : i32
    return %c0_i32, %c0_i32_0 : i32, i32
  }
  func.func @transform_2(%arg0: i32, %arg1: i32) -> (i32, i32) {
    %c0_i32 = arith.constant 0 : i32
    %c0_i32_0 = arith.constant 0 : i32
    %c0_i32_1 = arith.constant 0 : i32
    return %c0_i32, %c0_i32_0 : i32, i32
  }
  func.func @transform_3(%arg0: i32, %arg1: i32) -> (i32, i32) {
    %c0_i32 = arith.constant 0 : i32
    %c0_i32_0 = arith.constant 0 : i32
    %c0_i32_1 = arith.constant 0 : i32
    return %c0_i32, %c0_i32_0 : i32, i32
  }
  func.func @transform_4(%arg0: i32, %arg1: i32) -> (i32, i32) {
    %0 = arith.muli %arg0, %arg1 : i32
    %c0_i32 = arith.constant 0 : i32
    %c0_i32_0 = arith.constant 0 : i32
    return %0, %c0_i32 : i32, i32
  }
}

module attributes {stable_mosaic.version = 11 : i64} {
  func.func @_conv_bn_lrelu_kernel(%arg0: i32, %arg1: i32, %arg2: memref<400x256xbf16, #tpu.memory_space<vmem>>, %arg3: memref<256x128xbf16, #tpu.memory_space<vmem>>, %arg4: memref<1x128xf32, #tpu.memory_space<vmem>>, %arg5: memref<1x128xf32, #tpu.memory_space<vmem>>, %arg6: memref<400x128xf32, #tpu.memory_space<vmem>>, %arg7: memref<2x128xf32, #tpu.memory_space<vmem>>) attributes {dimension_semantics = [#tpu.dimension_semantics<arbitrary>, #tpu.dimension_semantics<arbitrary>], iteration_bounds = array<i64: 2, 1>, scalar_prefetch = 0 : i64, scratch_operands = 1 : i64, tpu.core_type = #tpu.core_type<tc>, window_params = [{transform_indices = @transform_0, window_bounds = array<i64: 400, 256>}, {pipeline_mode = #tpu.pipeline_mode<synchronous>, transform_indices = @transform_1, window_bounds = array<i64: 256, 128>}, {pipeline_mode = #tpu.pipeline_mode<synchronous>, transform_indices = @transform_2, window_bounds = array<i64: 1, 128>}, {pipeline_mode = #tpu.pipeline_mode<synchronous>, transform_indices = @transform_3, window_bounds = array<i64: 1, 128>}, {transform_indices = @transform_4, window_bounds = array<i64: 400, 128>}]} {
    %c0 = arith.constant 0 : index
    %c0_0 = arith.constant 0 : index
    %0 = vector.load %arg2[%c0, %c0_0] : memref<400x256xbf16, #tpu.memory_space<vmem>>, vector<400x256xbf16>
    %c0_1 = arith.constant 0 : index
    %c0_2 = arith.constant 0 : index
    %1 = vector.load %arg3[%c0_1, %c0_2] : memref<256x128xbf16, #tpu.memory_space<vmem>>, vector<256x128xbf16>
    %cst = arith.constant dense<0.000000e+00> : vector<400x128xf32>
    %2 = tpu.matmul %0, %1, %cst {dimension_numbers = #tpu.dot_dimension_numbers<[1], [0], [0], [1], [0, 0, 1, 1], [], []>} : vector<400x256xbf16>, vector<256x128xbf16>, vector<400x128xf32> -> vector<400x128xf32>
    %c0_i32 = arith.constant 0 : i32
    %3 = arith.cmpi eq, %arg0, %c0_i32 : i32
    %c0_i32_3 = arith.constant 0 : i32
    %4 = arith.cmpi eq, %arg1, %c0_i32_3 : i32
    %5 = arith.andi %3, %4 : i1
    %6 = arith.extui %5 : i1 to i32
    %c0_i32_4 = arith.constant 0 : i32
    %7 = arith.cmpi ne, %6, %c0_i32_4 : i32
    scf.if %7 {
      %cst_8 = arith.constant 0.000000e+00 : f32
      %14 = vector.broadcast %cst_8 : f32 to vector<2x128xf32>
      %c0_9 = arith.constant 0 : index
      %c0_10 = arith.constant 0 : index
      %15 = vector.load %arg7[%c0_9, %c0_10] : memref<2x128xf32, #tpu.memory_space<vmem>>, vector<2x128xf32>
      tpu.vector_store %arg7[%c0_9, %c0_10], %14 {strides = array<i32>} : memref<2x128xf32, #tpu.memory_space<vmem>>, vector<2x128xf32>,
    } else {
    }
    %c0_i32_5 = arith.constant 0 : i32
    %8 = arith.cmpi eq, %arg0, %c0_i32_5 : i32
    %9 = arith.extui %8 : i1 to i32
    %c0_i32_6 = arith.constant 0 : i32
    %10 = arith.cmpi ne, %9, %c0_i32_6 : i32
    scf.if %10 {
      %c0_8 = arith.constant 0 : index
      %c0_9 = arith.constant 0 : index
      %14 = vector.load %arg7[%c0_8, %c0_9] : memref<2x128xf32, #tpu.memory_space<vmem>>, vector<2x128xf32>
      %cst_10 = arith.constant dense<0.000000e+00> : vector<128xf32>
      %15 = vector.multi_reduction <add>, %2, %cst_10 [0] : vector<400x128xf32> to vector<128xf32>
      %16 = vector.shape_cast %15 : vector<128xf32> to vector<1x128xf32>
      %17 = arith.mulf %2, %2 : vector<400x128xf32>
      %cst_11 = arith.constant dense<0.000000e+00> : vector<128xf32>
      %18 = vector.multi_reduction <add>, %17, %cst_11 [0] : vector<400x128xf32> to vector<128xf32>
      %19 = vector.shape_cast %18 : vector<128xf32> to vector<1x128xf32>
      %20 = tpu.concatenate %16, %19 in 0 : vector<1x128xf32>, vector<1x128xf32> -> vector<2x128xf32>
      %21 = arith.addf %14, %20 : vector<2x128xf32>
      %c0_12 = arith.constant 0 : index
      %c0_13 = arith.constant 0 : index
      %22 = vector.load %arg7[%c0_12, %c0_13] : memref<2x128xf32, #tpu.memory_space<vmem>>, vector<2x128xf32>
      tpu.vector_store %arg7[%c0_12, %c0_13], %21 {strides = array<i32>} : memref<2x128xf32, #tpu.memory_space<vmem>>, vector<2x128xf32>,
    } else {
    }
    %c1_i32 = arith.constant 1 : i32
    %11 = arith.cmpi eq, %arg0, %c1_i32 : i32
    %12 = arith.extui %11 : i1 to i32
    %c0_i32_7 = arith.constant 0 : i32
    %13 = arith.cmpi ne, %12, %c0_i32_7 : i32
    scf.if %13 {
      %c0_8 = arith.constant 0 : index
      %c0_9 = arith.constant 0 : index
      %14 = vector.load %arg7[%c0_8, %c0_9] : memref<2x128xf32, #tpu.memory_space<vmem>>, vector<1x128xf32>
      %cst_10 = arith.constant 0.00255102036 : f32
      %15 = vector.broadcast %cst_10 : f32 to vector<1x128xf32>
      %16 = arith.mulf %14, %15 : vector<1x128xf32>
      %c1 = arith.constant 1 : index
      %c0_11 = arith.constant 0 : index
      %17 = vector.load %arg7[%c1, %c0_11] : memref<2x128xf32, #tpu.memory_space<vmem>>, vector<1x128xf32>
      %cst_12 = arith.constant 0.00255102036 : f32
      %18 = vector.broadcast %cst_12 : f32 to vector<1x128xf32>
      %19 = arith.mulf %17, %18 : vector<1x128xf32>
      %20 = arith.mulf %16, %16 : vector<1x128xf32>
      %21 = arith.subf %19, %20 : vector<1x128xf32>
      %c0_13 = arith.constant 0 : index
      %c0_14 = arith.constant 0 : index
      %22 = vector.load %arg4[%c0_13, %c0_14] : memref<1x128xf32, #tpu.memory_space<vmem>>, vector<1x128xf32>
      %cst_15 = arith.constant 9.99999974E-6 : f32
      %23 = vector.broadcast %cst_15 : f32 to vector<1x128xf32>
      %24 = arith.addf %21, %23 : vector<1x128xf32>
      %25 = math.rsqrt %24 : vector<1x128xf32>
      %26 = arith.mulf %22, %25 : vector<1x128xf32>
      %c0_16 = arith.constant 0 : index
      %c0_17 = arith.constant 0 : index
      %27 = vector.load %arg5[%c0_16, %c0_17] : memref<1x128xf32, #tpu.memory_space<vmem>>, vector<1x128xf32>
      %28 = arith.mulf %16, %26 : vector<1x128xf32>
      %29 = arith.subf %27, %28 : vector<1x128xf32>
      %30 = vector.broadcast %26 : vector<1x128xf32> to vector<400x128xf32>
      %31 = arith.mulf %2, %30 : vector<400x128xf32>
      %32 = vector.broadcast %29 : vector<1x128xf32> to vector<400x128xf32>
      %33 = arith.addf %31, %32 : vector<400x128xf32>
      %cst_18 = arith.constant 0.000000e+00 : f32
      %34 = vector.broadcast %cst_18 : f32 to vector<400x128xf32>
      %35 = arith.cmpf oge, %33, %34 : vector<400x128xf32>
      %cst_19 = arith.constant 2.000000e-01 : f32
      %36 = vector.broadcast %cst_19 : f32 to vector<400x128xf32>
      %37 = arith.mulf %36, %33 : vector<400x128xf32>
      %38 = arith.select %35, %33, %37 : vector<400x128xi1>, vector<400x128xf32>
      %c0_20 = arith.constant 0 : index
      %c0_21 = arith.constant 0 : index
      %39 = vector.load %arg6[%c0_20, %c0_21] : memref<400x128xf32, #tpu.memory_space<vmem>>, vector<400x128xf32>
      tpu.vector_store %arg6[%c0_20, %c0_21], %38 {strides = array<i32>} : memref<400x128xf32, #tpu.memory_space<vmem>>, vector<400x128xf32>,
    } else {
    }
    return
  }
  func.func @transform_0(%arg0: i32, %arg1: i32) -> (i32, i32) {
    %c0_i32 = arith.constant 0 : i32
    %c0_i32_0 = arith.constant 0 : i32
    return %arg1, %c0_i32 : i32, i32
  }
  func.func @transform_1(%arg0: i32, %arg1: i32) -> (i32, i32) {
    %c0_i32 = arith.constant 0 : i32
    %c0_i32_0 = arith.constant 0 : i32
    %c0_i32_1 = arith.constant 0 : i32
    return %c0_i32, %c0_i32_0 : i32, i32
  }
  func.func @transform_2(%arg0: i32, %arg1: i32) -> (i32, i32) {
    %c0_i32 = arith.constant 0 : i32
    %c0_i32_0 = arith.constant 0 : i32
    %c0_i32_1 = arith.constant 0 : i32
    return %c0_i32, %c0_i32_0 : i32, i32
  }
  func.func @transform_3(%arg0: i32, %arg1: i32) -> (i32, i32) {
    %c0_i32 = arith.constant 0 : i32
    %c0_i32_0 = arith.constant 0 : i32
    %c0_i32_1 = arith.constant 0 : i32
    return %c0_i32, %c0_i32_0 : i32, i32
  }
  func.func @transform_4(%arg0: i32, %arg1: i32) -> (i32, i32) {
    %0 = arith.muli %arg0, %arg1 : i32
    %c0_i32 = arith.constant 0 : i32
    %c0_i32_0 = arith.constant 0 : i32
    return %0, %c0_i32 : i32, i32
  }
}

module attributes {stable_mosaic.version = 11 : i64} {
  func.func @_conv_bn_lrelu_kernel(%arg0: i32, %arg1: i32, %arg2: memref<32x512xbf16, #tpu.memory_space<vmem>>, %arg3: memref<512x128xbf16, #tpu.memory_space<vmem>>, %arg4: memref<1x128xf32, #tpu.memory_space<vmem>>, %arg5: memref<1x128xf32, #tpu.memory_space<vmem>>, %arg6: memref<32x128xf32, #tpu.memory_space<vmem>>, %arg7: memref<2x128xf32, #tpu.memory_space<vmem>>) attributes {dimension_semantics = [#tpu.dimension_semantics<arbitrary>, #tpu.dimension_semantics<arbitrary>], iteration_bounds = array<i64: 2, 1>, scalar_prefetch = 0 : i64, scratch_operands = 1 : i64, tpu.core_type = #tpu.core_type<tc>, window_params = [{transform_indices = @transform_0, window_bounds = array<i64: 32, 512>}, {pipeline_mode = #tpu.pipeline_mode<synchronous>, transform_indices = @transform_1, window_bounds = array<i64: 512, 128>}, {pipeline_mode = #tpu.pipeline_mode<synchronous>, transform_indices = @transform_2, window_bounds = array<i64: 1, 128>}, {pipeline_mode = #tpu.pipeline_mode<synchronous>, transform_indices = @transform_3, window_bounds = array<i64: 1, 128>}, {transform_indices = @transform_4, window_bounds = array<i64: 32, 128>}]} {
    %c0 = arith.constant 0 : index
    %c0_0 = arith.constant 0 : index
    %0 = vector.load %arg2[%c0, %c0_0] : memref<32x512xbf16, #tpu.memory_space<vmem>>, vector<32x512xbf16>
    %c0_1 = arith.constant 0 : index
    %c0_2 = arith.constant 0 : index
    %1 = vector.load %arg3[%c0_1, %c0_2] : memref<512x128xbf16, #tpu.memory_space<vmem>>, vector<512x128xbf16>
    %cst = arith.constant dense<0.000000e+00> : vector<32x128xf32>
    %2 = tpu.matmul %0, %1, %cst {dimension_numbers = #tpu.dot_dimension_numbers<[1], [0], [0], [1], [0, 0, 1, 1], [], []>} : vector<32x512xbf16>, vector<512x128xbf16>, vector<32x128xf32> -> vector<32x128xf32>
    %c0_i32 = arith.constant 0 : i32
    %3 = arith.cmpi eq, %arg0, %c0_i32 : i32
    %c0_i32_3 = arith.constant 0 : i32
    %4 = arith.cmpi eq, %arg1, %c0_i32_3 : i32
    %5 = arith.andi %3, %4 : i1
    %6 = arith.extui %5 : i1 to i32
    %c0_i32_4 = arith.constant 0 : i32
    %7 = arith.cmpi ne, %6, %c0_i32_4 : i32
    scf.if %7 {
      %cst_8 = arith.constant 0.000000e+00 : f32
      %14 = vector.broadcast %cst_8 : f32 to vector<2x128xf32>
      %c0_9 = arith.constant 0 : index
      %c0_10 = arith.constant 0 : index
      %15 = vector.load %arg7[%c0_9, %c0_10] : memref<2x128xf32, #tpu.memory_space<vmem>>, vector<2x128xf32>
      tpu.vector_store %arg7[%c0_9, %c0_10], %14 {strides = array<i32>} : memref<2x128xf32, #tpu.memory_space<vmem>>, vector<2x128xf32>,
    } else {
    }
    %c0_i32_5 = arith.constant 0 : i32
    %8 = arith.cmpi eq, %arg0, %c0_i32_5 : i32
    %9 = arith.extui %8 : i1 to i32
    %c0_i32_6 = arith.constant 0 : i32
    %10 = arith.cmpi ne, %9, %c0_i32_6 : i32
    scf.if %10 {
      %c0_8 = arith.constant 0 : index
      %c0_9 = arith.constant 0 : index
      %14 = vector.load %arg7[%c0_8, %c0_9] : memref<2x128xf32, #tpu.memory_space<vmem>>, vector<2x128xf32>
      %cst_10 = arith.constant dense<0.000000e+00> : vector<128xf32>
      %15 = vector.multi_reduction <add>, %2, %cst_10 [0] : vector<32x128xf32> to vector<128xf32>
      %16 = vector.shape_cast %15 : vector<128xf32> to vector<1x128xf32>
      %17 = arith.mulf %2, %2 : vector<32x128xf32>
      %cst_11 = arith.constant dense<0.000000e+00> : vector<128xf32>
      %18 = vector.multi_reduction <add>, %17, %cst_11 [0] : vector<32x128xf32> to vector<128xf32>
      %19 = vector.shape_cast %18 : vector<128xf32> to vector<1x128xf32>
      %20 = tpu.concatenate %16, %19 in 0 : vector<1x128xf32>, vector<1x128xf32> -> vector<2x128xf32>
      %21 = arith.addf %14, %20 : vector<2x128xf32>
      %c0_12 = arith.constant 0 : index
      %c0_13 = arith.constant 0 : index
      %22 = vector.load %arg7[%c0_12, %c0_13] : memref<2x128xf32, #tpu.memory_space<vmem>>, vector<2x128xf32>
      tpu.vector_store %arg7[%c0_12, %c0_13], %21 {strides = array<i32>} : memref<2x128xf32, #tpu.memory_space<vmem>>, vector<2x128xf32>,
    } else {
    }
    %c1_i32 = arith.constant 1 : i32
    %11 = arith.cmpi eq, %arg0, %c1_i32 : i32
    %12 = arith.extui %11 : i1 to i32
    %c0_i32_7 = arith.constant 0 : i32
    %13 = arith.cmpi ne, %12, %c0_i32_7 : i32
    scf.if %13 {
      %c0_8 = arith.constant 0 : index
      %c0_9 = arith.constant 0 : index
      %14 = vector.load %arg7[%c0_8, %c0_9] : memref<2x128xf32, #tpu.memory_space<vmem>>, vector<1x128xf32>
      %cst_10 = arith.constant 3.125000e-02 : f32
      %15 = vector.broadcast %cst_10 : f32 to vector<1x128xf32>
      %16 = arith.mulf %14, %15 : vector<1x128xf32>
      %c1 = arith.constant 1 : index
      %c0_11 = arith.constant 0 : index
      %17 = vector.load %arg7[%c1, %c0_11] : memref<2x128xf32, #tpu.memory_space<vmem>>, vector<1x128xf32>
      %cst_12 = arith.constant 3.125000e-02 : f32
      %18 = vector.broadcast %cst_12 : f32 to vector<1x128xf32>
      %19 = arith.mulf %17, %18 : vector<1x128xf32>
      %20 = arith.mulf %16, %16 : vector<1x128xf32>
      %21 = arith.subf %19, %20 : vector<1x128xf32>
      %c0_13 = arith.constant 0 : index
      %c0_14 = arith.constant 0 : index
      %22 = vector.load %arg4[%c0_13, %c0_14] : memref<1x128xf32, #tpu.memory_space<vmem>>, vector<1x128xf32>
      %cst_15 = arith.constant 9.99999974E-6 : f32
      %23 = vector.broadcast %cst_15 : f32 to vector<1x128xf32>
      %24 = arith.addf %21, %23 : vector<1x128xf32>
      %25 = math.rsqrt %24 : vector<1x128xf32>
      %26 = arith.mulf %22, %25 : vector<1x128xf32>
      %c0_16 = arith.constant 0 : index
      %c0_17 = arith.constant 0 : index
      %27 = vector.load %arg5[%c0_16, %c0_17] : memref<1x128xf32, #tpu.memory_space<vmem>>, vector<1x128xf32>
      %28 = arith.mulf %16, %26 : vector<1x128xf32>
      %29 = arith.subf %27, %28 : vector<1x128xf32>
      %30 = vector.broadcast %26 : vector<1x128xf32> to vector<32x128xf32>
      %31 = arith.mulf %2, %30 : vector<32x128xf32>
      %32 = vector.broadcast %29 : vector<1x128xf32> to vector<32x128xf32>
      %33 = arith.addf %31, %32 : vector<32x128xf32>
      %cst_18 = arith.constant 0.000000e+00 : f32
      %34 = vector.broadcast %cst_18 : f32 to vector<32x128xf32>
      %35 = arith.cmpf oge, %33, %34 : vector<32x128xf32>
      %cst_19 = arith.constant 2.000000e-01 : f32
      %36 = vector.broadcast %cst_19 : f32 to vector<32x128xf32>
      %37 = arith.mulf %36, %33 : vector<32x128xf32>
      %38 = arith.select %35, %33, %37 : vector<32x128xi1>, vector<32x128xf32>
      %c0_20 = arith.constant 0 : index
      %c0_21 = arith.constant 0 : index
      %39 = vector.load %arg6[%c0_20, %c0_21] : memref<32x128xf32, #tpu.memory_space<vmem>>, vector<32x128xf32>
      tpu.vector_store %arg6[%c0_20, %c0_21], %38 {strides = array<i32>} : memref<32x128xf32, #tpu.memory_space<vmem>>, vector<32x128xf32>,
    } else {
    }
    return
  }
  func.func @transform_0(%arg0: i32, %arg1: i32) -> (i32, i32) {
    %c0_i32 = arith.constant 0 : i32
    %c0_i32_0 = arith.constant 0 : i32
    return %arg1, %c0_i32 : i32, i32
  }
  func.func @transform_1(%arg0: i32, %arg1: i32) -> (i32, i32) {
    %c0_i32 = arith.constant 0 : i32
    %c0_i32_0 = arith.constant 0 : i32
    %c0_i32_1 = arith.constant 0 : i32
    return %c0_i32, %c0_i32_0 : i32, i32
  }
  func.func @transform_2(%arg0: i32, %arg1: i32) -> (i32, i32) {
    %c0_i32 = arith.constant 0 : i32
    %c0_i32_0 = arith.constant 0 : i32
    %c0_i32_1 = arith.constant 0 : i32
    return %c0_i32, %c0_i32_0 : i32, i32
  }
  func.func @transform_3(%arg0: i32, %arg1: i32) -> (i32, i32) {
    %c0_i32 = arith.constant 0 : i32
    %c0_i32_0 = arith.constant 0 : i32
    %c0_i32_1 = arith.constant 0 : i32
    return %c0_i32, %c0_i32_0 : i32, i32
  }
  func.func @transform_4(%arg0: i32, %arg1: i32) -> (i32, i32) {
    %0 = arith.muli %arg0, %arg1 : i32
    %c0_i32 = arith.constant 0 : i32
    %c0_i32_0 = arith.constant 0 : i32
    return %0, %c0_i32 : i32, i32
  }
}

</mosaic_0001>

<llo_original>
// kernel: classifier_forward.3
$region0: #{classifier_forward.3}
  #allocation0 [shape = 'u32[]', space=smem, size = 0x4, offset = 0x4, fixed_abs, tag = 'smem constant byte address 0x4 - core index']
  #allocation1 [shape = 'u32[72,128]{1,0:T(1,128)}', space=vmem, size = 0x9000, scoped, tag = 'internal scratch']
  #allocation2 [shape = 'f32[2,128]{1,0:T(2,128)}', space=vmem, size = 0x400, scoped, tag = 'scratch operand']
  %s0 = inlined_call_operand.vmem [shape: bf16[2048,48], index: 0, kind: input, shape index: {}]
  %s1 = inlined_call_operand.vmem [shape: bf16[48,128], index: 1, kind: input, shape index: {}]
  %s2 = inlined_call_operand.vmem [shape: f32[1,128], index: 2, kind: input, shape index: {}]
  %s3 = inlined_call_operand.vmem [shape: f32[1,128], index: 3, kind: input, shape index: {}]
  %s4 = inlined_call_operand.vmem [shape: f32[2048,128], index: 4, kind: output, shape index: {}]
  %s5 = sld [smem:[#allocation0]]
  $region61: #{classifier_forward.3} parent=0
    _
  %s7 = ssub.s32 1, %s5
  %s8 = scalar_select 0, %s7, %s5
  loop: start=0, step=1, limit=6
  $region2: #{classifier_forward.3} parent=0 // loop_pre_header
    _
  $region3: #{classifier_forward.3} parent=0 // loop_header
    %s10 = sphi 0, %s14
    %p11 = scmp.ge.s32.totalorder %s10, 6
    %s17 = sphi 0, %s29
    %s18 = sphi 0, %s25
    %s19 = sphi 0, %s17
    %s20 = sphi 0, %s18
    %s21 = sphi 0, %s19
    %s22 = sphi 0, %s20
    %s32 = sphi 0, %s34
    %s35 = sphi 0, %s32
    %s36 = sphi 0, %s35
    %s52 = sphi 0, %s36
    %s56 = sphi 0, %s56
    %s58 = sphi 0, %s56
    %s59 = sphi 0, %s58
    %s73 = sphi 0, %s59
    %s77 = sphi 0, %s77
    %s79 = sphi 0, %s77
    %s80 = sphi 0, %s79
    %s94 = sphi 0, %s80
    %s98 = sphi 0, %s98
    %s100 = sphi 0, %s98
    %s101 = sphi 0, %s100
    %s115 = sphi 0, %s101
    %s123 = sphi 0, %s125
    %s126 = sphi 0, %s123
    %s127 = sphi 0, %s126
    %s143 = sphi 0, %s127
  $region4: #{classifier_forward.3} parent=0 // loop_header_branch
    %13 = sbr.rel (%p11) target = $region8
  $region5: #{classifier_forward.3} parent=0 // loop_body
    %s15 = ssub.s32 %s10, 1
    %s16 = ssub.s32 %s10, 2
    %s23 = sadd.s32 1, %s18
    %p24 = scmp.ge.s32.totalorder %s23, 2
    %s25 = scalar_select %p24, 0, %s23
    %s26 = sadd.s32 1, %s17
    %s27 = scalar_select %p24, %s26, %s17
    %p28 = scmp.ge.s32.totalorder %s27, 2
    %s29 = scalar_select %p28, 0, %s27
    %s30 = ssub.s32 %s18, %s25
    %p31 = scmp.eq.s32.totalorder %s30, 0
    %s33 = sadd.s32 %s32, 1
    %s34 = scalar_select %p31, %s32, %s33
    %p37 = pneg %p31
    %p38 = scmp.eq.s32.totalorder %s10, 3
    %p39 = por %p37, %p38
    %p40 = scmp.ne.s32.totalorder %s32, %s35
    %p41 = scmp.eq.s32.totalorder %s10, 0
    %p42 = por %p40, %p41
    %p43 = scmp.ne.s32.totalorder %s32, %s35
    %p44 = scmp.eq.s32.totalorder %s15, 3
    %p45 = por %p43, %p44
    %p46 = scmp.ne.s32.totalorder %s35, %s36
    %p47 = scmp.eq.s32.totalorder %s15, 0
    %p48 = por %p46, %p47
    %p49 = scmp.ne.s32.totalorder %s35, %s36
    %p50 = scmp.eq.s32.totalorder %s16, 3
    %p51 = por %p49, %p50
    %p53 = scmp.ne.s32.totalorder %s36, %s52
    %p54 = scmp.eq.s32.totalorder %s16, 0
    %p55 = por %p53, %p54
    %s57 = sadd.s32 %s56, 1
    %p60 = scmp.eq.s32.totalorder %s10, 3
    %p61 = scmp.ne.s32.totalorder %s56, %s58
    %p62 = scmp.eq.s32.totalorder %s10, 0
    %p63 = por %p61, %p62
    %p64 = scmp.ne.s32.totalorder %s56, %s58
    %p65 = scmp.eq.s32.totalorder %s15, 3
    %p66 = por %p64, %p65
    %p67 = scmp.ne.s32.totalorder %s58, %s59
    %p68 = scmp.eq.s32.totalorder %s15, 0
    %p69 = por %p67, %p68
    %p70 = scmp.ne.s32.totalorder %s58, %s59
    %p71 = scmp.eq.s32.totalorder %s16, 3
    %p72 = por %p70, %p71
    %p74 = scmp.ne.s32.totalorder %s59, %s73
    %p75 = scmp.eq.s32.totalorder %s16, 0
    %p76 = por %p74, %p75
    %s78 = sadd.s32 %s77, 1
    %p81 = scmp.eq.s32.totalorder %s10, 3
    %p82 = scmp.ne.s32.totalorder %s77, %s79
    %p83 = scmp.eq.s32.totalorder %s10, 0
    %p84 = por %p82, %p83
    %p85 = scmp.ne.s32.totalorder %s77, %s79
    %p86 = scmp.eq.s32.totalorder %s15, 3
    %p87 = por %p85, %p86
    %p88 = scmp.ne.s32.totalorder %s79, %s80
    %p89 = scmp.eq.s32.totalorder %s15, 0
    %p90 = por %p88, %p89
    %p91 = scmp.ne.s32.totalorder %s79, %s80
    %p92 = scmp.eq.s32.totalorder %s16, 3
    %p93 = por %p91, %p92
    %p95 = scmp.ne.s32.totalorder %s80, %s94
    %p96 = scmp.eq.s32.totalorder %s16, 0
    %p97 = por %p95, %p96
    %s99 = sadd.s32 %s98, 1
    %p102 = scmp.eq.s32.totalorder %s10, 3
    %p103 = scmp.ne.s32.totalorder %s98, %s100
    %p104 = scmp.eq.s32.totalorder %s10, 0
    %p105 = por %p103, %p104
    %p106 = scmp.ne.s32.totalorder %s98, %s100
    %p107 = scmp.eq.s32.totalorder %s15, 3
    %p108 = por %p106, %p107
    %p109 = scmp.ne.s32.totalorder %s100, %s101
    %p110 = scmp.eq.s32.totalorder %s15, 0
    %p111 = por %p109, %p110
    %p112 = scmp.ne.s32.totalorder %s100, %s101
    %p113 = scmp.eq.s32.totalorder %s16, 3
    %p114 = por %p112, %p113
    %p116 = scmp.ne.s32.totalorder %s101, %s115
    %p117 = scmp.eq.s32.totalorder %s16, 0
    %p118 = por %p116, %p117
    %s119 = smul.u32 %s17, %s18
    %s120 = smul.u32 %s29, %s25
    %s121 = ssub.s32 %s119, %s120
    %p122 = scmp.eq.s32.totalorder %s121, 0
    %s124 = sadd.s32 %s123, 1
    %s125 = scalar_select %p122, %s123, %s124
    %p128 = pneg %p122
    %p129 = scmp.eq.s32.totalorder %s10, 3
    %p130 = por %p128, %p129
    %p131 = scmp.ne.s32.totalorder %s123, %s126
    %p132 = scmp.eq.s32.totalorder %s10, 0
    %p133 = por %p131, %p132
    %p134 = scmp.ne.s32.totalorder %s123, %s126
    %p135 = scmp.eq.s32.totalorder %s15, 3
    %p136 = por %p134, %p135
    %p137 = scmp.ne.s32.totalorder %s126, %s127
    %p138 = scmp.eq.s32.totalorder %s15, 0
    %p139 = por %p137, %p138
    %p140 = scmp.ne.s32.totalorder %s126, %s127
    %p141 = scmp.eq.s32.totalorder %s16, 3
    %p142 = por %p140, %p141
    %p144 = scmp.ne.s32.totalorder %s127, %s143
    %p145 = scmp.eq.s32.totalorder %s16, 0
    %p146 = por %p144, %p145
    %p147 = scmp.le.s32.totalorder 1, %s10
    %p148 = scmp.lt.s32.totalorder %s10, 5
    %p149 = pnand %p147, %p148
    %p150 = pneg %p149
    // Predicated region
    $region9: #{classifier_forward.3} parent=5 // pred_check
      _
    $region10: #{classifier_forward.3} parent=5 // pred_check_branch
      %152 = sbr.rel (%p149) target = $region12
    $region11: #{classifier_forward.3} parent=5 // pred_region
      %s153 = ssub.s32 %s10, 1
      // Predicated region
      $region13: #{classifier_forward.3} parent=11 // pred_check
        %p154 = pneg %p69
      $region14: #{classifier_forward.3} parent=11 // pred_check_branch
        %156 = sbr.rel (%p154) target = $region16
      $region15: #{classifier_forward.3} parent=11 // pred_region
        _
      $region16: #{classifier_forward.3} parent=11 // pred_fallthru
        _
      // Predicated region
      $region17: #{classifier_forward.3} parent=11 // pred_check
        %p157 = pneg %p90
      $region18: #{classifier_forward.3} parent=11 // pred_check_branch
        %159 = sbr.rel (%p157) target = $region20
      $region19: #{classifier_forward.3} parent=11 // pred_region
        _
      $region20: #{classifier_forward.3} parent=11 // pred_fallthru
        _
      // Predicated region
      $region21: #{classifier_forward.3} parent=11 // pred_check
        %p160 = pneg %p111
      $region22: #{classifier_forward.3} parent=11 // pred_check_branch
        %162 = sbr.rel (%p160) target = $region24
      $region23: #{classifier_forward.3} parent=11 // pred_region
        _
      $region24: #{classifier_forward.3} parent=11 // pred_fallthru
        _
    $region12: #{classifier_forward.3} parent=5 // pred_fallthru
      _
    %p163 = scmp.lt.s32.totalorder %s10, 4
    // Predicated region
    $region25: #{classifier_forward.3} parent=5 // pred_check
      %p164 = pneg %p163
    $region26: #{classifier_forward.3} parent=5 // pred_check_branch
      %166 = sbr.rel (%p164) target = $region28
    $region27: #{classifier_forward.3} parent=5 // pred_region
      // Predicated region
      $region29: #{classifier_forward.3} parent=27 // pred_check
        %p167 = pneg %p42
      $region30: #{classifier_forward.3} parent=27 // pred_check_branch
        %169 = sbr.rel (%p167) target = $region32
      $region31: #{classifier_forward.3} parent=27 // pred_region
        %s170 = smul.u32 128, %s18
        %p171 = scmp.lt.s32.totalorder %s170, 255
        %s172 = scalar_select %p171, %s170, 255
        %s173 = smul.addr %s172, 4
        %s174 = scalar_lea.vmem %s0, %s173
        %s175 = smul.u32 128, %s18
      $region32: #{classifier_forward.3} parent=27 // pred_fallthru
        _
    $region28: #{classifier_forward.3} parent=5 // pred_fallthru
      _
    %p176 = scmp.le.s32.totalorder 1, %s10
    %p177 = scmp.lt.s32.totalorder %s10, 5
    %p178 = pnand %p176, %p177
    %p179 = pneg %p178
    // Predicated region
    $region33: #{classifier_forward.3} parent=5 // pred_check
      _
    $region34: #{classifier_forward.3} parent=5 // pred_check_branch
      %181 = sbr.rel (%p178) target = $region36
    $region35: #{classifier_forward.3} parent=5 // pred_region
      %s182 = ssub.s32 %s10, 1
      %s183 = smul.u32 128, %s20
      %p184 = scmp.lt.s32.totalorder %s183, 255
      %s185 = scalar_select %p184, %s183, 255
      %s186 = smul.addr %s185, 4
      %s187 = scalar_lea.vmem %s0, %s186
      %p188 = pneg %p48
      %p189 = pneg %p45
      %p190 = pneg %p69
      %p191 = pneg %p66
      %p192 = pneg %p90
      %p193 = pneg %p87
      %p194 = pneg %p111
      %p195 = pneg %p108
      %p196 = pneg %p139
      %p197 = pneg %p136
      %s198 = smul.u32 %s19, %s20
      %s199 = smul.u32 128, %s198
      %p200 = scmp.lt.s32.totalorder %s199, 255
      %s201 = scalar_select %p200, %s199, 255
      %s202 = smul.addr %s201, 8
      %s203 = scalar_lea.vmem %s4, %s202
      %s204 = smul.u32 128, %s20
      %p205 = scmp.lt.s32.totalorder %s204, 255
      %s206 = scalar_select %p205, %s204, 255
      %s207 = smul.addr %s206, 4
      %s208 = scalar_lea.vmem %s0, %s207
      %s209 = smul.u32 128, %s20
      %s210 = smul.u32 %s19, %s20
      %s211 = smul.u32 128, %s210
      %p212 = scmp.lt.s32.totalorder %s211, 255
      %s213 = scalar_select %p212, %s211, 255
      %s214 = smul.addr %s213, 8
      %s215 = scalar_lea.vmem %s4, %s214
      %s216 = smul.u32 %s19, %s20
      %s217 = smul.u32 128, %s216
      %v219 = vld [vmem:[%s208] sm:$0xf]
      %v220 = vld [vmem:[%s208 + $0x4] sm:$0xf]
      %v221 = vld [vmem:[%s208 + $0x8] sm:$0xf]
      %v222 = vld [vmem:[%s208 + $0xc] sm:$0xf]
      %v223 = vld [vmem:[%s208 + $0x10] sm:$0xf]
      %v224 = vld [vmem:[%s208 + $0x14] sm:$0xf]
      %v225 = vld [vmem:[%s208 + $0x18] sm:$0xf]
      %v226 = vld [vmem:[%s208 + $0x1c] sm:$0xf]
      %v227 = vld [vmem:[%s208 + $0x20] sm:$0xf]
      %v228 = vld [vmem:[%s208 + $0x24] sm:$0xf]
      %v229 = vld [vmem:[%s208 + $0x28] sm:$0xf]
      %v230 = vld [vmem:[%s208 + $0x2c] sm:$0xf]
      %v231 = vld [vmem:[%s208 + $0x30] sm:$0xf]
      %v232 = vld [vmem:[%s208 + $0x34] sm:$0xf]
      %v233 = vld [vmem:[%s208 + $0x38] sm:$0xf]
      %v234 = vld [vmem:[%s208 + $0x3c] sm:$0xf]
      %v235 = vld [vmem:[%s208 + $0x40] sm:$0xf]
      %v236 = vld [vmem:[%s208 + $0x44] sm:$0xf]
      %v237 = vld [vmem:[%s208 + $0x48] sm:$0xf]
      %v238 = vld [vmem:[%s208 + $0x4c] sm:$0xf]
      %v239 = vld [vmem:[%s208 + $0x50] sm:$0xf]
      %v240 = vld [vmem:[%s208 + $0x54] sm:$0xf]
      %v241 = vld [vmem:[%s208 + $0x58] sm:$0xf]
      %v242 = vld [vmem:[%s208 + $0x5c] sm:$0xf]
      %v243 = vld [vmem:[%s208 + $0x60] sm:$0xf]
      %v244 = vld [vmem:[%s208 + $0x64] sm:$0xf]
      %v245 = vld [vmem:[%s208 + $0x68] sm:$0xf]
      %v246 = vld [vmem:[%s208 + $0x6c] sm:$0xf]
      %v247 = vld [vmem:[%s208 + $0x70] sm:$0xf]
      %v248 = vld [vmem:[%s208 + $0x74] sm:$0xf]
      %v249 = vld [vmem:[%s208 + $0x78] sm:$0xf]
      %v250 = vld [vmem:[%s208 + $0x7c] sm:$0xf]
      %v251 = vld [vmem:[%s208 + $0x80] sm:$0xf]
      %v252 = vld [vmem:[%s208 + $0x84] sm:$0xf]
      %v253 = vld [vmem:[%s208 + $0x88] sm:$0xf]
      %v254 = vld [vmem:[%s208 + $0x8c] sm:$0xf]
      %v255 = vld [vmem:[%s208 + $0x90] sm:$0xf]
      %v256 = vld [vmem:[%s208 + $0x94] sm:$0xf]
      %v257 = vld [vmem:[%s208 + $0x98] sm:$0xf]
      %v258 = vld [vmem:[%s208 + $0x9c] sm:$0xf]
      %v259 = vld [vmem:[%s208 + $0xa0] sm:$0xf]
      %v260 = vld [vmem:[%s208 + $0xa4] sm:$0xf]
      %v261 = vld [vmem:[%s208 + $0xa8] sm:$0xf]
      %v262 = vld [vmem:[%s208 + $0xac] sm:$0xf]
      %v263 = vld [vmem:[%s208 + $0xb0] sm:$0xf]
      %v264 = vld [vmem:[%s208 + $0xb4] sm:$0xf]
      %v265 = vld [vmem:[%s208 + $0xb8] sm:$0xf]
      %v266 = vld [vmem:[%s208 + $0xbc] sm:$0xf]
      %v267 = vld [vmem:[%s208 + $0xc0] sm:$0xf]
      %v268 = vld [vmem:[%s208 + $0xc4] sm:$0xf]
      %v269 = vld [vmem:[%s208 + $0xc8] sm:$0xf]
      %v270 = vld [vmem:[%s208 + $0xcc] sm:$0xf]
      %v271 = vld [vmem:[%s208 + $0xd0] sm:$0xf]
      %v272 = vld [vmem:[%s208 + $0xd4] sm:$0xf]
      %v273 = vld [vmem:[%s208 + $0xd8] sm:$0xf]
      %v274 = vld [vmem:[%s208 + $0xdc] sm:$0xf]
      %v275 = vld [vmem:[%s208 + $0xe0] sm:$0xf]
      %v276 = vld [vmem:[%s208 + $0xe4] sm:$0xf]
      %v277 = vld [vmem:[%s208 + $0xe8] sm:$0xf]
      %v278 = vld [vmem:[%s208 + $0xec] sm:$0xf]
      %v279 = vld [vmem:[%s208 + $0xf0] sm:$0xf]
      %v280 = vld [vmem:[%s208 + $0xf4] sm:$0xf]
      %v281 = vld [vmem:[%s208 + $0xf8] sm:$0xf]
      %v282 = vld [vmem:[%s208 + $0xfc] sm:$0xf]
      %v283 = vld [vmem:[%s208 + $0x100] sm:$0xf]
      %v284 = vld [vmem:[%s208 + $0x104] sm:$0xf]
      %v285 = vld [vmem:[%s208 + $0x108] sm:$0xf]
      %v286 = vld [vmem:[%s208 + $0x10c] sm:$0xf]
      %v287 = vld [vmem:[%s208 + $0x110] sm:$0xf]
      %v288 = vld [vmem:[%s208 + $0x114] sm:$0xf]
      %v289 = vld [vmem:[%s208 + $0x118] sm:$0xf]
      %v290 = vld [vmem:[%s208 + $0x11c] sm:$0xf]
      %v291 = vld [vmem:[%s208 + $0x120] sm:$0xf]
      %v292 = vld [vmem:[%s208 + $0x124] sm:$0xf]
      %v293 = vld [vmem:[%s208 + $0x128] sm:$0xf]
      %v294 = vld [vmem:[%s208 + $0x12c] sm:$0xf]
      %v295 = vld [vmem:[%s208 + $0x130] sm:$0xf]
      %v296 = vld [vmem:[%s208 + $0x134] sm:$0xf]
      %v297 = vld [vmem:[%s208 + $0x138] sm:$0xf]
      %v298 = vld [vmem:[%s208 + $0x13c] sm:$0xf]
      %v299 = vld [vmem:[%s208 + $0x140] sm:$0xf]
      %v300 = vld [vmem:[%s208 + $0x144] sm:$0xf]
      %v301 = vld [vmem:[%s208 + $0x148] sm:$0xf]
      %v302 = vld [vmem:[%s208 + $0x14c] sm:$0xf]
      %v303 = vld [vmem:[%s208 + $0x150] sm:$0xf]
      %v304 = vld [vmem:[%s208 + $0x154] sm:$0xf]
      %v305 = vld [vmem:[%s208 + $0x158] sm:$0xf]
      %v306 = vld [vmem:[%s208 + $0x15c] sm:$0xf]
      %v307 = vld [vmem:[%s208 + $0x160] sm:$0xf]
      %v308 = vld [vmem:[%s208 + $0x164] sm:$0xf]
      %v309 = vld [vmem:[%s208 + $0x168] sm:$0xf]
      %v310 = vld [vmem:[%s208 + $0x16c] sm:$0xf]
      %v311 = vld [vmem:[%s208 + $0x170] sm:$0xf]
      %v312 = vld [vmem:[%s208 + $0x174] sm:$0xf]
      %v313 = vld [vmem:[%s208 + $0x178] sm:$0xf]
      %v314 = vld [vmem:[%s208 + $0x17c] sm:$0xf]
      %v315 = vld [vmem:[%s208 + $0x180] sm:$0xf]
      %v316 = vld [vmem:[%s208 + $0x184] sm:$0xf]
      %v317 = vld [vmem:[%s208 + $0x188] sm:$0xf]
      %v318 = vld [vmem:[%s208 + $0x18c] sm:$0xf]
      %v319 = vld [vmem:[%s208 + $0x190] sm:$0xf]
      %v320 = vld [vmem:[%s208 + $0x194] sm:$0xf]
      %v321 = vld [vmem:[%s208 + $0x198] sm:$0xf]
      %v322 = vld [vmem:[%s208 + $0x19c] sm:$0xf]
      %v323 = vld [vmem:[%s208 + $0x1a0] sm:$0xf]
      %v324 = vld [vmem:[%s208 + $0x1a4] sm:$0xf]
      %v325 = vld [vmem:[%s208 + $0x1a8] sm:$0xf]
      %v326 = vld [vmem:[%s208 + $0x1ac] sm:$0xf]
      %v327 = vld [vmem:[%s208 + $0x1b0] sm:$0xf]
      %v328 = vld [vmem:[%s208 + $0x1b4] sm:$0xf]
      %v329 = vld [vmem:[%s208 + $0x1b8] sm:$0xf]
      %v330 = vld [vmem:[%s208 + $0x1bc] sm:$0xf]
      %v331 = vld [vmem:[%s208 + $0x1c0] sm:$0xf]
      %v332 = vld [vmem:[%s208 + $0x1c4] sm:$0xf]
      %v333 = vld [vmem:[%s208 + $0x1c8] sm:$0xf]
      %v334 = vld [vmem:[%s208 + $0x1cc] sm:$0xf]
      %v335 = vld [vmem:[%s208 + $0x1d0] sm:$0xf]
      %v336 = vld [vmem:[%s208 + $0x1d4] sm:$0xf]
      %v337 = vld [vmem:[%s208 + $0x1d8] sm:$0xf]
      %v338 = vld [vmem:[%s208 + $0x1dc] sm:$0xf]
      %v339 = vld [vmem:[%s208 + $0x1e0] sm:$0xf]
      %v340 = vld [vmem:[%s208 + $0x1e4] sm:$0xf]
      %v341 = vld [vmem:[%s208 + $0x1e8] sm:$0xf]
      %v342 = vld [vmem:[%s208 + $0x1ec] sm:$0xf]
      %v343 = vld [vmem:[%s208 + $0x1f0] sm:$0xf]
      %v344 = vld [vmem:[%s208 + $0x1f4] sm:$0xf]
      %v345 = vld [vmem:[%s208 + $0x1f8] sm:$0xf]
      %v346 = vld [vmem:[%s208 + $0x1fc] sm:$0xf]
      %v347 = vld [vmem:[%s1] sm:$0xf]
      %v348 = vld [vmem:[%s1 + $0x4] sm:$0xf]
      %v349 = vld [vmem:[%s1 + $0x8] sm:$0xf]
      %v350 = vld [vmem:[%s1 + $0xc] sm:$0xf]
      %v351 = vld [vmem:[%s1 + $0x10] sm:$0xf]
      %v352 = vld [vmem:[%s1 + $0x14] sm:$0xf]
      %v481 = vunpack.c.l.b16 %v219
      %v482 = vunpack.c.l.b16 %v220
      %v483 = vunpack.c.l.b16 %v221
      %v484 = vunpack.c.l.b16 %v222
      %v485 = vunpack.c.l.b16 %v223
      %v486 = vunpack.c.l.b16 %v224
      %v487 = vunpack.c.l.b16 %v225
      %v488 = vunpack.c.l.b16 %v226
      %v489 = vunpack.c.l.b16 %v227
      %v490 = vunpack.c.l.b16 %v228
      %v491 = vunpack.c.l.b16 %v229
      %v492 = vunpack.c.l.b16 %v230
      %v493 = vunpack.c.l.b16 %v231
      %v494 = vunpack.c.l.b16 %v232
      %v495 = vunpack.c.l.b16 %v233
      %v496 = vunpack.c.l.b16 %v234
      %v497 = vunpack.c.l.b16 %v235
      %v498 = vunpack.c.l.b16 %v236
      %v499 = vunpack.c.l.b16 %v237
      %v500 = vunpack.c.l.b16 %v238
      %v501 = vunpack.c.l.b16 %v239
      %v502 = vunpack.c.l.b16 %v240
      %v503 = vunpack.c.l.b16 %v241
      %v504 = vunpack.c.l.b16 %v242
      %v505 = vunpack.c.l.b16 %v243
      %v506 = vunpack.c.l.b16 %v244
      %v507 = vunpack.c.l.b16 %v245
      %v508 = vunpack.c.l.b16 %v246
      %v509 = vunpack.c.l.b16 %v247
      %v510 = vunpack.c.l.b16 %v248
      %v511 = vunpack.c.l.b16 %v249
      %v512 = vunpack.c.l.b16 %v250
      %v513 = vunpack.c.l.b16 %v251
      %v514 = vunpack.c.l.b16 %v252
      %v515 = vunpack.c.l.b16 %v253
      %v516 = vunpack.c.l.b16 %v254
      %v517 = vunpack.c.l.b16 %v255
      %v518 = vunpack.c.l.b16 %v256
      %v519 = vunpack.c.l.b16 %v257
      %v520 = vunpack.c.l.b16 %v258
      %v521 = vunpack.c.l.b16 %v259
      %v522 = vunpack.c.l.b16 %v260
      %v523 = vunpack.c.l.b16 %v261
      %v524 = vunpack.c.l.b16 %v262
      %v525 = vunpack.c.l.b16 %v263
      %v526 = vunpack.c.l.b16 %v264
      %v527 = vunpack.c.l.b16 %v265
      %v528 = vunpack.c.l.b16 %v266
      %v529 = vunpack.c.l.b16 %v267
      %v530 = vunpack.c.l.b16 %v268
      %v531 = vunpack.c.l.b16 %v269
      %v532 = vunpack.c.l.b16 %v270
      %v533 = vunpack.c.l.b16 %v271
      %v534 = vunpack.c.l.b16 %v272
      %v535 = vunpack.c.l.b16 %v273
      %v536 = vunpack.c.l.b16 %v274
      %v537 = vunpack.c.l.b16 %v275
      %v538 = vunpack.c.l.b16 %v276
      %v539 = vunpack.c.l.b16 %v277
      %v540 = vunpack.c.l.b16 %v278
      %v541 = vunpack.c.l.b16 %v279
      %v542 = vunpack.c.l.b16 %v280
      %v543 = vunpack.c.l.b16 %v281
      %v544 = vunpack.c.l.b16 %v282
      %v545 = vunpack.c.l.b16 %v283
      %v546 = vunpack.c.l.b16 %v284
      %v547 = vunpack.c.l.b16 %v285
      %v548 = vunpack.c.l.b16 %v286
      %v549 = vunpack.c.l.b16 %v287
      %v550 = vunpack.c.l.b16 %v288
      %v551 = vunpack.c.l.b16 %v289
      %v552 = vunpack.c.l.b16 %v290
      %v553 = vunpack.c.l.b16 %v291
      %v554 = vunpack.c.l.b16 %v292
      %v555 = vunpack.c.l.b16 %v293
      %v556 = vunpack.c.l.b16 %v294
      %v557 = vunpack.c.l.b16 %v295
      %v558 = vunpack.c.l.b16 %v296
      %v559 = vunpack.c.l.b16 %v297
      %v560 = vunpack.c.l.b16 %v298
      %v561 = vunpack.c.l.b16 %v299
      %v562 = vunpack.c.l.b16 %v300
      %v563 = vunpack.c.l.b16 %v301
      %v564 = vunpack.c.l.b16 %v302
      %v565 = vunpack.c.l.b16 %v303
      %v566 = vunpack.c.l.b16 %v304
      %v567 = vunpack.c.l.b16 %v305
      %v568 = vunpack.c.l.b16 %v306
      %v569 = vunpack.c.l.b16 %v307
      %v570 = vunpack.c.l.b16 %v308
      %v571 = vunpack.c.l.b16 %v309
      %v572 = vunpack.c.l.b16 %v310
      %v573 = vunpack.c.l.b16 %v311
      %v574 = vunpack.c.l.b16 %v312
      %v575 = vunpack.c.l.b16 %v313
      %v576 = vunpack.c.l.b16 %v314
      %v577 = vunpack.c.l.b16 %v315
      %v578 = vunpack.c.l.b16 %v316
      %v579 = vunpack.c.l.b16 %v317
      %v580 = vunpack.c.l.b16 %v318
      %v581 = vunpack.c.l.b16 %v319
      %v582 = vunpack.c.l.b16 %v320
      %v583 = vunpack.c.l.b16 %v321
      %v584 = vunpack.c.l.b16 %v322
      %v585 = vunpack.c.l.b16 %v323
      %v586 = vunpack.c.l.b16 %v324
      %v587 = vunpack.c.l.b16 %v325
      %v588 = vunpack.c.l.b16 %v326
      %v589 = vunpack.c.l.b16 %v327
      %v590 = vunpack.c.l.b16 %v328
      %v591 = vunpack.c.l.b16 %v329
      %v592 = vunpack.c.l.b16 %v330
      %v593 = vunpack.c.l.b16 %v331
      %v594 = vunpack.c.l.b16 %v332
      %v595 = vunpack.c.l.b16 %v333
      %v596 = vunpack.c.l.b16 %v334
      %v597 = vunpack.c.l.b16 %v335
      %v598 = vunpack.c.l.b16 %v336
      %v599 = vunpack.c.l.b16 %v337
      %v600 = vunpack.c.l.b16 %v338
      %v601 = vunpack.c.l.b16 %v339
      %v602 = vunpack.c.l.b16 %v340
      %v603 = vunpack.c.l.b16 %v341
      %v604 = vunpack.c.l.b16 %v342
      %v605 = vunpack.c.l.b16 %v343
      %v606 = vunpack.c.l.b16 %v344
      %v607 = vunpack.c.l.b16 %v345
      %v608 = vunpack.c.l.b16 %v346
      %v609 = vpack.c.b16 %v482, %v481
      %v610 = vpack.c.b16 %v484, %v483
      %v611 = vpack.c.b16 %v486, %v485
      %v612 = vpack.c.b16 %v488, %v487
      %v613 = vpack.c.b16 %v490, %v489
      %v614 = vpack.c.b16 %v492, %v491
      %v615 = vpack.c.b16 %v494, %v493
      %v616 = vpack.c.b16 %v496, %v495
      %v617 = vpack.c.b16 %v498, %v497
      %v618 = vpack.c.b16 %v500, %v499
      %v619 = vpack.c.b16 %v502, %v501
      %v620 = vpack.c.b16 %v504, %v503
      %v621 = vpack.c.b16 %v506, %v505
      %v622 = vpack.c.b16 %v508, %v507
      %v623 = vpack.c.b16 %v510, %v509
      %v624 = vpack.c.b16 %v512, %v511
      %v625 = vpack.c.b16 %v514, %v513
      %v626 = vpack.c.b16 %v516, %v515
      %v627 = vpack.c.b16 %v518, %v517
      %v628 = vpack.c.b16 %v520, %v519
      %v629 = vpack.c.b16 %v522, %v521
      %v630 = vpack.c.b16 %v524, %v523
      %v631 = vpack.c.b16 %v526, %v525
      %v632 = vpack.c.b16 %v528, %v527
      %v633 = vpack.c.b16 %v530, %v529
      %v634 = vpack.c.b16 %v532, %v531
      %v635 = vpack.c.b16 %v534, %v533
      %v636 = vpack.c.b16 %v536, %v535
      %v637 = vpack.c.b16 %v538, %v537
      %v638 = vpack.c.b16 %v540, %v539
      %v639 = vpack.c.b16 %v542, %v541
      %v640 = vpack.c.b16 %v544, %v543
      %v641 = vpack.c.b16 %v546, %v545
      %v642 = vpack.c.b16 %v548, %v547
      %v643 = vpack.c.b16 %v550, %v549
      %v644 = vpack.c.b16 %v552, %v551
      %v645 = vpack.c.b16 %v554, %v553
      %v646 = vpack.c.b16 %v556, %v555
      %v647 = vpack.c.b16 %v558, %v557
      %v648 = vpack.c.b16 %v560, %v559
      %v649 = vpack.c.b16 %v562, %v561
      %v650 = vpack.c.b16 %v564, %v563
      %v651 = vpack.c.b16 %v566, %v565
      %v652 = vpack.c.b16 %v568, %v567
      %v653 = vpack.c.b16 %v570, %v569
      %v654 = vpack.c.b16 %v572, %v571
      %v655 = vpack.c.b16 %v574, %v573
      %v656 = vpack.c.b16 %v576, %v575
      %v657 = vpack.c.b16 %v578, %v577
      %v658 = vpack.c.b16 %v580, %v579
      %v659 = vpack.c.b16 %v582, %v581
      %v660 = vpack.c.b16 %v584, %v583
      %v661 = vpack.c.b16 %v586, %v585
      %v662 = vpack.c.b16 %v588, %v587
      %v663 = vpack.c.b16 %v590, %v589
      %v664 = vpack.c.b16 %v592, %v591
      %v665 = vpack.c.b16 %v594, %v593
      %v666 = vpack.c.b16 %v596, %v595
      %v667 = vpack.c.b16 %v598, %v597
      %v668 = vpack.c.b16 %v600, %v599
      %v669 = vpack.c.b16 %v602, %v601
      %v670 = vpack.c.b16 %v604, %v603
      %v671 = vpack.c.b16 %v606, %v605
      %v672 = vpack.c.b16 %v608, %v607
      %v679 = vunpack.c.l.b16 %v347
      %v680 = vunpack.c.l.b16 %v348
      %v681 = vunpack.c.l.b16 %v349
      %v682 = vunpack.c.l.b16 %v350
      %v683 = vunpack.c.l.b16 %v351
      %v684 = vunpack.c.l.b16 %v352
      %v685 = vpack.c.b16 %v680, %v679
      %v686 = vpack.c.b16 %v682, %v681
      %v687 = vpack.c.b16 %v684, %v683
      %vm691 = vcmask 392192
      %v693 = vsel %vm691, %v609, 0
      %v696 = vsel %vm691, %v610, 0
      %v699 = vsel %vm691, %v611, 0
      %v702 = vsel %vm691, %v612, 0
      %v705 = vsel %vm691, %v613, 0
      %v708 = vsel %vm691, %v614, 0
      %v711 = vsel %vm691, %v615, 0
      %v714 = vsel %vm691, %v616, 0
      %v717 = vsel %vm691, %v617, 0
      %v720 = vsel %vm691, %v618, 0
      %v723 = vsel %vm691, %v619, 0
      %v726 = vsel %vm691, %v620, 0
      %v729 = vsel %vm691, %v621, 0
      %v732 = vsel %vm691, %v622, 0
      %v735 = vsel %vm691, %v623, 0
      %v738 = vsel %vm691, %v624, 0
      %v741 = vsel %vm691, %v625, 0
      %v744 = vsel %vm691, %v626, 0
      %v747 = vsel %vm691, %v627, 0
      %v750 = vsel %vm691, %v628, 0
      %v753 = vsel %vm691, %v629, 0
      %v756 = vsel %vm691, %v630, 0
      %v759 = vsel %vm691, %v631, 0
      %v762 = vsel %vm691, %v632, 0
      %v765 = vsel %vm691, %v633, 0
      %v768 = vsel %vm691, %v634, 0
      %v771 = vsel %vm691, %v635, 0
      %v774 = vsel %vm691, %v636, 0
      %v777 = vsel %vm691, %v637, 0
      %v780 = vsel %vm691, %v638, 0
      %v783 = vsel %vm691, %v639, 0
      %v786 = vsel %vm691, %v640, 0
      %v789 = vsel %vm691, %v641, 0
      %v792 = vsel %vm691, %v642, 0
      %v795 = vsel %vm691, %v643, 0
      %v798 = vsel %vm691, %v644, 0
      %v801 = vsel %vm691, %v645, 0
      %v804 = vsel %vm691, %v646, 0
      %v807 = vsel %vm691, %v647, 0
      %v810 = vsel %vm691, %v648, 0
      %v813 = vsel %vm691, %v649, 0
      %v816 = vsel %vm691, %v650, 0
      %v819 = vsel %vm691, %v651, 0
      %v822 = vsel %vm691, %v652, 0
      %v825 = vsel %vm691, %v653, 0
      %v828 = vsel %vm691, %v654, 0
      %v831 = vsel %vm691, %v655, 0
      %v834 = vsel %vm691, %v656, 0
      %v837 = vsel %vm691, %v657, 0
      %v840 = vsel %vm691, %v658, 0
      %v843 = vsel %vm691, %v659, 0
      %v846 = vsel %vm691, %v660, 0
      %v849 = vsel %vm691, %v661, 0
      %v852 = vsel %vm691, %v662, 0
      %v855 = vsel %vm691, %v663, 0
      %v858 = vsel %vm691, %v664, 0
      %v861 = vsel %vm691, %v665, 0
      %v864 = vsel %vm691, %v666, 0
      %v867 = vsel %vm691, %v667, 0
      %v870 = vsel %vm691, %v668, 0
      %v873 = vsel %vm691, %v669, 0
      %v876 = vsel %vm691, %v670, 0
      %v879 = vsel %vm691, %v671, 0
      %v882 = vsel %vm691, %v672, 0
      %884 = vmatpush.bf16.msra.mxu0 0
      %885 = vmatpush.bf16.msra.mxu0 0
      %886 = vmatpush.bf16.msra.mxu0 0
      %887 = vmatpush.bf16.msra.mxu0 0
      %888 = vmatpush.bf16.msra.mxu0 0
      %889 = vmatpush.bf16.msra.mxu0 %v687
      %890 = vmatpush.bf16.msra.mxu0 %v686
      %891 = vmatpush.bf16.msra.mxu0 %v685
      %892 = vmatmul.bf16.gmra.mxu0 %v693
      %v893 = vpop.f32.mrf.mxu0
      %v894 = vadd.f32 0.0, %v893
      %v895 = vpop.f32.mrf.mxu0
      %v896 = vadd.f32 0.0, %v895
      %897 = vmatmul.bf16.gmra.mxu0 %v696
      %v898 = vpop.f32.mrf.mxu0
      %v899 = vadd.f32 0.0, %v898
      %v900 = vpop.f32.mrf.mxu0
      %v901 = vadd.f32 0.0, %v900
      %902 = vmatmul.bf16.gmra.mxu0 %v699
      %v903 = vpop.f32.mrf.mxu0
      %v904 = vadd.f32 0.0, %v903
      %v905 = vpop.f32.mrf.mxu0
      %v906 = vadd.f32 0.0, %v905
      %907 = vmatmul.bf16.gmra.mxu0 %v702
      %v908 = vpop.f32.mrf.mxu0
      %v909 = vadd.f32 0.0, %v908
      %v910 = vpop.f32.mrf.mxu0
      %v911 = vadd.f32 0.0, %v910
      %912 = vmatmul.bf16.gmra.mxu0 %v705
      %v913 = vpop.f32.mrf.mxu0
      %v914 = vadd.f32 0.0, %v913
      %v915 = vpop.f32.mrf.mxu0
      %v916 = vadd.f32 0.0, %v915
      %917 = vmatmul.bf16.gmra.mxu0 %v708
      %v918 = vpop.f32.mrf.mxu0
      %v919 = vadd.f32 0.0, %v918
      %v920 = vpop.f32.mrf.mxu0
      %v921 = vadd.f32 0.0, %v920
      %922 = vmatmul.bf16.gmra.mxu0 %v711
      %v923 = vpop.f32.mrf.mxu0
      %v924 = vadd.f32 0.0, %v923
      %v925 = vpop.f32.mrf.mxu0
      %v926 = vadd.f32 0.0, %v925
      %927 = vmatmul.bf16.gmra.mxu0 %v714
      %v928 = vpop.f32.mrf.mxu0
      %v929 = vadd.f32 0.0, %v928
      %v930 = vpop.f32.mrf.mxu0
      %v931 = vadd.f32 0.0, %v930
      %932 = vmatmul.bf16.gmra.mxu0 %v717
      %v933 = vpop.f32.mrf.mxu0
      %v934 = vadd.f32 0.0, %v933
      %v935 = vpop.f32.mrf.mxu0
      %v936 = vadd.f32 0.0, %v935
      %937 = vmatmul.bf16.gmra.mxu0 %v720
      %v938 = vpop.f32.mrf.mxu0
      %v939 = vadd.f32 0.0, %v938
      %v940 = vpop.f32.mrf.mxu0
      %v941 = vadd.f32 0.0, %v940
      %942 = vmatmul.bf16.gmra.mxu0 %v723
      %v943 = vpop.f32.mrf.mxu0
      %v944 = vadd.f32 0.0, %v943
      %v945 = vpop.f32.mrf.mxu0
      %v946 = vadd.f32 0.0, %v945
      %947 = vmatmul.bf16.gmra.mxu0 %v726
      %v948 = vpop.f32.mrf.mxu0
      %v949 = vadd.f32 0.0, %v948
      %v950 = vpop.f32.mrf.mxu0
      %v951 = vadd.f32 0.0, %v950
      %952 = vmatmul.bf16.gmra.mxu0 %v729
      %v953 = vpop.f32.mrf.mxu0
      %v954 = vadd.f32 0.0, %v953
      %v955 = vpop.f32.mrf.mxu0
      %v956 = vadd.f32 0.0, %v955
      %957 = vmatmul.bf16.gmra.mxu0 %v732
      %v958 = vpop.f32.mrf.mxu0
      %v959 = vadd.f32 0.0, %v958
      %v960 = vpop.f32.mrf.mxu0
      %v961 = vadd.f32 0.0, %v960
      %962 = vmatmul.bf16.gmra.mxu0 %v735
      %v963 = vpop.f32.mrf.mxu0
      %v964 = vadd.f32 0.0, %v963
      %v965 = vpop.f32.mrf.mxu0
      %v966 = vadd.f32 0.0, %v965
      %967 = vmatmul.bf16.gmra.mxu0 %v738
      %v968 = vpop.f32.mrf.mxu0
      %v969 = vadd.f32 0.0, %v968
      %v970 = vpop.f32.mrf.mxu0
      %v971 = vadd.f32 0.0, %v970
      %972 = vmatmul.bf16.gmra.mxu0 %v741
      %v973 = vpop.f32.mrf.mxu0
      %v974 = vadd.f32 0.0, %v973
      %v975 = vpop.f32.mrf.mxu0
      %v976 = vadd.f32 0.0, %v975
      %977 = vmatmul.bf16.gmra.mxu0 %v744
      %v978 = vpop.f32.mrf.mxu0
      %v979 = vadd.f32 0.0, %v978
      %v980 = vpop.f32.mrf.mxu0
      %v981 = vadd.f32 0.0, %v980
      %982 = vmatmul.bf16.gmra.mxu0 %v747
      %v983 = vpop.f32.mrf.mxu0
      %v984 = vadd.f32 0.0, %v983
      %v985 = vpop.f32.mrf.mxu0
      %v986 = vadd.f32 0.0, %v985
      %987 = vmatmul.bf16.gmra.mxu0 %v750
      %v988 = vpop.f32.mrf.mxu0
      %v989 = vadd.f32 0.0, %v988
      %v990 = vpop.f32.mrf.mxu0
      %v991 = vadd.f32 0.0, %v990
      %992 = vmatmul.bf16.gmra.mxu0 %v753
      %v993 = vpop.f32.mrf.mxu0
      %v994 = vadd.f32 0.0, %v993
      %v995 = vpop.f32.mrf.mxu0
      %v996 = vadd.f32 0.0, %v995
      %997 = vmatmul.bf16.gmra.mxu0 %v756
      %v998 = vpop.f32.mrf.mxu0
      %v999 = vadd.f32 0.0, %v998
      %v1000 = vpop.f32.mrf.mxu0
      %v1001 = vadd.f32 0.0, %v1000
      %1002 = vmatmul.bf16.gmra.mxu0 %v759
      %v1003 = vpop.f32.mrf.mxu0
      %v1004 = vadd.f32 0.0, %v1003
      %v1005 = vpop.f32.mrf.mxu0
      %v1006 = vadd.f32 0.0, %v1005
      %1007 = vmatmul.bf16.gmra.mxu0 %v762
      %v1008 = vpop.f32.mrf.mxu0
      %v1009 = vadd.f32 0.0, %v1008
      %v1010 = vpop.f32.mrf.mxu0
      %v1011 = vadd.f32 0.0, %v1010
      %1012 = vmatmul.bf16.gmra.mxu0 %v765
      %v1013 = vpop.f32.mrf.mxu0
      %v1014 = vadd.f32 0.0, %v1013
      %v1015 = vpop.f32.mrf.mxu0
      %v1016 = vadd.f32 0.0, %v1015
      %1017 = vmatmul.bf16.gmra.mxu0 %v768
      %v1018 = vpop.f32.mrf.mxu0
      %v1019 = vadd.f32 0.0, %v1018
      %v1020 = vpop.f32.mrf.mxu0
      %v1021 = vadd.f32 0.0, %v1020
      %1022 = vmatmul.bf16.gmra.mxu0 %v771
      %v1023 = vpop.f32.mrf.mxu0
      %v1024 = vadd.f32 0.0, %v1023
      %v1025 = vpop.f32.mrf.mxu0
      %v1026 = vadd.f32 0.0, %v1025
      %1027 = vmatmul.bf16.gmra.mxu0 %v774
      %v1028 = vpop.f32.mrf.mxu0
      %v1029 = vadd.f32 0.0, %v1028
      %v1030 = vpop.f32.mrf.mxu0
      %v1031 = vadd.f32 0.0, %v1030
      %1032 = vmatmul.bf16.gmra.mxu0 %v777
      %v1033 = vpop.f32.mrf.mxu0
      %v1034 = vadd.f32 0.0, %v1033
      %v1035 = vpop.f32.mrf.mxu0
      %v1036 = vadd.f32 0.0, %v1035
      %1037 = vmatmul.bf16.gmra.mxu0 %v780
      %v1038 = vpop.f32.mrf.mxu0
      %v1039 = vadd.f32 0.0, %v1038
      %v1040 = vpop.f32.mrf.mxu0
      %v1041 = vadd.f32 0.0, %v1040
      %1042 = vmatmul.bf16.gmra.mxu0 %v783
      %v1043 = vpop.f32.mrf.mxu0
      %v1044 = vadd.f32 0.0, %v1043
      %v1045 = vpop.f32.mrf.mxu0
      %v1046 = vadd.f32 0.0, %v1045
      %1047 = vmatmul.bf16.gmra.mxu0 %v786
      %v1048 = vpop.f32.mrf.mxu0
      %v1049 = vadd.f32 0.0, %v1048
      %v1050 = vpop.f32.mrf.mxu0
      %v1051 = vadd.f32 0.0, %v1050
      %1052 = vmatmul.bf16.gmra.mxu0 %v789
      %v1053 = vpop.f32.mrf.mxu0
      %v1054 = vadd.f32 0.0, %v1053
      %v1055 = vpop.f32.mrf.mxu0
      %v1056 = vadd.f32 0.0, %v1055
      %1057 = vmatmul.bf16.gmra.mxu0 %v792
      %v1058 = vpop.f32.mrf.mxu0
      %v1059 = vadd.f32 0.0, %v1058
      %v1060 = vpop.f32.mrf.mxu0
      %v1061 = vadd.f32 0.0, %v1060
      %1062 = vmatmul.bf16.gmra.mxu0 %v795
      %v1063 = vpop.f32.mrf.mxu0
      %v1064 = vadd.f32 0.0, %v1063
      %v1065 = vpop.f32.mrf.mxu0
      %v1066 = vadd.f32 0.0, %v1065
      %1067 = vmatmul.bf16.gmra.mxu0 %v798
      %v1068 = vpop.f32.mrf.mxu0
      %v1069 = vadd.f32 0.0, %v1068
      %v1070 = vpop.f32.mrf.mxu0
      %v1071 = vadd.f32 0.0, %v1070
      %1072 = vmatmul.bf16.gmra.mxu0 %v801
      %v1073 = vpop.f32.mrf.mxu0
      %v1074 = vadd.f32 0.0, %v1073
      %v1075 = vpop.f32.mrf.mxu0
      %v1076 = vadd.f32 0.0, %v1075
      %1077 = vmatmul.bf16.gmra.mxu0 %v804
      %v1078 = vpop.f32.mrf.mxu0
      %v1079 = vadd.f32 0.0, %v1078
      %v1080 = vpop.f32.mrf.mxu0
      %v1081 = vadd.f32 0.0, %v1080
      %1082 = vmatmul.bf16.gmra.mxu0 %v807
      %v1083 = vpop.f32.mrf.mxu0
      %v1084 = vadd.f32 0.0, %v1083
      %v1085 = vpop.f32.mrf.mxu0
      %v1086 = vadd.f32 0.0, %v1085
      %1087 = vmatmul.bf16.gmra.mxu0 %v810
      %v1088 = vpop.f32.mrf.mxu0
      %v1089 = vadd.f32 0.0, %v1088
      %v1090 = vpop.f32.mrf.mxu0
      %v1091 = vadd.f32 0.0, %v1090
      %1092 = vmatmul.bf16.gmra.mxu0 %v813
      %v1093 = vpop.f32.mrf.mxu0
      %v1094 = vadd.f32 0.0, %v1093
      %v1095 = vpop.f32.mrf.mxu0
      %v1096 = vadd.f32 0.0, %v1095
      %1097 = vmatmul.bf16.gmra.mxu0 %v816
      %v1098 = vpop.f32.mrf.mxu0
      %v1099 = vadd.f32 0.0, %v1098
      %v1100 = vpop.f32.mrf.mxu0
      %v1101 = vadd.f32 0.0, %v1100
      %1102 = vmatmul.bf16.gmra.mxu0 %v819
      %v1103 = vpop.f32.mrf.mxu0
      %v1104 = vadd.f32 0.0, %v1103
      %v1105 = vpop.f32.mrf.mxu0
      %v1106 = vadd.f32 0.0, %v1105
      %1107 = vmatmul.bf16.gmra.mxu0 %v822
      %v1108 = vpop.f32.mrf.mxu0
      %v1109 = vadd.f32 0.0, %v1108
      %v1110 = vpop.f32.mrf.mxu0
      %v1111 = vadd.f32 0.0, %v1110
      %1112 = vmatmul.bf16.gmra.mxu0 %v825
      %v1113 = vpop.f32.mrf.mxu0
      %v1114 = vadd.f32 0.0, %v1113
      %v1115 = vpop.f32.mrf.mxu0
      %v1116 = vadd.f32 0.0, %v1115
      %1117 = vmatmul.bf16.gmra.mxu0 %v828
      %v1118 = vpop.f32.mrf.mxu0
      %v1119 = vadd.f32 0.0, %v1118
      %v1120 = vpop.f32.mrf.mxu0
      %v1121 = vadd.f32 0.0, %v1120
      %1122 = vmatmul.bf16.gmra.mxu0 %v831
      %v1123 = vpop.f32.mrf.mxu0
      %v1124 = vadd.f32 0.0, %v1123
      %v1125 = vpop.f32.mrf.mxu0
      %v1126 = vadd.f32 0.0, %v1125
      %1127 = vmatmul.bf16.gmra.mxu0 %v834
      %v1128 = vpop.f32.mrf.mxu0
      %v1129 = vadd.f32 0.0, %v1128
      %v1130 = vpop.f32.mrf.mxu0
      %v1131 = vadd.f32 0.0, %v1130
      %1132 = vmatmul.bf16.gmra.mxu0 %v837
      %v1133 = vpop.f32.mrf.mxu0
      %v1134 = vadd.f32 0.0, %v1133
      %v1135 = vpop.f32.mrf.mxu0
      %v1136 = vadd.f32 0.0, %v1135
      %1137 = vmatmul.bf16.gmra.mxu0 %v840
      %v1138 = vpop.f32.mrf.mxu0
      %v1139 = vadd.f32 0.0, %v1138
      %v1140 = vpop.f32.mrf.mxu0
      %v1141 = vadd.f32 0.0, %v1140
      %1142 = vmatmul.bf16.gmra.mxu0 %v843
      %v1143 = vpop.f32.mrf.mxu0
      %v1144 = vadd.f32 0.0, %v1143
      %v1145 = vpop.f32.mrf.mxu0
      %v1146 = vadd.f32 0.0, %v1145
      %1147 = vmatmul.bf16.gmra.mxu0 %v846
      %v1148 = vpop.f32.mrf.mxu0
      %v1149 = vadd.f32 0.0, %v1148
      %v1150 = vpop.f32.mrf.mxu0
      %v1151 = vadd.f32 0.0, %v1150
      %1152 = vmatmul.bf16.gmra.mxu0 %v849
      %v1153 = vpop.f32.mrf.mxu0
      %v1154 = vadd.f32 0.0, %v1153
      %v1155 = vpop.f32.mrf.mxu0
      %v1156 = vadd.f32 0.0, %v1155
      %1157 = vmatmul.bf16.gmra.mxu0 %v852
      %v1158 = vpop.f32.mrf.mxu0
      %v1159 = vadd.f32 0.0, %v1158
      %v1160 = vpop.f32.mrf.mxu0
      %v1161 = vadd.f32 0.0, %v1160
      %1162 = vmatmul.bf16.gmra.mxu0 %v855
      %v1163 = vpop.f32.mrf.mxu0
      %v1164 = vadd.f32 0.0, %v1163
      %v1165 = vpop.f32.mrf.mxu0
      %v1166 = vadd.f32 0.0, %v1165
      %1167 = vmatmul.bf16.gmra.mxu0 %v858
      %v1168 = vpop.f32.mrf.mxu0
      %v1169 = vadd.f32 0.0, %v1168
      %v1170 = vpop.f32.mrf.mxu0
      %v1171 = vadd.f32 0.0, %v1170
      %1172 = vmatmul.bf16.gmra.mxu0 %v861
      %v1173 = vpop.f32.mrf.mxu0
      %v1174 = vadd.f32 0.0, %v1173
      %v1175 = vpop.f32.mrf.mxu0
      %v1176 = vadd.f32 0.0, %v1175
      %1177 = vmatmul.bf16.gmra.mxu0 %v864
      %v1178 = vpop.f32.mrf.mxu0
      %v1179 = vadd.f32 0.0, %v1178
      %v1180 = vpop.f32.mrf.mxu0
      %v1181 = vadd.f32 0.0, %v1180
      %1182 = vmatmul.bf16.gmra.mxu0 %v867
      %v1183 = vpop.f32.mrf.mxu0
      %v1184 = vadd.f32 0.0, %v1183
      %v1185 = vpop.f32.mrf.mxu0
      %v1186 = vadd.f32 0.0, %v1185
      %1187 = vmatmul.bf16.gmra.mxu0 %v870
      %v1188 = vpop.f32.mrf.mxu0
      %v1189 = vadd.f32 0.0, %v1188
      %v1190 = vpop.f32.mrf.mxu0
      %v1191 = vadd.f32 0.0, %v1190
      %1192 = vmatmul.bf16.gmra.mxu0 %v873
      %v1193 = vpop.f32.mrf.mxu0
      %v1194 = vadd.f32 0.0, %v1193
      %v1195 = vpop.f32.mrf.mxu0
      %v1196 = vadd.f32 0.0, %v1195
      %1197 = vmatmul.bf16.gmra.mxu0 %v876
      %v1198 = vpop.f32.mrf.mxu0
      %v1199 = vadd.f32 0.0, %v1198
      %v1200 = vpop.f32.mrf.mxu0
      %v1201 = vadd.f32 0.0, %v1200
      %1202 = vmatmul.bf16.gmra.mxu0 %v879
      %v1203 = vpop.f32.mrf.mxu0
      %v1204 = vadd.f32 0.0, %v1203
      %v1205 = vpop.f32.mrf.mxu0
      %v1206 = vadd.f32 0.0, %v1205
      %1207 = vmatmul.bf16.gmra.mxu0 %v882
      %v1208 = vpop.f32.mrf.mxu0
      %v1209 = vadd.f32 0.0, %v1208
      %v1210 = vpop.f32.mrf.mxu0
      %v1211 = vadd.f32 0.0, %v1210
      %1212 = vdwg.mxu0
      %p1213 = scmp.eq.s32.totalorder %s19, 0
      %p1214 = scmp.eq.s32.totalorder %s20, 0
      %p1215 = pnand %p1213, %p1214
      %p1216 = pneg %p1215
      // Predicated region
      $region37: #{classifier_forward.3} parent=35 // pred_check
        _
      $region38: #{classifier_forward.3} parent=35 // pred_check_branch
        %1218 = sbr.rel (%p1215) target = $region40
      $region39: #{classifier_forward.3} parent=35 // pred_region
        %1219 = vst [vmem:[#allocation2] sm:$0x3] 0.0
      $region40: #{classifier_forward.3} parent=35 // pred_fallthru
        _
      // Predicated region
      $region41: #{classifier_forward.3} parent=35 // pred_check
        %p1220 = pneg %p1213
      $region42: #{classifier_forward.3} parent=35 // pred_check_branch
        %1222 = sbr.rel (%p1220) target = $region44
      $region43: #{classifier_forward.3} parent=35 // pred_region
        %v1223 = vld [vmem:[#allocation2] sm:$0x3]
        %v1224 = vadd.f32 %v894, %v896
        %v1225 = vadd.f32 %v1224, %v899
        %v1226 = vadd.f32 %v1225, %v901
        %v1227 = vadd.f32 %v1226, %v904
        %v1228 = vadd.f32 %v1227, %v906
        %v1229 = vadd.f32 %v1228, %v909
        %v1230 = vadd.f32 %v1229, %v911
        %v1231 = vadd.f32 %v1230, %v914
        %v1232 = vadd.f32 %v1231, %v916
        %v1233 = vadd.f32 %v1232, %v919
        %v1234 = vadd.f32 %v1233, %v921
        %v1235 = vadd.f32 %v1234, %v924
        %v1236 = vadd.f32 %v1235, %v926
        %v1237 = vadd.f32 %v1236, %v929
        %v1238 = vadd.f32 %v1237, %v931
        %v1239 = vadd.f32 %v1238, %v934
        %v1240 = vadd.f32 %v1239, %v936
        %v1241 = vadd.f32 %v1240, %v939
        %v1242 = vadd.f32 %v1241, %v941
        %v1243 = vadd.f32 %v1242, %v944
        %v1244 = vadd.f32 %v1243, %v946
        %v1245 = vadd.f32 %v1244, %v949
        %v1246 = vadd.f32 %v1245, %v951
        %v1247 = vadd.f32 %v1246, %v954
        %v1248 = vadd.f32 %v1247, %v956
        %v1249 = vadd.f32 %v1248, %v959
        %v1250 = vadd.f32 %v1249, %v961
        %v1251 = vadd.f32 %v1250, %v964
        %v1252 = vadd.f32 %v1251, %v966
        %v1253 = vadd.f32 %v1252, %v969
        %v1254 = vadd.f32 %v1253, %v971
        %v1255 = vadd.f32 %v1254, %v974
        %v1256 = vadd.f32 %v1255, %v976
        %v1257 = vadd.f32 %v1256, %v979
        %v1258 = vadd.f32 %v1257, %v981
        %v1259 = vadd.f32 %v1258, %v984
        %v1260 = vadd.f32 %v1259, %v986
        %v1261 = vadd.f32 %v1260, %v989
        %v1262 = vadd.f32 %v1261, %v991
        %v1263 = vadd.f32 %v1262, %v994
        %v1264 = vadd.f32 %v1263, %v996
        %v1265 = vadd.f32 %v1264, %v999
        %v1266 = vadd.f32 %v1265, %v1001
        %v1267 = vadd.f32 %v1266, %v1004
        %v1268 = vadd.f32 %v1267, %v1006
        %v1269 = vadd.f32 %v1268, %v1009
        %v1270 = vadd.f32 %v1269, %v1011
        %v1271 = vadd.f32 %v1270, %v1014
        %v1272 = vadd.f32 %v1271, %v1016
        %v1273 = vadd.f32 %v1272, %v1019
        %v1274 = vadd.f32 %v1273, %v1021
        %v1275 = vadd.f32 %v1274, %v1024
        %v1276 = vadd.f32 %v1275, %v1026
        %v1277 = vadd.f32 %v1276, %v1029
        %v1278 = vadd.f32 %v1277, %v1031
        %v1279 = vadd.f32 %v1278, %v1034
        %v1280 = vadd.f32 %v1279, %v1036
        %v1281 = vadd.f32 %v1280, %v1039
        %v1282 = vadd.f32 %v1281, %v1041
        %v1283 = vadd.f32 %v1282, %v1044
        %v1284 = vadd.f32 %v1283, %v1046
        %v1285 = vadd.f32 %v1284, %v1049
        %v1286 = vadd.f32 %v1285, %v1051
        %v1287 = vadd.f32 %v1286, %v1054
        %v1288 = vadd.f32 %v1287, %v1056
        %v1289 = vadd.f32 %v1288, %v1059
        %v1290 = vadd.f32 %v1289, %v1061
        %v1291 = vadd.f32 %v1290, %v1064
        %v1292 = vadd.f32 %v1291, %v1066
        %v1293 = vadd.f32 %v1292, %v1069
        %v1294 = vadd.f32 %v1293, %v1071
        %v1295 = vadd.f32 %v1294, %v1074
        %v1296 = vadd.f32 %v1295, %v1076
        %v1297 = vadd.f32 %v1296, %v1079
        %v1298 = vadd.f32 %v1297, %v1081
        %v1299 = vadd.f32 %v1298, %v1084
        %v1300 = vadd.f32 %v1299, %v1086
        %v1301 = vadd.f32 %v1300, %v1089
        %v1302 = vadd.f32 %v1301, %v1091
        %v1303 = vadd.f32 %v1302, %v1094
        %v1304 = vadd.f32 %v1303, %v1096
        %v1305 = vadd.f32 %v1304, %v1099
        %v1306 = vadd.f32 %v1305, %v1101
        %v1307 = vadd.f32 %v1306, %v1104
        %v1308 = vadd.f32 %v1307, %v1106
        %v1309 = vadd.f32 %v1308, %v1109
        %v1310 = vadd.f32 %v1309, %v1111
        %v1311 = vadd.f32 %v1310, %v1114
        %v1312 = vadd.f32 %v1311, %v1116
        %v1313 = vadd.f32 %v1312, %v1119
        %v1314 = vadd.f32 %v1313, %v1121
        %v1315 = vadd.f32 %v1314, %v1124
        %v1316 = vadd.f32 %v1315, %v1126
        %v1317 = vadd.f32 %v1316, %v1129
        %v1318 = vadd.f32 %v1317, %v1131
        %v1319 = vadd.f32 %v1318, %v1134
        %v1320 = vadd.f32 %v1319, %v1136
        %v1321 = vadd.f32 %v1320, %v1139
        %v1322 = vadd.f32 %v1321, %v1141
        %v1323 = vadd.f32 %v1322, %v1144
        %v1324 = vadd.f32 %v1323, %v1146
        %v1325 = vadd.f32 %v1324, %v1149
        %v1326 = vadd.f32 %v1325, %v1151
        %v1327 = vadd.f32 %v1326, %v1154
        %v1328 = vadd.f32 %v1327, %v1156
        %v1329 = vadd.f32 %v1328, %v1159
        %v1330 = vadd.f32 %v1329, %v1161
        %v1331 = vadd.f32 %v1330, %v1164
        %v1332 = vadd.f32 %v1331, %v1166
        %v1333 = vadd.f32 %v1332, %v1169
        %v1334 = vadd.f32 %v1333, %v1171
        %v1335 = vadd.f32 %v1334, %v1174
        %v1336 = vadd.f32 %v1335, %v1176
        %v1337 = vadd.f32 %v1336, %v1179
        %v1338 = vadd.f32 %v1337, %v1181
        %v1339 = vadd.f32 %v1338, %v1184
        %v1340 = vadd.f32 %v1339, %v1186
        %v1341 = vadd.f32 %v1340, %v1189
        %v1342 = vadd.f32 %v1341, %v1191
        %v1343 = vadd.f32 %v1342, %v1194
        %v1344 = vadd.f32 %v1343, %v1196
        %v1345 = vadd.f32 %v1344, %v1199
        %v1346 = vadd.f32 %v1345, %v1201
        %v1347 = vadd.f32 %v1346, %v1204
        %v1348 = vadd.f32 %v1347, %v1206
        %v1349 = vadd.f32 %v1348, %v1209
        %v1350 = vadd.f32 %v1349, %v1211
        %v1351 = vrot.slane %v1350, 4
        %v1352 = vadd.f32 %v1350, %v1351
        %v1353 = vrot.slane %v1352, 2
        %v1354 = vadd.f32 %v1352, %v1353
        %v1355 = vrot.slane %v1354, 1
        %v1356 = vadd.f32 %v1354, %v1355
        %v1357 = vmul.f32 %v894, %v894
        %v1358 = vmul.f32 %v896, %v896
        %v1359 = vmul.f32 %v899, %v899
        %v1360 = vmul.f32 %v901, %v901
        %v1361 = vmul.f32 %v904, %v904
        %v1362 = vmul.f32 %v906, %v906
        %v1363 = vmul.f32 %v909, %v909
        %v1364 = vmul.f32 %v911, %v911
        %v1365 = vmul.f32 %v914, %v914
        %v1366 = vmul.f32 %v916, %v916
        %v1367 = vmul.f32 %v919, %v919
        %v1368 = vmul.f32 %v921, %v921
        %v1369 = vmul.f32 %v924, %v924
        %v1370 = vmul.f32 %v926, %v926
        %v1371 = vmul.f32 %v929, %v929
        %v1372 = vmul.f32 %v931, %v931
        %v1373 = vmul.f32 %v934, %v934
        %v1374 = vmul.f32 %v936, %v936
        %v1375 = vmul.f32 %v939, %v939
        %v1376 = vmul.f32 %v941, %v941
        %v1377 = vmul.f32 %v944, %v944
        %v1378 = vmul.f32 %v946, %v946
        %v1379 = vmul.f32 %v949, %v949
        %v1380 = vmul.f32 %v951, %v951
        %v1381 = vmul.f32 %v954, %v954
        %v1382 = vmul.f32 %v956, %v956
        %v1383 = vmul.f32 %v959, %v959
        %v1384 = vmul.f32 %v961, %v961
        %v1385 = vmul.f32 %v964, %v964
        %v1386 = vmul.f32 %v966, %v966
        %v1387 = vmul.f32 %v969, %v969
        %v1388 = vmul.f32 %v971, %v971
        %v1389 = vmul.f32 %v974, %v974
        %v1390 = vmul.f32 %v976, %v976
        %v1391 = vmul.f32 %v979, %v979
        %v1392 = vmul.f32 %v981, %v981
        %v1393 = vmul.f32 %v984, %v984
        %v1394 = vmul.f32 %v986, %v986
        %v1395 = vmul.f32 %v989, %v989
        %v1396 = vmul.f32 %v991, %v991
        %v1397 = vmul.f32 %v994, %v994
        %v1398 = vmul.f32 %v996, %v996
        %v1399 = vmul.f32 %v999, %v999
        %v1400 = vmul.f32 %v1001, %v1001
        %v1401 = vmul.f32 %v1004, %v1004
        %v1402 = vmul.f32 %v1006, %v1006
        %v1403 = vmul.f32 %v1009, %v1009
        %v1404 = vmul.f32 %v1011, %v1011
        %v1405 = vmul.f32 %v1014, %v1014
        %v1406 = vmul.f32 %v1016, %v1016
        %v1407 = vmul.f32 %v1019, %v1019
        %v1408 = vmul.f32 %v1021, %v1021
        %v1409 = vmul.f32 %v1024, %v1024
        %v1410 = vmul.f32 %v1026, %v1026
        %v1411 = vmul.f32 %v1029, %v1029
        %v1412 = vmul.f32 %v1031, %v1031
        %v1413 = vmul.f32 %v1034, %v1034
        %v1414 = vmul.f32 %v1036, %v1036
        %v1415 = vmul.f32 %v1039, %v1039
        %v1416 = vmul.f32 %v1041, %v1041
        %v1417 = vmul.f32 %v1044, %v1044
        %v1418 = vmul.f32 %v1046, %v1046
        %v1419 = vmul.f32 %v1049, %v1049
        %v1420 = vmul.f32 %v1051, %v1051
        %v1421 = vmul.f32 %v1054, %v1054
        %v1422 = vmul.f32 %v1056, %v1056
        %v1423 = vmul.f32 %v1059, %v1059
        %v1424 = vmul.f32 %v1061, %v1061
        %v1425 = vmul.f32 %v1064, %v1064
        %v1426 = vmul.f32 %v1066, %v1066
        %v1427 = vmul.f32 %v1069, %v1069
        %v1428 = vmul.f32 %v1071, %v1071
        %v1429 = vmul.f32 %v1074, %v1074
        %v1430 = vmul.f32 %v1076, %v1076
        %v1431 = vmul.f32 %v1079, %v1079
        %v1432 = vmul.f32 %v1081, %v1081
        %v1433 = vmul.f32 %v1084, %v1084
        %v1434 = vmul.f32 %v1086, %v1086
        %v1435 = vmul.f32 %v1089, %v1089
        %v1436 = vmul.f32 %v1091, %v1091
        %v1437 = vmul.f32 %v1094, %v1094
        %v1438 = vmul.f32 %v1096, %v1096
        %v1439 = vmul.f32 %v1099, %v1099
        %v1440 = vmul.f32 %v1101, %v1101
        %v1441 = vmul.f32 %v1104, %v1104
        %v1442 = vmul.f32 %v1106, %v1106
        %v1443 = vmul.f32 %v1109, %v1109
        %v1444 = vmul.f32 %v1111, %v1111
        %v1445 = vmul.f32 %v1114, %v1114
        %v1446 = vmul.f32 %v1116, %v1116
        %v1447 = vmul.f32 %v1119, %v1119
        %v1448 = vmul.f32 %v1121, %v1121
        %v1449 = vmul.f32 %v1124, %v1124
        %v1450 = vmul.f32 %v1126, %v1126
        %v1451 = vmul.f32 %v1129, %v1129
        %v1452 = vmul.f32 %v1131, %v1131
        %v1453 = vmul.f32 %v1134, %v1134
        %v1454 = vmul.f32 %v1136, %v1136
        %v1455 = vmul.f32 %v1139, %v1139
        %v1456 = vmul.f32 %v1141, %v1141
        %v1457 = vmul.f32 %v1144, %v1144
        %v1458 = vmul.f32 %v1146, %v1146
        %v1459 = vmul.f32 %v1149, %v1149
        %v1460 = vmul.f32 %v1151, %v1151
        %v1461 = vmul.f32 %v1154, %v1154
        %v1462 = vmul.f32 %v1156, %v1156
        %v1463 = vmul.f32 %v1159, %v1159
        %v1464 = vmul.f32 %v1161, %v1161
        %v1465 = vmul.f32 %v1164, %v1164
        %v1466 = vmul.f32 %v1166, %v1166
        %v1467 = vmul.f32 %v1169, %v1169
        %v1468 = vmul.f32 %v1171, %v1171
        %v1469 = vmul.f32 %v1174, %v1174
        %v1470 = vmul.f32 %v1176, %v1176
        %v1471 = vmul.f32 %v1179, %v1179
        %v1472 = vmul.f32 %v1181, %v1181
        %v1473 = vmul.f32 %v1184, %v1184
        %v1474 = vmul.f32 %v1186, %v1186
        %v1475 = vmul.f32 %v1189, %v1189
        %v1476 = vmul.f32 %v1191, %v1191
        %v1477 = vmul.f32 %v1194, %v1194
        %v1478 = vmul.f32 %v1196, %v1196
        %v1479 = vmul.f32 %v1199, %v1199
        %v1480 = vmul.f32 %v1201, %v1201
        %v1481 = vmul.f32 %v1204, %v1204
        %v1482 = vmul.f32 %v1206, %v1206
        %v1483 = vmul.f32 %v1209, %v1209
        %v1484 = vmul.f32 %v1211, %v1211
        %v1485 = vadd.f32 %v1357, %v1358
        %v1486 = vadd.f32 %v1485, %v1359
        %v1487 = vadd.f32 %v1486, %v1360
        %v1488 = vadd.f32 %v1487, %v1361
        %v1489 = vadd.f32 %v1488, %v1362
        %v1490 = vadd.f32 %v1489, %v1363
        %v1491 = vadd.f32 %v1490, %v1364
        %v1492 = vadd.f32 %v1491, %v1365
        %v1493 = vadd.f32 %v1492, %v1366
        %v1494 = vadd.f32 %v1493, %v1367
        %v1495 = vadd.f32 %v1494, %v1368
        %v1496 = vadd.f32 %v1495, %v1369
        %v1497 = vadd.f32 %v1496, %v1370
        %v1498 = vadd.f32 %v1497, %v1371
        %v1499 = vadd.f32 %v1498, %v1372
        %v1500 = vadd.f32 %v1499, %v1373
        %v1501 = vadd.f32 %v1500, %v1374
        %v1502 = vadd.f32 %v1501, %v1375
        %v1503 = vadd.f32 %v1502, %v1376
        %v1504 = vadd.f32 %v1503, %v1377
        %v1505 = vadd.f32 %v1504, %v1378
        %v1506 = vadd.f32 %v1505, %v1379
        %v1507 = vadd.f32 %v1506, %v1380
        %v1508 = vadd.f32 %v1507, %v1381
        %v1509 = vadd.f32 %v1508, %v1382
        %v1510 = vadd.f32 %v1509, %v1383
        %v1511 = vadd.f32 %v1510, %v1384
        %v1512 = vadd.f32 %v1511, %v1385
        %v1513 = vadd.f32 %v1512, %v1386
        %v1514 = vadd.f32 %v1513, %v1387
        %v1515 = vadd.f32 %v1514, %v1388
        %v1516 = vadd.f32 %v1515, %v1389
        %v1517 = vadd.f32 %v1516, %v1390
        %v1518 = vadd.f32 %v1517, %v1391
        %v1519 = vadd.f32 %v1518, %v1392
        %v1520 = vadd.f32 %v1519, %v1393
        %v1521 = vadd.f32 %v1520, %v1394
        %v1522 = vadd.f32 %v1521, %v1395
        %v1523 = vadd.f32 %v1522, %v1396
        %v1524 = vadd.f32 %v1523, %v1397
        %v1525 = vadd.f32 %v1524, %v1398
        %v1526 = vadd.f32 %v1525, %v1399
        %v1527 = vadd.f32 %v1526, %v1400
        %v1528 = vadd.f32 %v1527, %v1401
        %v1529 = vadd.f32 %v1528, %v1402
        %v1530 = vadd.f32 %v1529, %v1403
        %v1531 = vadd.f32 %v1530, %v1404
        %v1532 = vadd.f32 %v1531, %v1405
        %v1533 = vadd.f32 %v1532, %v1406
        %v1534 = vadd.f32 %v1533, %v1407
        %v1535 = vadd.f32 %v1534, %v1408
        %v1536 = vadd.f32 %v1535, %v1409
        %v1537 = vadd.f32 %v1536, %v1410
        %v1538 = vadd.f32 %v1537, %v1411
        %v1539 = vadd.f32 %v1538, %v1412
        %v1540 = vadd.f32 %v1539, %v1413
        %v1541 = vadd.f32 %v1540, %v1414
        %v1542 = vadd.f32 %v1541, %v1415
        %v1543 = vadd.f32 %v1542, %v1416
        %v1544 = vadd.f32 %v1543, %v1417
        %v1545 = vadd.f32 %v1544, %v1418
        %v1546 = vadd.f32 %v1545, %v1419
        %v1547 = vadd.f32 %v1546, %v1420
        %v1548 = vadd.f32 %v1547, %v1421
        %v1549 = vadd.f32 %v1548, %v1422
        %v1550 = vadd.f32 %v1549, %v1423
        %v1551 = vadd.f32 %v1550, %v1424
        %v1552 = vadd.f32 %v1551, %v1425
        %v1553 = vadd.f32 %v1552, %v1426
        %v1554 = vadd.f32 %v1553, %v1427
        %v1555 = vadd.f32 %v1554, %v1428
        %v1556 = vadd.f32 %v1555, %v1429
        %v1557 = vadd.f32 %v1556, %v1430
        %v1558 = vadd.f32 %v1557, %v1431
        %v1559 = vadd.f32 %v1558, %v1432
        %v1560 = vadd.f32 %v1559, %v1433
        %v1561 = vadd.f32 %v1560, %v1434
        %v1562 = vadd.f32 %v1561, %v1435
        %v1563 = vadd.f32 %v1562, %v1436
        %v1564 = vadd.f32 %v1563, %v1437
        %v1565 = vadd.f32 %v1564, %v1438
        %v1566 = vadd.f32 %v1565, %v1439
        %v1567 = vadd.f32 %v1566, %v1440
        %v1568 = vadd.f32 %v1567, %v1441
        %v1569 = vadd.f32 %v1568, %v1442
        %v1570 = vadd.f32 %v1569, %v1443
        %v1571 = vadd.f32 %v1570, %v1444
        %v1572 = vadd.f32 %v1571, %v1445
        %v1573 = vadd.f32 %v1572, %v1446
        %v1574 = vadd.f32 %v1573, %v1447
        %v1575 = vadd.f32 %v1574, %v1448
        %v1576 = vadd.f32 %v1575, %v1449
        %v1577 = vadd.f32 %v1576, %v1450
        %v1578 = vadd.f32 %v1577, %v1451
        %v1579 = vadd.f32 %v1578, %v1452
        %v1580 = vadd.f32 %v1579, %v1453
        %v1581 = vadd.f32 %v1580, %v1454
        %v1582 = vadd.f32 %v1581, %v1455
        %v1583 = vadd.f32 %v1582, %v1456
        %v1584 = vadd.f32 %v1583, %v1457
        %v1585 = vadd.f32 %v1584, %v1458
        %v1586 = vadd.f32 %v1585, %v1459
        %v1587 = vadd.f32 %v1586, %v1460
        %v1588 = vadd.f32 %v1587, %v1461
        %v1589 = vadd.f32 %v1588, %v1462
        %v1590 = vadd.f32 %v1589, %v1463
        %v1591 = vadd.f32 %v1590, %v1464
        %v1592 = vadd.f32 %v1591, %v1465
        %v1593 = vadd.f32 %v1592, %v1466
        %v1594 = vadd.f32 %v1593, %v1467
        %v1595 = vadd.f32 %v1594, %v1468
        %v1596 = vadd.f32 %v1595, %v1469
        %v1597 = vadd.f32 %v1596, %v1470
        %v1598 = vadd.f32 %v1597, %v1471
        %v1599 = vadd.f32 %v1598, %v1472
        %v1600 = vadd.f32 %v1599, %v1473
        %v1601 = vadd.f32 %v1600, %v1474
        %v1602 = vadd.f32 %v1601, %v1475
        %v1603 = vadd.f32 %v1602, %v1476
        %v1604 = vadd.f32 %v1603, %v1477
        %v1605 = vadd.f32 %v1604, %v1478
        %v1606 = vadd.f32 %v1605, %v1479
        %v1607 = vadd.f32 %v1606, %v1480
        %v1608 = vadd.f32 %v1607, %v1481
        %v1609 = vadd.f32 %v1608, %v1482
        %v1610 = vadd.f32 %v1609, %v1483
        %v1611 = vadd.f32 %v1610, %v1484
        %v1612 = vrot.slane %v1611, 4
        %v1613 = vadd.f32 %v1611, %v1612
        %v1614 = vrot.slane %v1613, 2
        %v1615 = vadd.f32 %v1613, %v1614
        %v1616 = vrot.slane %v1615, 1
        %v1617 = vadd.f32 %v1615, %v1616
        %vm1618 = vcmask 1040384
        %v1619 = vsel %vm1618, %v1356, %v1617
        %v1620 = vadd.f32 %v1223, %v1619
        %1621 = vst [vmem:[#allocation2] sm:$0x3] %v1620
      $region44: #{classifier_forward.3} parent=35 // pred_fallthru
        _
      %p1622 = scmp.eq.s32.totalorder %s19, 1
      // Predicated region
      $region45: #{classifier_forward.3} parent=35 // pred_check
        %p1623 = pneg %p1622
      $region46: #{classifier_forward.3} parent=35 // pred_check_branch
        %1625 = sbr.rel (%p1623) target = $region48
      $region47: #{classifier_forward.3} parent=35 // pred_region
        %v1626 = vld [vmem:[#allocation2] sm:$0x1]
        %v1627 = vmul.f32 %v1626, 0.0005202914
        %v1628 = vld [vmem:[#allocation2 + $0x1] sm:$0x1]
        %v1629 = vmul.f32 %v1628, 0.0005202914
        %v1630 = vmul.f32 %v1627, %v1627
        %v1631 = vsub.f32 %v1629, %v1630
        %v1632 = vld [vmem:[%s2] sm:$0x1]
        %v1633 = vadd.f32 %v1631, 1e-05
        %v1634 = vrsqrt.pop %v1633
        %v1635 = vmul.f32 %v1634, %v1633
        %v1636 = vmul.f32 %v1635, %v1634
        %v1637 = vmul.f32 0.5, %v1636
        %v1638 = vsub.f32 1.5, %v1637
        %v1639 = vmul.f32 %v1634, %v1638
        %vm1640 = vweird.f32 %v1633
        %vm1641 = vweird.f32 %v1634
        %vm1642 = vmor %vm1640, %vm1641
        %v1643 = vsel %vm1642, %v1634, %v1639
        %v1644 = vmul.f32 %v1632, %v1643
        %v1645 = vld [vmem:[%s3] sm:$0x1]
        %v1646 = vmul.f32 %v1627, %v1644
        %v1647 = vsub.f32 %v1645, %v1646
        %v1649 = vperm.slane %v1644, 0
        %v1651 = vmul.f32 %v894, %v1649
        %v1652 = vmul.f32 %v896, %v1649
        %v1653 = vmul.f32 %v899, %v1649
        %v1654 = vmul.f32 %v901, %v1649
        %v1655 = vmul.f32 %v904, %v1649
        %v1656 = vmul.f32 %v906, %v1649
        %v1657 = vmul.f32 %v909, %v1649
        %v1658 = vmul.f32 %v911, %v1649
        %v1659 = vmul.f32 %v914, %v1649
        %v1660 = vmul.f32 %v916, %v1649
        %v1661 = vmul.f32 %v919, %v1649
        %v1662 = vmul.f32 %v921, %v1649
        %v1663 = vmul.f32 %v924, %v1649
        %v1664 = vmul.f32 %v926, %v1649
        %v1665 = vmul.f32 %v929, %v1649
        %v1666 = vmul.f32 %v931, %v1649
        %v1667 = vmul.f32 %v934, %v1649
        %v1668 = vmul.f32 %v936, %v1649
        %v1669 = vmul.f32 %v939, %v1649
        %v1670 = vmul.f32 %v941, %v1649
        %v1671 = vmul.f32 %v944, %v1649
        %v1672 = vmul.f32 %v946, %v1649
        %v1673 = vmul.f32 %v949, %v1649
        %v1674 = vmul.f32 %v951, %v1649
        %v1675 = vmul.f32 %v954, %v1649
        %v1676 = vmul.f32 %v956, %v1649
        %v1677 = vmul.f32 %v959, %v1649
        %v1678 = vmul.f32 %v961, %v1649
        %v1679 = vmul.f32 %v964, %v1649
        %v1680 = vmul.f32 %v966, %v1649
        %v1681 = vmul.f32 %v969, %v1649
        %v1682 = vmul.f32 %v971, %v1649
        %v1683 = vmul.f32 %v974, %v1649
        %v1684 = vmul.f32 %v976, %v1649
        %v1685 = vmul.f32 %v979, %v1649
        %v1686 = vmul.f32 %v981, %v1649
        %v1687 = vmul.f32 %v984, %v1649
        %v1688 = vmul.f32 %v986, %v1649
        %v1689 = vmul.f32 %v989, %v1649
        %v1690 = vmul.f32 %v991, %v1649
        %v1691 = vmul.f32 %v994, %v1649
        %v1692 = vmul.f32 %v996, %v1649
        %v1693 = vmul.f32 %v999, %v1649
        %v1694 = vmul.f32 %v1001, %v1649
        %v1695 = vmul.f32 %v1004, %v1649
        %v1696 = vmul.f32 %v1006, %v1649
        %v1697 = vmul.f32 %v1009, %v1649
        %v1698 = vmul.f32 %v1011, %v1649
        %v1699 = vmul.f32 %v1014, %v1649
        %v1700 = vmul.f32 %v1016, %v1649
        %v1701 = vmul.f32 %v1019, %v1649
        %v1702 = vmul.f32 %v1021, %v1649
        %v1703 = vmul.f32 %v1024, %v1649
        %v1704 = vmul.f32 %v1026, %v1649
        %v1705 = vmul.f32 %v1029, %v1649
        %v1706 = vmul.f32 %v1031, %v1649
        %v1707 = vmul.f32 %v1034, %v1649
        %v1708 = vmul.f32 %v1036, %v1649
        %v1709 = vmul.f32 %v1039, %v1649
        %v1710 = vmul.f32 %v1041, %v1649
        %v1711 = vmul.f32 %v1044, %v1649
        %v1712 = vmul.f32 %v1046, %v1649
        %v1713 = vmul.f32 %v1049, %v1649
        %v1714 = vmul.f32 %v1051, %v1649
        %v1715 = vmul.f32 %v1054, %v1649
        %v1716 = vmul.f32 %v1056, %v1649
        %v1717 = vmul.f32 %v1059, %v1649
        %v1718 = vmul.f32 %v1061, %v1649
        %v1719 = vmul.f32 %v1064, %v1649
        %v1720 = vmul.f32 %v1066, %v1649
        %v1721 = vmul.f32 %v1069, %v1649
        %v1722 = vmul.f32 %v1071, %v1649
        %v1723 = vmul.f32 %v1074, %v1649
        %v1724 = vmul.f32 %v1076, %v1649
        %v1725 = vmul.f32 %v1079, %v1649
        %v1726 = vmul.f32 %v1081, %v1649
        %v1727 = vmul.f32 %v1084, %v1649
        %v1728 = vmul.f32 %v1086, %v1649
        %v1729 = vmul.f32 %v1089, %v1649
        %v1730 = vmul.f32 %v1091, %v1649
        %v1731 = vmul.f32 %v1094, %v1649
        %v1732 = vmul.f32 %v1096, %v1649
        %v1733 = vmul.f32 %v1099, %v1649
        %v1734 = vmul.f32 %v1101, %v1649
        %v1735 = vmul.f32 %v1104, %v1649
        %v1736 = vmul.f32 %v1106, %v1649
        %v1737 = vmul.f32 %v1109, %v1649
        %v1738 = vmul.f32 %v1111, %v1649
        %v1739 = vmul.f32 %v1114, %v1649
        %v1740 = vmul.f32 %v1116, %v1649
        %v1741 = vmul.f32 %v1119, %v1649
        %v1742 = vmul.f32 %v1121, %v1649
        %v1743 = vmul.f32 %v1124, %v1649
        %v1744 = vmul.f32 %v1126, %v1649
        %v1745 = vmul.f32 %v1129, %v1649
        %v1746 = vmul.f32 %v1131, %v1649
        %v1747 = vmul.f32 %v1134, %v1649
        %v1748 = vmul.f32 %v1136, %v1649
        %v1749 = vmul.f32 %v1139, %v1649
        %v1750 = vmul.f32 %v1141, %v1649
        %v1751 = vmul.f32 %v1144, %v1649
        %v1752 = vmul.f32 %v1146, %v1649
        %v1753 = vmul.f32 %v1149, %v1649
        %v1754 = vmul.f32 %v1151, %v1649
        %v1755 = vmul.f32 %v1154, %v1649
        %v1756 = vmul.f32 %v1156, %v1649
        %v1757 = vmul.f32 %v1159, %v1649
        %v1758 = vmul.f32 %v1161, %v1649
        %v1759 = vmul.f32 %v1164, %v1649
        %v1760 = vmul.f32 %v1166, %v1649
        %v1761 = vmul.f32 %v1169, %v1649
        %v1762 = vmul.f32 %v1171, %v1649
        %v1763 = vmul.f32 %v1174, %v1649
        %v1764 = vmul.f32 %v1176, %v1649
        %v1765 = vmul.f32 %v1179, %v1649
        %v1766 = vmul.f32 %v1181, %v1649
        %v1767 = vmul.f32 %v1184, %v1649
        %v1768 = vmul.f32 %v1186, %v1649
        %v1769 = vmul.f32 %v1189, %v1649
        %v1770 = vmul.f32 %v1191, %v1649
        %v1771 = vmul.f32 %v1194, %v1649
        %v1772 = vmul.f32 %v1196, %v1649
        %v1773 = vmul.f32 %v1199, %v1649
        %v1774 = vmul.f32 %v1201, %v1649
        %v1775 = vmul.f32 %v1204, %v1649
        %v1776 = vmul.f32 %v1206, %v1649
        %v1777 = vmul.f32 %v1209, %v1649
        %v1778 = vmul.f32 %v1211, %v1649
        %v1780 = vperm.slane %v1647, 0
        %v1782 = vadd.f32 %v1651, %v1780
        %v1783 = vadd.f32 %v1652, %v1780
        %v1784 = vadd.f32 %v1653, %v1780
        %v1785 = vadd.f32 %v1654, %v1780
        %v1786 = vadd.f32 %v1655, %v1780
        %v1787 = vadd.f32 %v1656, %v1780
        %v1788 = vadd.f32 %v1657, %v1780
        %v1789 = vadd.f32 %v1658, %v1780
        %v1790 = vadd.f32 %v1659, %v1780
        %v1791 = vadd.f32 %v1660, %v1780
        %v1792 = vadd.f32 %v1661, %v1780
        %v1793 = vadd.f32 %v1662, %v1780
        %v1794 = vadd.f32 %v1663, %v1780
        %v1795 = vadd.f32 %v1664, %v1780
        %v1796 = vadd.f32 %v1665, %v1780
        %v1797 = vadd.f32 %v1666, %v1780
        %v1798 = vadd.f32 %v1667, %v1780
        %v1799 = vadd.f32 %v1668, %v1780
        %v1800 = vadd.f32 %v1669, %v1780
        %v1801 = vadd.f32 %v1670, %v1780
        %v1802 = vadd.f32 %v1671, %v1780
        %v1803 = vadd.f32 %v1672, %v1780
        %v1804 = vadd.f32 %v1673, %v1780
        %v1805 = vadd.f32 %v1674, %v1780
        %v1806 = vadd.f32 %v1675, %v1780
        %v1807 = vadd.f32 %v1676, %v1780
        %v1808 = vadd.f32 %v1677, %v1780
        %v1809 = vadd.f32 %v1678, %v1780
        %v1810 = vadd.f32 %v1679, %v1780
        %v1811 = vadd.f32 %v1680, %v1780
        %v1812 = vadd.f32 %v1681, %v1780
        %v1813 = vadd.f32 %v1682, %v1780
        %v1814 = vadd.f32 %v1683, %v1780
        %v1815 = vadd.f32 %v1684, %v1780
        %v1816 = vadd.f32 %v1685, %v1780
        %v1817 = vadd.f32 %v1686, %v1780
        %v1818 = vadd.f32 %v1687, %v1780
        %v1819 = vadd.f32 %v1688, %v1780
        %v1820 = vadd.f32 %v1689, %v1780
        %v1821 = vadd.f32 %v1690, %v1780
        %v1822 = vadd.f32 %v1691, %v1780
        %v1823 = vadd.f32 %v1692, %v1780
        %v1824 = vadd.f32 %v1693, %v1780
        %v1825 = vadd.f32 %v1694, %v1780
        %v1826 = vadd.f32 %v1695, %v1780
        %v1827 = vadd.f32 %v1696, %v1780
        %v1828 = vadd.f32 %v1697, %v1780
        %v1829 = vadd.f32 %v1698, %v1780
        %v1830 = vadd.f32 %v1699, %v1780
        %v1831 = vadd.f32 %v1700, %v1780
        %v1832 = vadd.f32 %v1701, %v1780
        %v1833 = vadd.f32 %v1702, %v1780
        %v1834 = vadd.f32 %v1703, %v1780
        %v1835 = vadd.f32 %v1704, %v1780
        %v1836 = vadd.f32 %v1705, %v1780
        %v1837 = vadd.f32 %v1706, %v1780
        %v1838 = vadd.f32 %v1707, %v1780
        %v1839 = vadd.f32 %v1708, %v1780
        %v1840 = vadd.f32 %v1709, %v1780
        %v1841 = vadd.f32 %v1710, %v1780
        %v1842 = vadd.f32 %v1711, %v1780
        %v1843 = vadd.f32 %v1712, %v1780
        %v1844 = vadd.f32 %v1713, %v1780
        %v1845 = vadd.f32 %v1714, %v1780
        %v1846 = vadd.f32 %v1715, %v1780
        %v1847 = vadd.f32 %v1716, %v1780
        %v1848 = vadd.f32 %v1717, %v1780
        %v1849 = vadd.f32 %v1718, %v1780
        %v1850 = vadd.f32 %v1719, %v1780
        %v1851 = vadd.f32 %v1720, %v1780
        %v1852 = vadd.f32 %v1721, %v1780
        %v1853 = vadd.f32 %v1722, %v1780
        %v1854 = vadd.f32 %v1723, %v1780
        %v1855 = vadd.f32 %v1724, %v1780
        %v1856 = vadd.f32 %v1725, %v1780
        %v1857 = vadd.f32 %v1726, %v1780
        %v1858 = vadd.f32 %v1727, %v1780
        %v1859 = vadd.f32 %v1728, %v1780
        %v1860 = vadd.f32 %v1729, %v1780
        %v1861 = vadd.f32 %v1730, %v1780
        %v1862 = vadd.f32 %v1731, %v1780
        %v1863 = vadd.f32 %v1732, %v1780
        %v1864 = vadd.f32 %v1733, %v1780
        %v1865 = vadd.f32 %v1734, %v1780
        %v1866 = vadd.f32 %v1735, %v1780
        %v1867 = vadd.f32 %v1736, %v1780
        %v1868 = vadd.f32 %v1737, %v1780
        %v1869 = vadd.f32 %v1738, %v1780
        %v1870 = vadd.f32 %v1739, %v1780
        %v1871 = vadd.f32 %v1740, %v1780
        %v1872 = vadd.f32 %v1741, %v1780
        %v1873 = vadd.f32 %v1742, %v1780
        %v1874 = vadd.f32 %v1743, %v1780
        %v1875 = vadd.f32 %v1744, %v1780
        %v1876 = vadd.f32 %v1745, %v1780
        %v1877 = vadd.f32 %v1746, %v1780
        %v1878 = vadd.f32 %v1747, %v1780
        %v1879 = vadd.f32 %v1748, %v1780
        %v1880 = vadd.f32 %v1749, %v1780
        %v1881 = vadd.f32 %v1750, %v1780
        %v1882 = vadd.f32 %v1751, %v1780
        %v1883 = vadd.f32 %v1752, %v1780
        %v1884 = vadd.f32 %v1753, %v1780
        %v1885 = vadd.f32 %v1754, %v1780
        %v1886 = vadd.f32 %v1755, %v1780
        %v1887 = vadd.f32 %v1756, %v1780
        %v1888 = vadd.f32 %v1757, %v1780
        %v1889 = vadd.f32 %v1758, %v1780
        %v1890 = vadd.f32 %v1759, %v1780
        %v1891 = vadd.f32 %v1760, %v1780
        %v1892 = vadd.f32 %v1761, %v1780
        %v1893 = vadd.f32 %v1762, %v1780
        %v1894 = vadd.f32 %v1763, %v1780
        %v1895 = vadd.f32 %v1764, %v1780
        %v1896 = vadd.f32 %v1765, %v1780
        %v1897 = vadd.f32 %v1766, %v1780
        %v1898 = vadd.f32 %v1767, %v1780
        %v1899 = vadd.f32 %v1768, %v1780
        %v1900 = vadd.f32 %v1769, %v1780
        %v1901 = vadd.f32 %v1770, %v1780
        %v1902 = vadd.f32 %v1771, %v1780
        %v1903 = vadd.f32 %v1772, %v1780
        %v1904 = vadd.f32 %v1773, %v1780
        %v1905 = vadd.f32 %v1774, %v1780
        %v1906 = vadd.f32 %v1775, %v1780
        %v1907 = vadd.f32 %v1776, %v1780
        %v1908 = vadd.f32 %v1777, %v1780
        %v1909 = vadd.f32 %v1778, %v1780
        %vm1910 = vcmp.ge.f32.partialorder %v1782, 0.0
        %vm1911 = vcmp.ge.f32.partialorder %v1783, 0.0
        %vm1912 = vcmp.ge.f32.partialorder %v1784, 0.0
        %vm1913 = vcmp.ge.f32.partialorder %v1785, 0.0
        %vm1914 = vcmp.ge.f32.partialorder %v1786, 0.0
        %vm1915 = vcmp.ge.f32.partialorder %v1787, 0.0
        %vm1916 = vcmp.ge.f32.partialorder %v1788, 0.0
        %vm1917 = vcmp.ge.f32.partialorder %v1789, 0.0
        %vm1918 = vcmp.ge.f32.partialorder %v1790, 0.0
        %vm1919 = vcmp.ge.f32.partialorder %v1791, 0.0
        %vm1920 = vcmp.ge.f32.partialorder %v1792, 0.0
        %vm1921 = vcmp.ge.f32.partialorder %v1793, 0.0
        %vm1922 = vcmp.ge.f32.partialorder %v1794, 0.0
        %vm1923 = vcmp.ge.f32.partialorder %v1795, 0.0
        %vm1924 = vcmp.ge.f32.partialorder %v1796, 0.0
        %vm1925 = vcmp.ge.f32.partialorder %v1797, 0.0
        %vm1926 = vcmp.ge.f32.partialorder %v1798, 0.0
        %vm1927 = vcmp.ge.f32.partialorder %v1799, 0.0
        %vm1928 = vcmp.ge.f32.partialorder %v1800, 0.0
        %vm1929 = vcmp.ge.f32.partialorder %v1801, 0.0
        %vm1930 = vcmp.ge.f32.partialorder %v1802, 0.0
        %vm1931 = vcmp.ge.f32.partialorder %v1803, 0.0
        %vm1932 = vcmp.ge.f32.partialorder %v1804, 0.0
        %vm1933 = vcmp.ge.f32.partialorder %v1805, 0.0
        %vm1934 = vcmp.ge.f32.partialorder %v1806, 0.0
        %vm1935 = vcmp.ge.f32.partialorder %v1807, 0.0
        %vm1936 = vcmp.ge.f32.partialorder %v1808, 0.0
        %vm1937 = vcmp.ge.f32.partialorder %v1809, 0.0
        %vm1938 = vcmp.ge.f32.partialorder %v1810, 0.0
        %vm1939 = vcmp.ge.f32.partialorder %v1811, 0.0
        %vm1940 = vcmp.ge.f32.partialorder %v1812, 0.0
        %vm1941 = vcmp.ge.f32.partialorder %v1813, 0.0
        %vm1942 = vcmp.ge.f32.partialorder %v1814, 0.0
        %vm1943 = vcmp.ge.f32.partialorder %v1815, 0.0
        %vm1944 = vcmp.ge.f32.partialorder %v1816, 0.0
        %vm1945 = vcmp.ge.f32.partialorder %v1817, 0.0
        %vm1946 = vcmp.ge.f32.partialorder %v1818, 0.0
        %vm1947 = vcmp.ge.f32.partialorder %v1819, 0.0
        %vm1948 = vcmp.ge.f32.partialorder %v1820, 0.0
        %vm1949 = vcmp.ge.f32.partialorder %v1821, 0.0
        %vm1950 = vcmp.ge.f32.partialorder %v1822, 0.0
        %vm1951 = vcmp.ge.f32.partialorder %v1823, 0.0
        %vm1952 = vcmp.ge.f32.partialorder %v1824, 0.0
        %vm1953 = vcmp.ge.f32.partialorder %v1825, 0.0
        %vm1954 = vcmp.ge.f32.partialorder %v1826, 0.0
        %vm1955 = vcmp.ge.f32.partialorder %v1827, 0.0
        %vm1956 = vcmp.ge.f32.partialorder %v1828, 0.0
        %vm1957 = vcmp.ge.f32.partialorder %v1829, 0.0
        %vm1958 = vcmp.ge.f32.partialorder %v1830, 0.0
        %vm1959 = vcmp.ge.f32.partialorder %v1831, 0.0
        %vm1960 = vcmp.ge.f32.partialorder %v1832, 0.0
        %vm1961 = vcmp.ge.f32.partialorder %v1833, 0.0
        %vm1962 = vcmp.ge.f32.partialorder %v1834, 0.0
        %vm1963 = vcmp.ge.f32.partialorder %v1835, 0.0
        %vm1964 = vcmp.ge.f32.partialorder %v1836, 0.0
        %vm1965 = vcmp.ge.f32.partialorder %v1837, 0.0
        %vm1966 = vcmp.ge.f32.partialorder %v1838, 0.0
        %vm1967 = vcmp.ge.f32.partialorder %v1839, 0.0
        %vm1968 = vcmp.ge.f32.partialorder %v1840, 0.0
        %vm1969 = vcmp.ge.f32.partialorder %v1841, 0.0
        %vm1970 = vcmp.ge.f32.partialorder %v1842, 0.0
        %vm1971 = vcmp.ge.f32.partialorder %v1843, 0.0
        %vm1972 = vcmp.ge.f32.partialorder %v1844, 0.0
        %vm1973 = vcmp.ge.f32.partialorder %v1845, 0.0
        %vm1974 = vcmp.ge.f32.partialorder %v1846, 0.0
        %vm1975 = vcmp.ge.f32.partialorder %v1847, 0.0
        %vm1976 = vcmp.ge.f32.partialorder %v1848, 0.0
        %vm1977 = vcmp.ge.f32.partialorder %v1849, 0.0
        %vm1978 = vcmp.ge.f32.partialorder %v1850, 0.0
        %vm1979 = vcmp.ge.f32.partialorder %v1851, 0.0
        %vm1980 = vcmp.ge.f32.partialorder %v1852, 0.0
        %vm1981 = vcmp.ge.f32.partialorder %v1853, 0.0
        %vm1982 = vcmp.ge.f32.partialorder %v1854, 0.0
        %vm1983 = vcmp.ge.f32.partialorder %v1855, 0.0
        %vm1984 = vcmp.ge.f32.partialorder %v1856, 0.0
        %vm1985 = vcmp.ge.f32.partialorder %v1857, 0.0
        %vm1986 = vcmp.ge.f32.partialorder %v1858, 0.0
        %vm1987 = vcmp.ge.f32.partialorder %v1859, 0.0
        %vm1988 = vcmp.ge.f32.partialorder %v1860, 0.0
        %vm1989 = vcmp.ge.f32.partialorder %v1861, 0.0
        %vm1990 = vcmp.ge.f32.partialorder %v1862, 0.0
        %vm1991 = vcmp.ge.f32.partialorder %v1863, 0.0
        %vm1992 = vcmp.ge.f32.partialorder %v1864, 0.0
        %vm1993 = vcmp.ge.f32.partialorder %v1865, 0.0
        %vm1994 = vcmp.ge.f32.partialorder %v1866, 0.0
        %vm1995 = vcmp.ge.f32.partialorder %v1867, 0.0
        %vm1996 = vcmp.ge.f32.partialorder %v1868, 0.0
        %vm1997 = vcmp.ge.f32.partialorder %v1869, 0.0
        %vm1998 = vcmp.ge.f32.partialorder %v1870, 0.0
        %vm1999 = vcmp.ge.f32.partialorder %v1871, 0.0
        %vm2000 = vcmp.ge.f32.partialorder %v1872, 0.0
        %vm2001 = vcmp.ge.f32.partialorder %v1873, 0.0
        %vm2002 = vcmp.ge.f32.partialorder %v1874, 0.0
        %vm2003 = vcmp.ge.f32.partialorder %v1875, 0.0
        %vm2004 = vcmp.ge.f32.partialorder %v1876, 0.0
        %vm2005 = vcmp.ge.f32.partialorder %v1877, 0.0
        %vm2006 = vcmp.ge.f32.partialorder %v1878, 0.0
        %vm2007 = vcmp.ge.f32.partialorder %v1879, 0.0
        %vm2008 = vcmp.ge.f32.partialorder %v1880, 0.0
        %vm2009 = vcmp.ge.f32.partialorder %v1881, 0.0
        %vm2010 = vcmp.ge.f32.partialorder %v1882, 0.0
        %vm2011 = vcmp.ge.f32.partialorder %v1883, 0.0
        %vm2012 = vcmp.ge.f32.partialorder %v1884, 0.0
        %vm2013 = vcmp.ge.f32.partialorder %v1885, 0.0
        %vm2014 = vcmp.ge.f32.partialorder %v1886, 0.0
        %vm2015 = vcmp.ge.f32.partialorder %v1887, 0.0
        %vm2016 = vcmp.ge.f32.partialorder %v1888, 0.0
        %vm2017 = vcmp.ge.f32.partialorder %v1889, 0.0
        %vm2018 = vcmp.ge.f32.partialorder %v1890, 0.0
        %vm2019 = vcmp.ge.f32.partialorder %v1891, 0.0
        %vm2020 = vcmp.ge.f32.partialorder %v1892, 0.0
        %vm2021 = vcmp.ge.f32.partialorder %v1893, 0.0
        %vm2022 = vcmp.ge.f32.partialorder %v1894, 0.0
        %vm2023 = vcmp.ge.f32.partialorder %v1895, 0.0
        %vm2024 = vcmp.ge.f32.partialorder %v1896, 0.0
        %vm2025 = vcmp.ge.f32.partialorder %v1897, 0.0
        %vm2026 = vcmp.ge.f32.partialorder %v1898, 0.0
        %vm2027 = vcmp.ge.f32.partialorder %v1899, 0.0
        %vm2028 = vcmp.ge.f32.partialorder %v1900, 0.0
        %vm2029 = vcmp.ge.f32.partialorder %v1901, 0.0
        %vm2030 = vcmp.ge.f32.partialorder %v1902, 0.0
        %vm2031 = vcmp.ge.f32.partialorder %v1903, 0.0
        %vm2032 = vcmp.ge.f32.partialorder %v1904, 0.0
        %vm2033 = vcmp.ge.f32.partialorder %v1905, 0.0
        %vm2034 = vcmp.ge.f32.partialorder %v1906, 0.0
        %vm2035 = vcmp.ge.f32.partialorder %v1907, 0.0
        %vm2036 = vcmp.ge.f32.partialorder %v1908, 0.0
        %vm2037 = vcmp.ge.f32.partialorder %v1909, 0.0
        %v2038 = vmul.f32 %v1782, 0.2
        %v2039 = vmul.f32 %v1783, 0.2
        %v2040 = vmul.f32 %v1784, 0.2
        %v2041 = vmul.f32 %v1785, 0.2
        %v2042 = vmul.f32 %v1786, 0.2
        %v2043 = vmul.f32 %v1787, 0.2
        %v2044 = vmul.f32 %v1788, 0.2
        %v2045 = vmul.f32 %v1789, 0.2
        %v2046 = vmul.f32 %v1790, 0.2
        %v2047 = vmul.f32 %v1791, 0.2
        %v2048 = vmul.f32 %v1792, 0.2
        %v2049 = vmul.f32 %v1793, 0.2
        %v2050 = vmul.f32 %v1794, 0.2
        %v2051 = vmul.f32 %v1795, 0.2
        %v2052 = vmul.f32 %v1796, 0.2
        %v2053 = vmul.f32 %v1797, 0.2
        %v2054 = vmul.f32 %v1798, 0.2
        %v2055 = vmul.f32 %v1799, 0.2
        %v2056 = vmul.f32 %v1800, 0.2
        %v2057 = vmul.f32 %v1801, 0.2
        %v2058 = vmul.f32 %v1802, 0.2
        %v2059 = vmul.f32 %v1803, 0.2
        %v2060 = vmul.f32 %v1804, 0.2
        %v2061 = vmul.f32 %v1805, 0.2
        %v2062 = vmul.f32 %v1806, 0.2
        %v2063 = vmul.f32 %v1807, 0.2
        %v2064 = vmul.f32 %v1808, 0.2
        %v2065 = vmul.f32 %v1809, 0.2
        %v2066 = vmul.f32 %v1810, 0.2
        %v2067 = vmul.f32 %v1811, 0.2
        %v2068 = vmul.f32 %v1812, 0.2
        %v2069 = vmul.f32 %v1813, 0.2
        %v2070 = vmul.f32 %v1814, 0.2
        %v2071 = vmul.f32 %v1815, 0.2
        %v2072 = vmul.f32 %v1816, 0.2
        %v2073 = vmul.f32 %v1817, 0.2
        %v2074 = vmul.f32 %v1818, 0.2
        %v2075 = vmul.f32 %v1819, 0.2
        %v2076 = vmul.f32 %v1820, 0.2
        %v2077 = vmul.f32 %v1821, 0.2
        %v2078 = vmul.f32 %v1822, 0.2
        %v2079 = vmul.f32 %v1823, 0.2
        %v2080 = vmul.f32 %v1824, 0.2
        %v2081 = vmul.f32 %v1825, 0.2
        %v2082 = vmul.f32 %v1826, 0.2
        %v2083 = vmul.f32 %v1827, 0.2
        %v2084 = vmul.f32 %v1828, 0.2
        %v2085 = vmul.f32 %v1829, 0.2
        %v2086 = vmul.f32 %v1830, 0.2
        %v2087 = vmul.f32 %v1831, 0.2
        %v2088 = vmul.f32 %v1832, 0.2
        %v2089 = vmul.f32 %v1833, 0.2
        %v2090 = vmul.f32 %v1834, 0.2
        %v2091 = vmul.f32 %v1835, 0.2
        %v2092 = vmul.f32 %v1836, 0.2
        %v2093 = vmul.f32 %v1837, 0.2
        %v2094 = vmul.f32 %v1838, 0.2
        %v2095 = vmul.f32 %v1839, 0.2
        %v2096 = vmul.f32 %v1840, 0.2
        %v2097 = vmul.f32 %v1841, 0.2
        %v2098 = vmul.f32 %v1842, 0.2
        %v2099 = vmul.f32 %v1843, 0.2
        %v2100 = vmul.f32 %v1844, 0.2
        %v2101 = vmul.f32 %v1845, 0.2
        %v2102 = vmul.f32 %v1846, 0.2
        %v2103 = vmul.f32 %v1847, 0.2
        %v2104 = vmul.f32 %v1848, 0.2
        %v2105 = vmul.f32 %v1849, 0.2
        %v2106 = vmul.f32 %v1850, 0.2
        %v2107 = vmul.f32 %v1851, 0.2
        %v2108 = vmul.f32 %v1852, 0.2
        %v2109 = vmul.f32 %v1853, 0.2
        %v2110 = vmul.f32 %v1854, 0.2
        %v2111 = vmul.f32 %v1855, 0.2
        %v2112 = vmul.f32 %v1856, 0.2
        %v2113 = vmul.f32 %v1857, 0.2
        %v2114 = vmul.f32 %v1858, 0.2
        %v2115 = vmul.f32 %v1859, 0.2
        %v2116 = vmul.f32 %v1860, 0.2
        %v2117 = vmul.f32 %v1861, 0.2
        %v2118 = vmul.f32 %v1862, 0.2
        %v2119 = vmul.f32 %v1863, 0.2
        %v2120 = vmul.f32 %v1864, 0.2
        %v2121 = vmul.f32 %v1865, 0.2
        %v2122 = vmul.f32 %v1866, 0.2
        %v2123 = vmul.f32 %v1867, 0.2
        %v2124 = vmul.f32 %v1868, 0.2
        %v2125 = vmul.f32 %v1869, 0.2
        %v2126 = vmul.f32 %v1870, 0.2
        %v2127 = vmul.f32 %v1871, 0.2
        %v2128 = vmul.f32 %v1872, 0.2
        %v2129 = vmul.f32 %v1873, 0.2
        %v2130 = vmul.f32 %v1874, 0.2
        %v2131 = vmul.f32 %v1875, 0.2
        %v2132 = vmul.f32 %v1876, 0.2
        %v2133 = vmul.f32 %v1877, 0.2
        %v2134 = vmul.f32 %v1878, 0.2
        %v2135 = vmul.f32 %v1879, 0.2
        %v2136 = vmul.f32 %v1880, 0.2
        %v2137 = vmul.f32 %v1881, 0.2
        %v2138 = vmul.f32 %v1882, 0.2
        %v2139 = vmul.f32 %v1883, 0.2
        %v2140 = vmul.f32 %v1884, 0.2
        %v2141 = vmul.f32 %v1885, 0.2
        %v2142 = vmul.f32 %v1886, 0.2
        %v2143 = vmul.f32 %v1887, 0.2
        %v2144 = vmul.f32 %v1888, 0.2
        %v2145 = vmul.f32 %v1889, 0.2
        %v2146 = vmul.f32 %v1890, 0.2
        %v2147 = vmul.f32 %v1891, 0.2
        %v2148 = vmul.f32 %v1892, 0.2
        %v2149 = vmul.f32 %v1893, 0.2
        %v2150 = vmul.f32 %v1894, 0.2
        %v2151 = vmul.f32 %v1895, 0.2
        %v2152 = vmul.f32 %v1896, 0.2
        %v2153 = vmul.f32 %v1897, 0.2
        %v2154 = vmul.f32 %v1898, 0.2
        %v2155 = vmul.f32 %v1899, 0.2
        %v2156 = vmul.f32 %v1900, 0.2
        %v2157 = vmul.f32 %v1901, 0.2
        %v2158 = vmul.f32 %v1902, 0.2
        %v2159 = vmul.f32 %v1903, 0.2
        %v2160 = vmul.f32 %v1904, 0.2
        %v2161 = vmul.f32 %v1905, 0.2
        %v2162 = vmul.f32 %v1906, 0.2
        %v2163 = vmul.f32 %v1907, 0.2
        %v2164 = vmul.f32 %v1908, 0.2
        %v2165 = vmul.f32 %v1909, 0.2
        %v2166 = vsel %vm1910, %v1782, %v2038
        %v2167 = vsel %vm1911, %v1783, %v2039
        %v2168 = vsel %vm1912, %v1784, %v2040
        %v2169 = vsel %vm1913, %v1785, %v2041
        %v2170 = vsel %vm1914, %v1786, %v2042
        %v2171 = vsel %vm1915, %v1787, %v2043
        %v2172 = vsel %vm1916, %v1788, %v2044
        %v2173 = vsel %vm1917, %v1789, %v2045
        %v2174 = vsel %vm1918, %v1790, %v2046
        %v2175 = vsel %vm1919, %v1791, %v2047
        %v2176 = vsel %vm1920, %v1792, %v2048
        %v2177 = vsel %vm1921, %v1793, %v2049
        %v2178 = vsel %vm1922, %v1794, %v2050
        %v2179 = vsel %vm1923, %v1795, %v2051
        %v2180 = vsel %vm1924, %v1796, %v2052
        %v2181 = vsel %vm1925, %v1797, %v2053
        %v2182 = vsel %vm1926, %v1798, %v2054
        %v2183 = vsel %vm1927, %v1799, %v2055
        %v2184 = vsel %vm1928, %v1800, %v2056
        %v2185 = vsel %vm1929, %v1801, %v2057
        %v2186 = vsel %vm1930, %v1802, %v2058
        %v2187 = vsel %vm1931, %v1803, %v2059
        %v2188 = vsel %vm1932, %v1804, %v2060
        %v2189 = vsel %vm1933, %v1805, %v2061
        %v2190 = vsel %vm1934, %v1806, %v2062
        %v2191 = vsel %vm1935, %v1807, %v2063
        %v2192 = vsel %vm1936, %v1808, %v2064
        %v2193 = vsel %vm1937, %v1809, %v2065
        %v2194 = vsel %vm1938, %v1810, %v2066
        %v2195 = vsel %vm1939, %v1811, %v2067
        %v2196 = vsel %vm1940, %v1812, %v2068
        %v2197 = vsel %vm1941, %v1813, %v2069
        %v2198 = vsel %vm1942, %v1814, %v2070
        %v2199 = vsel %vm1943, %v1815, %v2071
        %v2200 = vsel %vm1944, %v1816, %v2072
        %v2201 = vsel %vm1945, %v1817, %v2073
        %v2202 = vsel %vm1946, %v1818, %v2074
        %v2203 = vsel %vm1947, %v1819, %v2075
        %v2204 = vsel %vm1948, %v1820, %v2076
        %v2205 = vsel %vm1949, %v1821, %v2077
        %v2206 = vsel %vm1950, %v1822, %v2078
        %v2207 = vsel %vm1951, %v1823, %v2079
        %v2208 = vsel %vm1952, %v1824, %v2080
        %v2209 = vsel %vm1953, %v1825, %v2081
        %v2210 = vsel %vm1954, %v1826, %v2082
        %v2211 = vsel %vm1955, %v1827, %v2083
        %v2212 = vsel %vm1956, %v1828, %v2084
        %v2213 = vsel %vm1957, %v1829, %v2085
        %v2214 = vsel %vm1958, %v1830, %v2086
        %v2215 = vsel %vm1959, %v1831, %v2087
        %v2216 = vsel %vm1960, %v1832, %v2088
        %v2217 = vsel %vm1961, %v1833, %v2089
        %v2218 = vsel %vm1962, %v1834, %v2090
        %v2219 = vsel %vm1963, %v1835, %v2091
        %v2220 = vsel %vm1964, %v1836, %v2092
        %v2221 = vsel %vm1965, %v1837, %v2093
        %v2222 = vsel %vm1966, %v1838, %v2094
        %v2223 = vsel %vm1967, %v1839, %v2095
        %v2224 = vsel %vm1968, %v1840, %v2096
        %v2225 = vsel %vm1969, %v1841, %v2097
        %v2226 = vsel %vm1970, %v1842, %v2098
        %v2227 = vsel %vm1971, %v1843, %v2099
        %v2228 = vsel %vm1972, %v1844, %v2100
        %v2229 = vsel %vm1973, %v1845, %v2101
        %v2230 = vsel %vm1974, %v1846, %v2102
        %v2231 = vsel %vm1975, %v1847, %v2103
        %v2232 = vsel %vm1976, %v1848, %v2104
        %v2233 = vsel %vm1977, %v1849, %v2105
        %v2234 = vsel %vm1978, %v1850, %v2106
        %v2235 = vsel %vm1979, %v1851, %v2107
        %v2236 = vsel %vm1980, %v1852, %v2108
        %v2237 = vsel %vm1981, %v1853, %v2109
        %v2238 = vsel %vm1982, %v1854, %v2110
        %v2239 = vsel %vm1983, %v1855, %v2111
        %v2240 = vsel %vm1984, %v1856, %v2112
        %v2241 = vsel %vm1985, %v1857, %v2113
        %v2242 = vsel %vm1986, %v1858, %v2114
        %v2243 = vsel %vm1987, %v1859, %v2115
        %v2244 = vsel %vm1988, %v1860, %v2116
        %v2245 = vsel %vm1989, %v1861, %v2117
        %v2246 = vsel %vm1990, %v1862, %v2118
        %v2247 = vsel %vm1991, %v1863, %v2119
        %v2248 = vsel %vm1992, %v1864, %v2120
        %v2249 = vsel %vm1993, %v1865, %v2121
        %v2250 = vsel %vm1994, %v1866, %v2122
        %v2251 = vsel %vm1995, %v1867, %v2123
        %v2252 = vsel %vm1996, %v1868, %v2124
        %v2253 = vsel %vm1997, %v1869, %v2125
        %v2254 = vsel %vm1998, %v1870, %v2126
        %v2255 = vsel %vm1999, %v1871, %v2127
        %v2256 = vsel %vm2000, %v1872, %v2128
        %v2257 = vsel %vm2001, %v1873, %v2129
        %v2258 = vsel %vm2002, %v1874, %v2130
        %v2259 = vsel %vm2003, %v1875, %v2131
        %v2260 = vsel %vm2004, %v1876, %v2132
        %v2261 = vsel %vm2005, %v1877, %v2133
        %v2262 = vsel %vm2006, %v1878, %v2134
        %v2263 = vsel %vm2007, %v1879, %v2135
        %v2264 = vsel %vm2008, %v1880, %v2136
        %v2265 = vsel %vm2009, %v1881, %v2137
        %v2266 = vsel %vm2010, %v1882, %v2138
        %v2267 = vsel %vm2011, %v1883, %v2139
        %v2268 = vsel %vm2012, %v1884, %v2140
        %v2269 = vsel %vm2013, %v1885, %v2141
        %v2270 = vsel %vm2014, %v1886, %v2142
        %v2271 = vsel %vm2015, %v1887, %v2143
        %v2272 = vsel %vm2016, %v1888, %v2144
        %v2273 = vsel %vm2017, %v1889, %v2145
        %v2274 = vsel %vm2018, %v1890, %v2146
        %v2275 = vsel %vm2019, %v1891, %v2147
        %v2276 = vsel %vm2020, %v1892, %v2148
        %v2277 = vsel %vm2021, %v1893, %v2149
        %v2278 = vsel %vm2022, %v1894, %v2150
        %v2279 = vsel %vm2023, %v1895, %v2151
        %v2280 = vsel %vm2024, %v1896, %v2152
        %v2281 = vsel %vm2025, %v1897, %v2153
        %v2282 = vsel %vm2026, %v1898, %v2154
        %v2283 = vsel %vm2027, %v1899, %v2155
        %v2284 = vsel %vm2028, %v1900, %v2156
        %v2285 = vsel %vm2029, %v1901, %v2157
        %v2286 = vsel %vm2030, %v1902, %v2158
        %v2287 = vsel %vm2031, %v1903, %v2159
        %v2288 = vsel %vm2032, %v1904, %v2160
        %v2289 = vsel %vm2033, %v1905, %v2161
        %v2290 = vsel %vm2034, %v1906, %v2162
        %v2291 = vsel %vm2035, %v1907, %v2163
        %v2292 = vsel %vm2036, %v1908, %v2164
        %v2293 = vsel %vm2037, %v1909, %v2165
        %2294 = vst [vmem:[%s215] sm:$0xff] %v2166
        %2295 = vst [vmem:[%s215 + $0x8] sm:$0xff] %v2167
        %2296 = vst [vmem:[%s215 + $0x10] sm:$0xff] %v2168
        %2297 = vst [vmem:[%s215 + $0x18] sm:$0xff] %v2169
        %2298 = vst [vmem:[%s215 + $0x20] sm:$0xff] %v2170
        %2299 = vst [vmem:[%s215 + $0x28] sm:$0xff] %v2171
        %2300 = vst [vmem:[%s215 + $0x30] sm:$0xff] %v2172
        %2301 = vst [vmem:[%s215 + $0x38] sm:$0xff] %v2173
        %2302 = vst [vmem:[%s215 + $0x40] sm:$0xff] %v2174
        %2303 = vst [vmem:[%s215 + $0x48] sm:$0xff] %v2175
        %2304 = vst [vmem:[%s215 + $0x50] sm:$0xff] %v2176
        %2305 = vst [vmem:[%s215 + $0x58] sm:$0xff] %v2177
        %2306 = vst [vmem:[%s215 + $0x60] sm:$0xff] %v2178
        %2307 = vst [vmem:[%s215 + $0x68] sm:$0xff] %v2179
        %2308 = vst [vmem:[%s215 + $0x70] sm:$0xff] %v2180
        %2309 = vst [vmem:[%s215 + $0x78] sm:$0xff] %v2181
        %2310 = vst [vmem:[%s215 + $0x80] sm:$0xff] %v2182
        %2311 = vst [vmem:[%s215 + $0x88] sm:$0xff] %v2183
        %2312 = vst [vmem:[%s215 + $0x90] sm:$0xff] %v2184
        %2313 = vst [vmem:[%s215 + $0x98] sm:$0xff] %v2185
        %2314 = vst [vmem:[%s215 + $0xa0] sm:$0xff] %v2186
        %2315 = vst [vmem:[%s215 + $0xa8] sm:$0xff] %v2187
        %2316 = vst [vmem:[%s215 + $0xb0] sm:$0xff] %v2188
        %2317 = vst [vmem:[%s215 + $0xb8] sm:$0xff] %v2189
        %2318 = vst [vmem:[%s215 + $0xc0] sm:$0xff] %v2190
        %2319 = vst [vmem:[%s215 + $0xc8] sm:$0xff] %v2191
        %2320 = vst [vmem:[%s215 + $0xd0] sm:$0xff] %v2192
        %2321 = vst [vmem:[%s215 + $0xd8] sm:$0xff] %v2193
        %2322 = vst [vmem:[%s215 + $0xe0] sm:$0xff] %v2194
        %2323 = vst [vmem:[%s215 + $0xe8] sm:$0xff] %v2195
        %2324 = vst [vmem:[%s215 + $0xf0] sm:$0xff] %v2196
        %2325 = vst [vmem:[%s215 + $0xf8] sm:$0xff] %v2197
        %2326 = vst [vmem:[%s215 + $0x100] sm:$0xff] %v2198
        %2327 = vst [vmem:[%s215 + $0x108] sm:$0xff] %v2199
        %2328 = vst [vmem:[%s215 + $0x110] sm:$0xff] %v2200
        %2329 = vst [vmem:[%s215 + $0x118] sm:$0xff] %v2201
        %2330 = vst [vmem:[%s215 + $0x120] sm:$0xff] %v2202
        %2331 = vst [vmem:[%s215 + $0x128] sm:$0xff] %v2203
        %2332 = vst [vmem:[%s215 + $0x130] sm:$0xff] %v2204
        %2333 = vst [vmem:[%s215 + $0x138] sm:$0xff] %v2205
        %2334 = vst [vmem:[%s215 + $0x140] sm:$0xff] %v2206
        %2335 = vst [vmem:[%s215 + $0x148] sm:$0xff] %v2207
        %2336 = vst [vmem:[%s215 + $0x150] sm:$0xff] %v2208
        %2337 = vst [vmem:[%s215 + $0x158] sm:$0xff] %v2209
        %2338 = vst [vmem:[%s215 + $0x160] sm:$0xff] %v2210
        %2339 = vst [vmem:[%s215 + $0x168] sm:$0xff] %v2211
        %2340 = vst [vmem:[%s215 + $0x170] sm:$0xff] %v2212
        %2341 = vst [vmem:[%s215 + $0x178] sm:$0xff] %v2213
        %2342 = vst [vmem:[%s215 + $0x180] sm:$0xff] %v2214
        %2343 = vst [vmem:[%s215 + $0x188] sm:$0xff] %v2215
        %2344 = vst [vmem:[%s215 + $0x190] sm:$0xff] %v2216
        %2345 = vst [vmem:[%s215 + $0x198] sm:$0xff] %v2217
        %2346 = vst [vmem:[%s215 + $0x1a0] sm:$0xff] %v2218
        %2347 = vst [vmem:[%s215 + $0x1a8] sm:$0xff] %v2219
        %2348 = vst [vmem:[%s215 + $0x1b0] sm:$0xff] %v2220
        %2349 = vst [vmem:[%s215 + $0x1b8] sm:$0xff] %v2221
        %2350 = vst [vmem:[%s215 + $0x1c0] sm:$0xff] %v2222
        %2351 = vst [vmem:[%s215 + $0x1c8] sm:$0xff] %v2223
        %2352 = vst [vmem:[%s215 + $0x1d0] sm:$0xff] %v2224
        %2353 = vst [vmem:[%s215 + $0x1d8] sm:$0xff] %v2225
        %2354 = vst [vmem:[%s215 + $0x1e0] sm:$0xff] %v2226
        %2355 = vst [vmem:[%s215 + $0x1e8] sm:$0xff] %v2227
        %2356 = vst [vmem:[%s215 + $0x1f0] sm:$0xff] %v2228
        %2357 = vst [vmem:[%s215 + $0x1f8] sm:$0xff] %v2229
        %2358 = vst [vmem:[%s215 + $0x200] sm:$0xff] %v2230
        %2359 = vst [vmem:[%s215 + $0x208] sm:$0xff] %v2231
        %2360 = vst [vmem:[%s215 + $0x210] sm:$0xff] %v2232
        %2361 = vst [vmem:[%s215 + $0x218] sm:$0xff] %v2233
        %2362 = vst [vmem:[%s215 + $0x220] sm:$0xff] %v2234
        %2363 = vst [vmem:[%s215 + $0x228] sm:$0xff] %v2235
        %2364 = vst [vmem:[%s215 + $0x230] sm:$0xff] %v2236
        %2365 = vst [vmem:[%s215 + $0x238] sm:$0xff] %v2237
        %2366 = vst [vmem:[%s215 + $0x240] sm:$0xff] %v2238
        %2367 = vst [vmem:[%s215 + $0x248] sm:$0xff] %v2239
        %2368 = vst [vmem:[%s215 + $0x250] sm:$0xff] %v2240
        %2369 = vst [vmem:[%s215 + $0x258] sm:$0xff] %v2241
        %2370 = vst [vmem:[%s215 + $0x260] sm:$0xff] %v2242
        %2371 = vst [vmem:[%s215 + $0x268] sm:$0xff] %v2243
        %2372 = vst [vmem:[%s215 + $0x270] sm:$0xff] %v2244
        %2373 = vst [vmem:[%s215 + $0x278] sm:$0xff] %v2245
        %2374 = vst [vmem:[%s215 + $0x280] sm:$0xff] %v2246
        %2375 = vst [vmem:[%s215 + $0x288] sm:$0xff] %v2247
        %2376 = vst [vmem:[%s215 + $0x290] sm:$0xff] %v2248
        %2377 = vst [vmem:[%s215 + $0x298] sm:$0xff] %v2249
        %2378 = vst [vmem:[%s215 + $0x2a0] sm:$0xff] %v2250
        %2379 = vst [vmem:[%s215 + $0x2a8] sm:$0xff] %v2251
        %2380 = vst [vmem:[%s215 + $0x2b0] sm:$0xff] %v2252
        %2381 = vst [vmem:[%s215 + $0x2b8] sm:$0xff] %v2253
        %2382 = vst [vmem:[%s215 + $0x2c0] sm:$0xff] %v2254
        %2383 = vst [vmem:[%s215 + $0x2c8] sm:$0xff] %v2255
        %2384 = vst [vmem:[%s215 + $0x2d0] sm:$0xff] %v2256
        %2385 = vst [vmem:[%s215 + $0x2d8] sm:$0xff] %v2257
        %2386 = vst [vmem:[%s215 + $0x2e0] sm:$0xff] %v2258
        %2387 = vst [vmem:[%s215 + $0x2e8] sm:$0xff] %v2259
        %2388 = vst [vmem:[%s215 + $0x2f0] sm:$0xff] %v2260
        %2389 = vst [vmem:[%s215 + $0x2f8] sm:$0xff] %v2261
        %2390 = vst [vmem:[%s215 + $0x300] sm:$0xff] %v2262
        %2391 = vst [vmem:[%s215 + $0x308] sm:$0xff] %v2263
        %2392 = vst [vmem:[%s215 + $0x310] sm:$0xff] %v2264
        %2393 = vst [vmem:[%s215 + $0x318] sm:$0xff] %v2265
        %2394 = vst [vmem:[%s215 + $0x320] sm:$0xff] %v2266
        %2395 = vst [vmem:[%s215 + $0x328] sm:$0xff] %v2267
        %2396 = vst [vmem:[%s215 + $0x330] sm:$0xff] %v2268
        %2397 = vst [vmem:[%s215 + $0x338] sm:$0xff] %v2269
        %2398 = vst [vmem:[%s215 + $0x340] sm:$0xff] %v2270
        %2399 = vst [vmem:[%s215 + $0x348] sm:$0xff] %v2271
        %2400 = vst [vmem:[%s215 + $0x350] sm:$0xff] %v2272
        %2401 = vst [vmem:[%s215 + $0x358] sm:$0xff] %v2273
        %2402 = vst [vmem:[%s215 + $0x360] sm:$0xff] %v2274
        %2403 = vst [vmem:[%s215 + $0x368] sm:$0xff] %v2275
        %2404 = vst [vmem:[%s215 + $0x370] sm:$0xff] %v2276
        %2405 = vst [vmem:[%s215 + $0x378] sm:$0xff] %v2277
        %2406 = vst [vmem:[%s215 + $0x380] sm:$0xff] %v2278
        %2407 = vst [vmem:[%s215 + $0x388] sm:$0xff] %v2279
        %2408 = vst [vmem:[%s215 + $0x390] sm:$0xff] %v2280
        %2409 = vst [vmem:[%s215 + $0x398] sm:$0xff] %v2281
        %2410 = vst [vmem:[%s215 + $0x3a0] sm:$0xff] %v2282
        %2411 = vst [vmem:[%s215 + $0x3a8] sm:$0xff] %v2283
        %2412 = vst [vmem:[%s215 + $0x3b0] sm:$0xff] %v2284
        %2413 = vst [vmem:[%s215 + $0x3b8] sm:$0xff] %v2285
        %2414 = vst [vmem:[%s215 + $0x3c0] sm:$0xff] %v2286
        %2415 = vst [vmem:[%s215 + $0x3c8] sm:$0xff] %v2287
        %2416 = vst [vmem:[%s215 + $0x3d0] sm:$0xff] %v2288
        %2417 = vst [vmem:[%s215 + $0x3d8] sm:$0xff] %v2289
        %2418 = vst [vmem:[%s215 + $0x3e0] sm:$0xff] %v2290
        %2419 = vst [vmem:[%s215 + $0x3e8] sm:$0xff] %v2291
        %2420 = vst [vmem:[%s215 + $0x3f0] sm:$0xff] %v2292
        %2421 = vst [vmem:[%s215 + $0x3f8] sm:$0xff] %v2293
      $region48: #{classifier_forward.3} parent=35 // pred_fallthru
        _
      %s2422 = smul.u32 %s19, %s20
      %s2423 = smul.u32 128, %s2422
      %p2424 = scmp.lt.s32.totalorder %s2423, 255
      %s2425 = scalar_select %p2424, %s2423, 255
      %s2426 = smul.addr %s2425, 8
      %s2427 = scalar_lea.vmem %s4, %s2426
      // Predicated region
      $region49: #{classifier_forward.3} parent=35 // pred_check
        %p2428 = pneg %p136
      $region50: #{classifier_forward.3} parent=35 // pred_check_branch
        %2430 = sbr.rel (%p2428) target = $region52
      $region51: #{classifier_forward.3} parent=35 // pred_region
        %s2431 = smul.u32 %s19, %s20
        %s2432 = smul.u32 128, %s2431
      $region52: #{classifier_forward.3} parent=35 // pred_fallthru
        _
    $region36: #{classifier_forward.3} parent=5 // pred_fallthru
      _
    %p2433 = scmp.le.s32.totalorder 2, %s10
    // Predicated region
    $region53: #{classifier_forward.3} parent=5 // pred_check
      %p2434 = pneg %p2433
    $region54: #{classifier_forward.3} parent=5 // pred_check_branch
      %2436 = sbr.rel (%p2434) target = $region56
    $region55: #{classifier_forward.3} parent=5 // pred_region
      %s2437 = ssub.s32 %s10, 2
      // Predicated region
      $region57: #{classifier_forward.3} parent=55 // pred_check
        %p2438 = pneg %p142
      $region58: #{classifier_forward.3} parent=55 // pred_check_branch
        %2440 = sbr.rel (%p2438) target = $region60
      $region59: #{classifier_forward.3} parent=55 // pred_region
        %s2441 = smul.u32 %s21, %s22
        %s2442 = smul.u32 128, %s2441
        %p2443 = scmp.lt.s32.totalorder %s2442, 255
        %s2444 = scalar_select %p2443, %s2442, 255
        %s2445 = smul.addr %s2444, 8
        %s2446 = scalar_lea.vmem %s4, %s2445
      $region60: #{classifier_forward.3} parent=55 // pred_fallthru
        _
    $region56: #{classifier_forward.3} parent=5 // pred_fallthru
      _
  $region6: #{classifier_forward.3} parent=0 // loop_footer
    %s14 = sadd.s32 1, %s10
  $region7: #{classifier_forward.3} parent=0 // loop_footer_branch
    %9 = sbr.rel target = $region3
  $region8: #{classifier_forward.3} parent=0 // loop_exit
    _

// kernel: classifier_forward.4
$region0: #{classifier_forward.4}
  #allocation0 [shape = 'u32[]', space=smem, size = 0x4, offset = 0x4, fixed_abs, tag = 'smem constant byte address 0x4 - core index']
  #allocation1 [shape = 'u32[72,128]{1,0:T(1,128)}', space=vmem, size = 0x9000, scoped, tag = 'internal scratch']
  #allocation2 [shape = 'f32[2,128]{1,0:T(2,128)}', space=vmem, size = 0x400, scoped, tag = 'scratch operand']
  %s0 = inlined_call_operand.vmem [shape: bf16[400,256], index: 0, kind: input, shape index: {}]
  %s1 = inlined_call_operand.vmem [shape: bf16[256,128], index: 1, kind: input, shape index: {}]
  %s2 = inlined_call_operand.vmem [shape: f32[1,128], index: 2, kind: input, shape index: {}]
  %s3 = inlined_call_operand.vmem [shape: f32[1,128], index: 3, kind: input, shape index: {}]
  %s4 = inlined_call_operand.vmem [shape: f32[400,128], index: 4, kind: output, shape index: {}]
  %s5 = sld [smem:[#allocation0]]
  $region61: #{classifier_forward.4} parent=0
    _
  %s7 = ssub.s32 1, %s5
  %s8 = scalar_select 0, %s7, %s5
  loop: start=0, step=1, limit=4
  $region2: #{classifier_forward.4} parent=0 // loop_pre_header
    _
  $region3: #{classifier_forward.4} parent=0 // loop_header
    %s10 = sphi 0, %s14
    %p11 = scmp.ge.s32.totalorder %s10, 4
    %s17 = sphi 0, %s29
    %s18 = sphi 0, %s25
    %s19 = sphi 0, %s17
    %s20 = sphi 0, %s18
    %s21 = sphi 0, %s19
    %s22 = sphi 0, %s20
    %s32 = sphi 0, %s34
    %s35 = sphi 0, %s32
    %s36 = sphi 0, %s35
    %s52 = sphi 0, %s36
    %s56 = sphi 0, %s56
    %s58 = sphi 0, %s56
    %s59 = sphi 0, %s58
    %s73 = sphi 0, %s59
    %s77 = sphi 0, %s77
    %s79 = sphi 0, %s77
    %s80 = sphi 0, %s79
    %s94 = sphi 0, %s80
    %s98 = sphi 0, %s98
    %s100 = sphi 0, %s98
    %s101 = sphi 0, %s100
    %s115 = sphi 0, %s101
    %s123 = sphi 0, %s125
    %s126 = sphi 0, %s123
    %s127 = sphi 0, %s126
    %s143 = sphi 0, %s127
  $region4: #{classifier_forward.4} parent=0 // loop_header_branch
    %13 = sbr.rel (%p11) target = $region8
  $region5: #{classifier_forward.4} parent=0 // loop_body
    %s15 = ssub.s32 %s10, 1
    %s16 = ssub.s32 %s10, 2
    %s23 = sadd.s32 1, %s18
    %p24 = scmp.ge.s32.totalorder %s23, 1
    %s25 = scalar_select %p24, 0, %s23
    %s26 = sadd.s32 1, %s17
    %s27 = scalar_select %p24, %s26, %s17
    %p28 = scmp.ge.s32.totalorder %s27, 2
    %s29 = scalar_select %p28, 0, %s27
    %s30 = ssub.s32 %s18, %s25
    %p31 = scmp.eq.s32.totalorder %s30, 0
    %s33 = sadd.s32 %s32, 1
    %s34 = scalar_select %p31, %s32, %s33
    %p37 = pneg %p31
    %p38 = scmp.eq.s32.totalorder %s10, 1
    %p39 = por %p37, %p38
    %p40 = scmp.ne.s32.totalorder %s32, %s35
    %p41 = scmp.eq.s32.totalorder %s10, 0
    %p42 = por %p40, %p41
    %p43 = scmp.ne.s32.totalorder %s32, %s35
    %p44 = scmp.eq.s32.totalorder %s15, 1
    %p45 = por %p43, %p44
    %p46 = scmp.ne.s32.totalorder %s35, %s36
    %p47 = scmp.eq.s32.totalorder %s15, 0
    %p48 = por %p46, %p47
    %p49 = scmp.ne.s32.totalorder %s35, %s36
    %p50 = scmp.eq.s32.totalorder %s16, 1
    %p51 = por %p49, %p50
    %p53 = scmp.ne.s32.totalorder %s36, %s52
    %p54 = scmp.eq.s32.totalorder %s16, 0
    %p55 = por %p53, %p54
    %s57 = sadd.s32 %s56, 1
    %p60 = scmp.eq.s32.totalorder %s10, 1
    %p61 = scmp.ne.s32.totalorder %s56, %s58
    %p62 = scmp.eq.s32.totalorder %s10, 0
    %p63 = por %p61, %p62
    %p64 = scmp.ne.s32.totalorder %s56, %s58
    %p65 = scmp.eq.s32.totalorder %s15, 1
    %p66 = por %p64, %p65
    %p67 = scmp.ne.s32.totalorder %s58, %s59
    %p68 = scmp.eq.s32.totalorder %s15, 0
    %p69 = por %p67, %p68
    %p70 = scmp.ne.s32.totalorder %s58, %s59
    %p71 = scmp.eq.s32.totalorder %s16, 1
    %p72 = por %p70, %p71
    %p74 = scmp.ne.s32.totalorder %s59, %s73
    %p75 = scmp.eq.s32.totalorder %s16, 0
    %p76 = por %p74, %p75
    %s78 = sadd.s32 %s77, 1
    %p81 = scmp.eq.s32.totalorder %s10, 1
    %p82 = scmp.ne.s32.totalorder %s77, %s79
    %p83 = scmp.eq.s32.totalorder %s10, 0
    %p84 = por %p82, %p83
    %p85 = scmp.ne.s32.totalorder %s77, %s79
    %p86 = scmp.eq.s32.totalorder %s15, 1
    %p87 = por %p85, %p86
    %p88 = scmp.ne.s32.totalorder %s79, %s80
    %p89 = scmp.eq.s32.totalorder %s15, 0
    %p90 = por %p88, %p89
    %p91 = scmp.ne.s32.totalorder %s79, %s80
    %p92 = scmp.eq.s32.totalorder %s16, 1
    %p93 = por %p91, %p92
    %p95 = scmp.ne.s32.totalorder %s80, %s94
    %p96 = scmp.eq.s32.totalorder %s16, 0
    %p97 = por %p95, %p96
    %s99 = sadd.s32 %s98, 1
    %p102 = scmp.eq.s32.totalorder %s10, 1
    %p103 = scmp.ne.s32.totalorder %s98, %s100
    %p104 = scmp.eq.s32.totalorder %s10, 0
    %p105 = por %p103, %p104
    %p106 = scmp.ne.s32.totalorder %s98, %s100
    %p107 = scmp.eq.s32.totalorder %s15, 1
    %p108 = por %p106, %p107
    %p109 = scmp.ne.s32.totalorder %s100, %s101
    %p110 = scmp.eq.s32.totalorder %s15, 0
    %p111 = por %p109, %p110
    %p112 = scmp.ne.s32.totalorder %s100, %s101
    %p113 = scmp.eq.s32.totalorder %s16, 1
    %p114 = por %p112, %p113
    %p116 = scmp.ne.s32.totalorder %s101, %s115
    %p117 = scmp.eq.s32.totalorder %s16, 0
    %p118 = por %p116, %p117
    %s119 = smul.u32 %s17, %s18
    %s120 = smul.u32 %s29, %s25
    %s121 = ssub.s32 %s119, %s120
    %p122 = scmp.eq.s32.totalorder %s121, 0
    %s124 = sadd.s32 %s123, 1
    %s125 = scalar_select %p122, %s123, %s124
    %p128 = pneg %p122
    %p129 = scmp.eq.s32.totalorder %s10, 1
    %p130 = por %p128, %p129
    %p131 = scmp.ne.s32.totalorder %s123, %s126
    %p132 = scmp.eq.s32.totalorder %s10, 0
    %p133 = por %p131, %p132
    %p134 = scmp.ne.s32.totalorder %s123, %s126
    %p135 = scmp.eq.s32.totalorder %s15, 1
    %p136 = por %p134, %p135
    %p137 = scmp.ne.s32.totalorder %s126, %s127
    %p138 = scmp.eq.s32.totalorder %s15, 0
    %p139 = por %p137, %p138
    %p140 = scmp.ne.s32.totalorder %s126, %s127
    %p141 = scmp.eq.s32.totalorder %s16, 1
    %p142 = por %p140, %p141
    %p144 = scmp.ne.s32.totalorder %s127, %s143
    %p145 = scmp.eq.s32.totalorder %s16, 0
    %p146 = por %p144, %p145
    %p147 = scmp.le.s32.totalorder 1, %s10
    %p148 = scmp.lt.s32.totalorder %s10, 3
    %p149 = pnand %p147, %p148
    %p150 = pneg %p149
    // Predicated region
    $region9: #{classifier_forward.4} parent=5 // pred_check
      _
    $region10: #{classifier_forward.4} parent=5 // pred_check_branch
      %152 = sbr.rel (%p149) target = $region12
    $region11: #{classifier_forward.4} parent=5 // pred_region
      %s153 = ssub.s32 %s10, 1
      // Predicated region
      $region13: #{classifier_forward.4} parent=11 // pred_check
        %p154 = pneg %p48
      $region14: #{classifier_forward.4} parent=11 // pred_check_branch
        %156 = sbr.rel (%p154) target = $region16
      $region15: #{classifier_forward.4} parent=11 // pred_region
        %s157 = smul.u32 50, %s20
        %p158 = scmp.lt.s32.totalorder %s157, 49
        %s159 = scalar_select %p158, %s157, 49
        %s160 = smul.addr %s159, 2
        %s161 = smul.addr %s160, 4
        %s162 = scalar_lea.vmem %s0, %s161
        %s163 = smul.u32 50, %s20
      $region16: #{classifier_forward.4} parent=11 // pred_fallthru
        _
      // Predicated region
      $region17: #{classifier_forward.4} parent=11 // pred_check
        %p164 = pneg %p69
      $region18: #{classifier_forward.4} parent=11 // pred_check_branch
        %166 = sbr.rel (%p164) target = $region20
      $region19: #{classifier_forward.4} parent=11 // pred_region
        _
      $region20: #{classifier_forward.4} parent=11 // pred_fallthru
        _
      // Predicated region
      $region21: #{classifier_forward.4} parent=11 // pred_check
        %p167 = pneg %p90
      $region22: #{classifier_forward.4} parent=11 // pred_check_branch
        %169 = sbr.rel (%p167) target = $region24
      $region23: #{classifier_forward.4} parent=11 // pred_region
        _
      $region24: #{classifier_forward.4} parent=11 // pred_fallthru
        _
      // Predicated region
      $region25: #{classifier_forward.4} parent=11 // pred_check
        %p170 = pneg %p111
      $region26: #{classifier_forward.4} parent=11 // pred_check_branch
        %172 = sbr.rel (%p170) target = $region28
      $region27: #{classifier_forward.4} parent=11 // pred_region
        _
      $region28: #{classifier_forward.4} parent=11 // pred_fallthru
        _
    $region12: #{classifier_forward.4} parent=5 // pred_fallthru
      _
    %p173 = scmp.lt.s32.totalorder %s10, 2
    // Predicated region
    $region29: #{classifier_forward.4} parent=5 // pred_check
      %p174 = pneg %p173
    $region30: #{classifier_forward.4} parent=5 // pred_check_branch
      %176 = sbr.rel (%p174) target = $region32
    $region31: #{classifier_forward.4} parent=5 // pred_region
      _
    $region32: #{classifier_forward.4} parent=5 // pred_fallthru
      _
    %p177 = scmp.le.s32.totalorder 1, %s10
    %p178 = scmp.lt.s32.totalorder %s10, 3
    %p179 = pnand %p177, %p178
    %p180 = pneg %p179
    // Predicated region
    $region33: #{classifier_forward.4} parent=5 // pred_check
      _
    $region34: #{classifier_forward.4} parent=5 // pred_check_branch
      %182 = sbr.rel (%p179) target = $region36
    $region35: #{classifier_forward.4} parent=5 // pred_region
      %s183 = ssub.s32 %s10, 1
      %s184 = smul.u32 50, %s20
      %p185 = scmp.lt.s32.totalorder %s184, 49
      %s186 = scalar_select %p185, %s184, 49
      %s187 = smul.addr %s186, 2
      %s188 = smul.addr %s187, 4
      %s189 = scalar_lea.vmem %s0, %s188
      %p190 = pneg %p48
      %p191 = pneg %p45
      %p192 = pneg %p69
      %p193 = pneg %p66
      %p194 = pneg %p90
      %p195 = pneg %p87
      %p196 = pneg %p111
      %p197 = pneg %p108
      %p198 = pneg %p139
      %p199 = pneg %p136
      %s200 = smul.u32 %s19, %s20
      %s201 = smul.u32 50, %s200
      %p202 = scmp.lt.s32.totalorder %s201, 49
      %s203 = scalar_select %p202, %s201, 49
      %s204 = smul.addr %s203, 8
      %s205 = scalar_lea.vmem %s4, %s204
      %s206 = smul.u32 50, %s20
      %p207 = scmp.lt.s32.totalorder %s206, 49
      %s208 = scalar_select %p207, %s206, 49
      %s209 = smul.addr %s208, 2
      %s210 = smul.addr %s209, 4
      %s211 = scalar_lea.vmem %s0, %s210
      %s212 = smul.u32 50, %s20
      %s213 = smul.u32 %s19, %s20
      %s214 = smul.u32 50, %s213
      %p215 = scmp.lt.s32.totalorder %s214, 49
      %s216 = scalar_select %p215, %s214, 49
      %s217 = smul.addr %s216, 8
      %s218 = scalar_lea.vmem %s4, %s217
      %s219 = smul.u32 %s19, %s20
      %s220 = smul.u32 50, %s219
      %v221 = vld [vmem:[%s211] sm:$0xff]
      %v222 = vld [vmem:[%s211 + $0x8] sm:$0xff]
      %v223 = vld [vmem:[%s211 + $0x10] sm:$0xff]
      %v224 = vld [vmem:[%s211 + $0x18] sm:$0xff]
      %v225 = vld [vmem:[%s211 + $0x20] sm:$0xff]
      %v226 = vld [vmem:[%s211 + $0x28] sm:$0xff]
      %v227 = vld [vmem:[%s211 + $0x30] sm:$0xff]
      %v228 = vld [vmem:[%s211 + $0x38] sm:$0xff]
      %v229 = vld [vmem:[%s211 + $0x40] sm:$0xff]
      %v230 = vld [vmem:[%s211 + $0x48] sm:$0xff]
      %v231 = vld [vmem:[%s211 + $0x50] sm:$0xff]
      %v232 = vld [vmem:[%s211 + $0x58] sm:$0xff]
      %v233 = vld [vmem:[%s211 + $0x60] sm:$0xff]
      %v234 = vld [vmem:[%s211 + $0x68] sm:$0xff]
      %v235 = vld [vmem:[%s211 + $0x70] sm:$0xff]
      %v236 = vld [vmem:[%s211 + $0x78] sm:$0xff]
      %v237 = vld [vmem:[%s211 + $0x80] sm:$0xff]
      %v238 = vld [vmem:[%s211 + $0x88] sm:$0xff]
      %v239 = vld [vmem:[%s211 + $0x90] sm:$0xff]
      %v240 = vld [vmem:[%s211 + $0x98] sm:$0xff]
      %v241 = vld [vmem:[%s211 + $0xa0] sm:$0xff]
      %v242 = vld [vmem:[%s211 + $0xa8] sm:$0xff]
      %v243 = vld [vmem:[%s211 + $0xb0] sm:$0xff]
      %v244 = vld [vmem:[%s211 + $0xb8] sm:$0xff]
      %v245 = vld [vmem:[%s211 + $0xc0] sm:$0xff]
      %v246 = vld [vmem:[%s211 + $0xc8] sm:$0xff]
      %v247 = vld [vmem:[%s211 + $0xd0] sm:$0xff]
      %v248 = vld [vmem:[%s211 + $0xd8] sm:$0xff]
      %v249 = vld [vmem:[%s211 + $0xe0] sm:$0xff]
      %v250 = vld [vmem:[%s211 + $0xe8] sm:$0xff]
      %v251 = vld [vmem:[%s211 + $0xf0] sm:$0xff]
      %v252 = vld [vmem:[%s211 + $0xf8] sm:$0xff]
      %v253 = vld [vmem:[%s211 + $0x100] sm:$0xff]
      %v254 = vld [vmem:[%s211 + $0x108] sm:$0xff]
      %v255 = vld [vmem:[%s211 + $0x110] sm:$0xff]
      %v256 = vld [vmem:[%s211 + $0x118] sm:$0xff]
      %v257 = vld [vmem:[%s211 + $0x120] sm:$0xff]
      %v258 = vld [vmem:[%s211 + $0x128] sm:$0xff]
      %v259 = vld [vmem:[%s211 + $0x130] sm:$0xff]
      %v260 = vld [vmem:[%s211 + $0x138] sm:$0xff]
      %v261 = vld [vmem:[%s211 + $0x140] sm:$0xff]
      %v262 = vld [vmem:[%s211 + $0x148] sm:$0xff]
      %v263 = vld [vmem:[%s211 + $0x150] sm:$0xff]
      %v264 = vld [vmem:[%s211 + $0x158] sm:$0xff]
      %v265 = vld [vmem:[%s211 + $0x160] sm:$0xff]
      %v266 = vld [vmem:[%s211 + $0x168] sm:$0xff]
      %v267 = vld [vmem:[%s211 + $0x170] sm:$0xff]
      %v268 = vld [vmem:[%s211 + $0x178] sm:$0xff]
      %v269 = vld [vmem:[%s211 + $0x180] sm:$0xff]
      %v270 = vld [vmem:[%s211 + $0x188] sm:$0xff]
      %v271 = vld [vmem:[%s1] sm:$0xf]
      %v272 = vld [vmem:[%s1 + $0x4] sm:$0xf]
      %v273 = vld [vmem:[%s1 + $0x8] sm:$0xf]
      %v274 = vld [vmem:[%s1 + $0xc] sm:$0xf]
      %v275 = vld [vmem:[%s1 + $0x10] sm:$0xf]
      %v276 = vld [vmem:[%s1 + $0x14] sm:$0xf]
      %v277 = vld [vmem:[%s1 + $0x18] sm:$0xf]
      %v278 = vld [vmem:[%s1 + $0x1c] sm:$0xf]
      %v279 = vld [vmem:[%s1 + $0x20] sm:$0xf]
      %v280 = vld [vmem:[%s1 + $0x24] sm:$0xf]
      %v281 = vld [vmem:[%s1 + $0x28] sm:$0xf]
      %v282 = vld [vmem:[%s1 + $0x2c] sm:$0xf]
      %v283 = vld [vmem:[%s1 + $0x30] sm:$0xf]
      %v284 = vld [vmem:[%s1 + $0x34] sm:$0xf]
      %v285 = vld [vmem:[%s1 + $0x38] sm:$0xf]
      %v286 = vld [vmem:[%s1 + $0x3c] sm:$0xf]
      %v287 = vld [vmem:[%s1 + $0x40] sm:$0xf]
      %v288 = vld [vmem:[%s1 + $0x44] sm:$0xf]
      %v289 = vld [vmem:[%s1 + $0x48] sm:$0xf]
      %v290 = vld [vmem:[%s1 + $0x4c] sm:$0xf]
      %v291 = vld [vmem:[%s1 + $0x50] sm:$0xf]
      %v292 = vld [vmem:[%s1 + $0x54] sm:$0xf]
      %v293 = vld [vmem:[%s1 + $0x58] sm:$0xf]
      %v294 = vld [vmem:[%s1 + $0x5c] sm:$0xf]
      %v295 = vld [vmem:[%s1 + $0x60] sm:$0xf]
      %v296 = vld [vmem:[%s1 + $0x64] sm:$0xf]
      %v297 = vld [vmem:[%s1 + $0x68] sm:$0xf]
      %v298 = vld [vmem:[%s1 + $0x6c] sm:$0xf]
      %v299 = vld [vmem:[%s1 + $0x70] sm:$0xf]
      %v300 = vld [vmem:[%s1 + $0x74] sm:$0xf]
      %v301 = vld [vmem:[%s1 + $0x78] sm:$0xf]
      %v302 = vld [vmem:[%s1 + $0x7c] sm:$0xf]
      %v353 = vunpack.c.l.b16 %v221
      %v354 = vunpack.c.h.b16 %v221
      %v355 = vunpack.c.l.b16 %v222
      %v356 = vunpack.c.h.b16 %v222
      %v357 = vunpack.c.l.b16 %v223
      %v358 = vunpack.c.h.b16 %v223
      %v359 = vunpack.c.l.b16 %v224
      %v360 = vunpack.c.h.b16 %v224
      %v361 = vunpack.c.l.b16 %v225
      %v362 = vunpack.c.h.b16 %v225
      %v363 = vunpack.c.l.b16 %v226
      %v364 = vunpack.c.h.b16 %v226
      %v365 = vunpack.c.l.b16 %v227
      %v366 = vunpack.c.h.b16 %v227
      %v367 = vunpack.c.l.b16 %v228
      %v368 = vunpack.c.h.b16 %v228
      %v369 = vunpack.c.l.b16 %v229
      %v370 = vunpack.c.h.b16 %v229
      %v371 = vunpack.c.l.b16 %v230
      %v372 = vunpack.c.h.b16 %v230
      %v373 = vunpack.c.l.b16 %v231
      %v374 = vunpack.c.h.b16 %v231
      %v375 = vunpack.c.l.b16 %v232
      %v376 = vunpack.c.h.b16 %v232
      %v377 = vunpack.c.l.b16 %v233
      %v378 = vunpack.c.h.b16 %v233
      %v379 = vunpack.c.l.b16 %v234
      %v380 = vunpack.c.h.b16 %v234
      %v381 = vunpack.c.l.b16 %v235
      %v382 = vunpack.c.h.b16 %v235
      %v383 = vunpack.c.l.b16 %v236
      %v384 = vunpack.c.h.b16 %v236
      %v385 = vunpack.c.l.b16 %v237
      %v386 = vunpack.c.h.b16 %v237
      %v387 = vunpack.c.l.b16 %v238
      %v388 = vunpack.c.h.b16 %v238
      %v389 = vunpack.c.l.b16 %v239
      %v390 = vunpack.c.h.b16 %v239
      %v391 = vunpack.c.l.b16 %v240
      %v392 = vunpack.c.h.b16 %v240
      %v393 = vunpack.c.l.b16 %v241
      %v394 = vunpack.c.h.b16 %v241
      %v395 = vunpack.c.l.b16 %v242
      %v396 = vunpack.c.h.b16 %v242
      %v397 = vunpack.c.l.b16 %v243
      %v398 = vunpack.c.h.b16 %v243
      %v399 = vunpack.c.l.b16 %v244
      %v400 = vunpack.c.h.b16 %v244
      %v401 = vunpack.c.l.b16 %v245
      %v402 = vunpack.c.h.b16 %v245
      %v403 = vunpack.c.l.b16 %v246
      %v404 = vunpack.c.h.b16 %v246
      %v405 = vunpack.c.l.b16 %v247
      %v406 = vunpack.c.h.b16 %v247
      %v407 = vunpack.c.l.b16 %v248
      %v408 = vunpack.c.h.b16 %v248
      %v409 = vunpack.c.l.b16 %v249
      %v410 = vunpack.c.h.b16 %v249
      %v411 = vunpack.c.l.b16 %v250
      %v412 = vunpack.c.h.b16 %v250
      %v413 = vunpack.c.l.b16 %v251
      %v414 = vunpack.c.h.b16 %v251
      %v415 = vunpack.c.l.b16 %v252
      %v416 = vunpack.c.h.b16 %v252
      %v417 = vunpack.c.l.b16 %v253
      %v418 = vunpack.c.h.b16 %v253
      %v419 = vunpack.c.l.b16 %v254
      %v420 = vunpack.c.h.b16 %v254
      %v421 = vunpack.c.l.b16 %v255
      %v422 = vunpack.c.h.b16 %v255
      %v423 = vunpack.c.l.b16 %v256
      %v424 = vunpack.c.h.b16 %v256
      %v425 = vunpack.c.l.b16 %v257
      %v426 = vunpack.c.h.b16 %v257
      %v427 = vunpack.c.l.b16 %v258
      %v428 = vunpack.c.h.b16 %v258
      %v429 = vunpack.c.l.b16 %v259
      %v430 = vunpack.c.h.b16 %v259
      %v431 = vunpack.c.l.b16 %v260
      %v432 = vunpack.c.h.b16 %v260
      %v433 = vunpack.c.l.b16 %v261
      %v434 = vunpack.c.h.b16 %v261
      %v435 = vunpack.c.l.b16 %v262
      %v436 = vunpack.c.h.b16 %v262
      %v437 = vunpack.c.l.b16 %v263
      %v438 = vunpack.c.h.b16 %v263
      %v439 = vunpack.c.l.b16 %v264
      %v440 = vunpack.c.h.b16 %v264
      %v441 = vunpack.c.l.b16 %v265
      %v442 = vunpack.c.h.b16 %v265
      %v443 = vunpack.c.l.b16 %v266
      %v444 = vunpack.c.h.b16 %v266
      %v445 = vunpack.c.l.b16 %v267
      %v446 = vunpack.c.h.b16 %v267
      %v447 = vunpack.c.l.b16 %v268
      %v448 = vunpack.c.h.b16 %v268
      %v449 = vunpack.c.l.b16 %v269
      %v450 = vunpack.c.h.b16 %v269
      %v451 = vunpack.c.l.b16 %v270
      %v452 = vunpack.c.h.b16 %v270
      %v453 = vpack.c.b16 %v355, %v353
      %v454 = vpack.c.b16 %v356, %v354
      %v455 = vpack.c.b16 %v359, %v357
      %v456 = vpack.c.b16 %v360, %v358
      %v457 = vpack.c.b16 %v363, %v361
      %v458 = vpack.c.b16 %v364, %v362
      %v459 = vpack.c.b16 %v367, %v365
      %v460 = vpack.c.b16 %v368, %v366
      %v461 = vpack.c.b16 %v371, %v369
      %v462 = vpack.c.b16 %v372, %v370
      %v463 = vpack.c.b16 %v375, %v373
      %v464 = vpack.c.b16 %v376, %v374
      %v465 = vpack.c.b16 %v379, %v377
      %v466 = vpack.c.b16 %v380, %v378
      %v467 = vpack.c.b16 %v383, %v381
      %v468 = vpack.c.b16 %v384, %v382
      %v469 = vpack.c.b16 %v387, %v385
      %v470 = vpack.c.b16 %v388, %v386
      %v471 = vpack.c.b16 %v391, %v389
      %v472 = vpack.c.b16 %v392, %v390
      %v473 = vpack.c.b16 %v395, %v393
      %v474 = vpack.c.b16 %v396, %v394
      %v475 = vpack.c.b16 %v399, %v397
      %v476 = vpack.c.b16 %v400, %v398
      %v477 = vpack.c.b16 %v403, %v401
      %v478 = vpack.c.b16 %v404, %v402
      %v479 = vpack.c.b16 %v407, %v405
      %v480 = vpack.c.b16 %v408, %v406
      %v481 = vpack.c.b16 %v411, %v409
      %v482 = vpack.c.b16 %v412, %v410
      %v483 = vpack.c.b16 %v415, %v413
      %v484 = vpack.c.b16 %v416, %v414
      %v485 = vpack.c.b16 %v419, %v417
      %v486 = vpack.c.b16 %v420, %v418
      %v487 = vpack.c.b16 %v423, %v421
      %v488 = vpack.c.b16 %v424, %v422
      %v489 = vpack.c.b16 %v427, %v425
      %v490 = vpack.c.b16 %v428, %v426
      %v491 = vpack.c.b16 %v431, %v429
      %v492 = vpack.c.b16 %v432, %v430
      %v493 = vpack.c.b16 %v435, %v433
      %v494 = vpack.c.b16 %v436, %v434
      %v495 = vpack.c.b16 %v439, %v437
      %v496 = vpack.c.b16 %v440, %v438
      %v497 = vpack.c.b16 %v443, %v441
      %v498 = vpack.c.b16 %v444, %v442
      %v499 = vpack.c.b16 %v447, %v445
      %v500 = vpack.c.b16 %v448, %v446
      %v501 = vpack.c.b16 %v451, %v449
      %v502 = vpack.c.b16 %v452, %v450
      %v585 = vunpack.c.l.b16 %v271
      %v586 = vunpack.c.l.b16 %v272
      %v587 = vunpack.c.l.b16 %v273
      %v588 = vunpack.c.l.b16 %v274
      %v589 = vunpack.c.l.b16 %v275
      %v590 = vunpack.c.l.b16 %v276
      %v591 = vunpack.c.l.b16 %v277
      %v592 = vunpack.c.l.b16 %v278
      %v593 = vunpack.c.l.b16 %v279
      %v594 = vunpack.c.l.b16 %v280
      %v595 = vunpack.c.l.b16 %v281
      %v596 = vunpack.c.l.b16 %v282
      %v597 = vunpack.c.l.b16 %v283
      %v598 = vunpack.c.l.b16 %v284
      %v599 = vunpack.c.l.b16 %v285
      %v600 = vunpack.c.l.b16 %v286
      %v601 = vunpack.c.l.b16 %v287
      %v602 = vunpack.c.l.b16 %v288
      %v603 = vunpack.c.l.b16 %v289
      %v604 = vunpack.c.l.b16 %v290
      %v605 = vunpack.c.l.b16 %v291
      %v606 = vunpack.c.l.b16 %v292
      %v607 = vunpack.c.l.b16 %v293
      %v608 = vunpack.c.l.b16 %v294
      %v609 = vunpack.c.l.b16 %v295
      %v610 = vunpack.c.l.b16 %v296
      %v611 = vunpack.c.l.b16 %v297
      %v612 = vunpack.c.l.b16 %v298
      %v613 = vunpack.c.l.b16 %v299
      %v614 = vunpack.c.l.b16 %v300
      %v615 = vunpack.c.l.b16 %v301
      %v616 = vunpack.c.l.b16 %v302
      %v617 = vpack.c.b16 %v586, %v585
      %v618 = vpack.c.b16 %v588, %v587
      %v619 = vpack.c.b16 %v590, %v589
      %v620 = vpack.c.b16 %v592, %v591
      %v621 = vpack.c.b16 %v594, %v593
      %v622 = vpack.c.b16 %v596, %v595
      %v623 = vpack.c.b16 %v598, %v597
      %v624 = vpack.c.b16 %v600, %v599
      %v625 = vpack.c.b16 %v602, %v601
      %v626 = vpack.c.b16 %v604, %v603
      %v627 = vpack.c.b16 %v606, %v605
      %v628 = vpack.c.b16 %v608, %v607
      %v629 = vpack.c.b16 %v610, %v609
      %v630 = vpack.c.b16 %v612, %v611
      %v631 = vpack.c.b16 %v614, %v613
      %v632 = vpack.c.b16 %v616, %v615
      %649 = vmatpush.bf16.msra.mxu0 %v624
      %650 = vmatpush.bf16.msra.mxu0 %v623
      %651 = vmatpush.bf16.msra.mxu0 %v622
      %652 = vmatpush.bf16.msra.mxu0 %v621
      %653 = vmatpush.bf16.msra.mxu0 %v620
      %654 = vmatpush.bf16.msra.mxu0 %v619
      %655 = vmatpush.bf16.msra.mxu0 %v618
      %656 = vmatpush.bf16.msra.mxu0 %v617
      %657 = vmatmul.bf16.gmra.mxu0 %v453
      %v658 = vpop.f32.mrf.mxu0
      %v659 = vadd.f32 0.0, %v658
      %v660 = vpop.f32.mrf.mxu0
      %v661 = vadd.f32 0.0, %v660
      %662 = vmatmul.bf16.gmra.mxu0 %v455
      %v663 = vpop.f32.mrf.mxu0
      %v664 = vadd.f32 0.0, %v663
      %v665 = vpop.f32.mrf.mxu0
      %v666 = vadd.f32 0.0, %v665
      %667 = vmatmul.bf16.gmra.mxu0 %v457
      %v668 = vpop.f32.mrf.mxu0
      %v669 = vadd.f32 0.0, %v668
      %v670 = vpop.f32.mrf.mxu0
      %v671 = vadd.f32 0.0, %v670
      %672 = vmatmul.bf16.gmra.mxu0 %v459
      %v673 = vpop.f32.mrf.mxu0
      %v674 = vadd.f32 0.0, %v673
      %v675 = vpop.f32.mrf.mxu0
      %v676 = vadd.f32 0.0, %v675
      %677 = vmatmul.bf16.gmra.mxu0 %v461
      %v678 = vpop.f32.mrf.mxu0
      %v679 = vadd.f32 0.0, %v678
      %v680 = vpop.f32.mrf.mxu0
      %v681 = vadd.f32 0.0, %v680
      %682 = vmatmul.bf16.gmra.mxu0 %v463
      %v683 = vpop.f32.mrf.mxu0
      %v684 = vadd.f32 0.0, %v683
      %v685 = vpop.f32.mrf.mxu0
      %v686 = vadd.f32 0.0, %v685
      %687 = vmatmul.bf16.gmra.mxu0 %v465
      %v688 = vpop.f32.mrf.mxu0
      %v689 = vadd.f32 0.0, %v688
      %v690 = vpop.f32.mrf.mxu0
      %v691 = vadd.f32 0.0, %v690
      %692 = vmatmul.bf16.gmra.mxu0 %v467
      %v693 = vpop.f32.mrf.mxu0
      %v694 = vadd.f32 0.0, %v693
      %v695 = vpop.f32.mrf.mxu0
      %v696 = vadd.f32 0.0, %v695
      %697 = vmatmul.bf16.gmra.mxu0 %v469
      %v698 = vpop.f32.mrf.mxu0
      %v699 = vadd.f32 0.0, %v698
      %v700 = vpop.f32.mrf.mxu0
      %v701 = vadd.f32 0.0, %v700
      %702 = vmatmul.bf16.gmra.mxu0 %v471
      %v703 = vpop.f32.mrf.mxu0
      %v704 = vadd.f32 0.0, %v703
      %v705 = vpop.f32.mrf.mxu0
      %v706 = vadd.f32 0.0, %v705
      %707 = vmatmul.bf16.gmra.mxu0 %v473
      %v708 = vpop.f32.mrf.mxu0
      %v709 = vadd.f32 0.0, %v708
      %v710 = vpop.f32.mrf.mxu0
      %v711 = vadd.f32 0.0, %v710
      %712 = vmatmul.bf16.gmra.mxu0 %v475
      %v713 = vpop.f32.mrf.mxu0
      %v714 = vadd.f32 0.0, %v713
      %v715 = vpop.f32.mrf.mxu0
      %v716 = vadd.f32 0.0, %v715
      %717 = vmatmul.bf16.gmra.mxu0 %v477
      %v718 = vpop.f32.mrf.mxu0
      %v719 = vadd.f32 0.0, %v718
      %v720 = vpop.f32.mrf.mxu0
      %v721 = vadd.f32 0.0, %v720
      %722 = vmatmul.bf16.gmra.mxu0 %v479
      %v723 = vpop.f32.mrf.mxu0
      %v724 = vadd.f32 0.0, %v723
      %v725 = vpop.f32.mrf.mxu0
      %v726 = vadd.f32 0.0, %v725
      %727 = vmatmul.bf16.gmra.mxu0 %v481
      %v728 = vpop.f32.mrf.mxu0
      %v729 = vadd.f32 0.0, %v728
      %v730 = vpop.f32.mrf.mxu0
      %v731 = vadd.f32 0.0, %v730
      %732 = vmatmul.bf16.gmra.mxu0 %v483
      %v733 = vpop.f32.mrf.mxu0
      %v734 = vadd.f32 0.0, %v733
      %v735 = vpop.f32.mrf.mxu0
      %v736 = vadd.f32 0.0, %v735
      %737 = vmatmul.bf16.gmra.mxu0 %v485
      %v738 = vpop.f32.mrf.mxu0
      %v739 = vadd.f32 0.0, %v738
      %v740 = vpop.f32.mrf.mxu0
      %v741 = vadd.f32 0.0, %v740
      %742 = vmatmul.bf16.gmra.mxu0 %v487
      %v743 = vpop.f32.mrf.mxu0
      %v744 = vadd.f32 0.0, %v743
      %v745 = vpop.f32.mrf.mxu0
      %v746 = vadd.f32 0.0, %v745
      %747 = vmatmul.bf16.gmra.mxu0 %v489
      %v748 = vpop.f32.mrf.mxu0
      %v749 = vadd.f32 0.0, %v748
      %v750 = vpop.f32.mrf.mxu0
      %v751 = vadd.f32 0.0, %v750
      %752 = vmatmul.bf16.gmra.mxu0 %v491
      %v753 = vpop.f32.mrf.mxu0
      %v754 = vadd.f32 0.0, %v753
      %v755 = vpop.f32.mrf.mxu0
      %v756 = vadd.f32 0.0, %v755
      %757 = vmatmul.bf16.gmra.mxu0 %v493
      %v758 = vpop.f32.mrf.mxu0
      %v759 = vadd.f32 0.0, %v758
      %v760 = vpop.f32.mrf.mxu0
      %v761 = vadd.f32 0.0, %v760
      %762 = vmatmul.bf16.gmra.mxu0 %v495
      %v763 = vpop.f32.mrf.mxu0
      %v764 = vadd.f32 0.0, %v763
      %v765 = vpop.f32.mrf.mxu0
      %v766 = vadd.f32 0.0, %v765
      %767 = vmatmul.bf16.gmra.mxu0 %v497
      %v768 = vpop.f32.mrf.mxu0
      %v769 = vadd.f32 0.0, %v768
      %v770 = vpop.f32.mrf.mxu0
      %v771 = vadd.f32 0.0, %v770
      %772 = vmatmul.bf16.gmra.mxu0 %v499
      %v773 = vpop.f32.mrf.mxu0
      %v774 = vadd.f32 0.0, %v773
      %v775 = vpop.f32.mrf.mxu0
      %v776 = vadd.f32 0.0, %v775
      %777 = vmatmul.bf16.gmra.mxu0 %v501
      %v778 = vpop.f32.mrf.mxu0
      %v779 = vadd.f32 0.0, %v778
      %v780 = vpop.f32.mrf.mxu0
      %v781 = vadd.f32 0.0, %v780
      %782 = vdwg.mxu0
      %783 = vmatpush.bf16.msra.mxu0 %v632
      %784 = vmatpush.bf16.msra.mxu0 %v631
      %785 = vmatpush.bf16.msra.mxu0 %v630
      %786 = vmatpush.bf16.msra.mxu0 %v629
      %787 = vmatpush.bf16.msra.mxu0 %v628
      %788 = vmatpush.bf16.msra.mxu0 %v627
      %789 = vmatpush.bf16.msra.mxu0 %v626
      %790 = vmatpush.bf16.msra.mxu0 %v625
      %791 = vmatmul.bf16.gmra.mxu0 %v454
      %v792 = vpop.f32.mrf.mxu0
      %v793 = vadd.f32 %v659, %v792
      %v794 = vpop.f32.mrf.mxu0
      %v795 = vadd.f32 %v661, %v794
      %796 = vmatmul.bf16.gmra.mxu0 %v456
      %v797 = vpop.f32.mrf.mxu0
      %v798 = vadd.f32 %v664, %v797
      %v799 = vpop.f32.mrf.mxu0
      %v800 = vadd.f32 %v666, %v799
      %801 = vmatmul.bf16.gmra.mxu0 %v458
      %v802 = vpop.f32.mrf.mxu0
      %v803 = vadd.f32 %v669, %v802
      %v804 = vpop.f32.mrf.mxu0
      %v805 = vadd.f32 %v671, %v804
      %806 = vmatmul.bf16.gmra.mxu0 %v460
      %v807 = vpop.f32.mrf.mxu0
      %v808 = vadd.f32 %v674, %v807
      %v809 = vpop.f32.mrf.mxu0
      %v810 = vadd.f32 %v676, %v809
      %811 = vmatmul.bf16.gmra.mxu0 %v462
      %v812 = vpop.f32.mrf.mxu0
      %v813 = vadd.f32 %v679, %v812
      %v814 = vpop.f32.mrf.mxu0
      %v815 = vadd.f32 %v681, %v814
      %816 = vmatmul.bf16.gmra.mxu0 %v464
      %v817 = vpop.f32.mrf.mxu0
      %v818 = vadd.f32 %v684, %v817
      %v819 = vpop.f32.mrf.mxu0
      %v820 = vadd.f32 %v686, %v819
      %821 = vmatmul.bf16.gmra.mxu0 %v466
      %v822 = vpop.f32.mrf.mxu0
      %v823 = vadd.f32 %v689, %v822
      %v824 = vpop.f32.mrf.mxu0
      %v825 = vadd.f32 %v691, %v824
      %826 = vmatmul.bf16.gmra.mxu0 %v468
      %v827 = vpop.f32.mrf.mxu0
      %v828 = vadd.f32 %v694, %v827
      %v829 = vpop.f32.mrf.mxu0
      %v830 = vadd.f32 %v696, %v829
      %831 = vmatmul.bf16.gmra.mxu0 %v470
      %v832 = vpop.f32.mrf.mxu0
      %v833 = vadd.f32 %v699, %v832
      %v834 = vpop.f32.mrf.mxu0
      %v835 = vadd.f32 %v701, %v834
      %836 = vmatmul.bf16.gmra.mxu0 %v472
      %v837 = vpop.f32.mrf.mxu0
      %v838 = vadd.f32 %v704, %v837
      %v839 = vpop.f32.mrf.mxu0
      %v840 = vadd.f32 %v706, %v839
      %841 = vmatmul.bf16.gmra.mxu0 %v474
      %v842 = vpop.f32.mrf.mxu0
      %v843 = vadd.f32 %v709, %v842
      %v844 = vpop.f32.mrf.mxu0
      %v845 = vadd.f32 %v711, %v844
      %846 = vmatmul.bf16.gmra.mxu0 %v476
      %v847 = vpop.f32.mrf.mxu0
      %v848 = vadd.f32 %v714, %v847
      %v849 = vpop.f32.mrf.mxu0
      %v850 = vadd.f32 %v716, %v849
      %851 = vmatmul.bf16.gmra.mxu0 %v478
      %v852 = vpop.f32.mrf.mxu0
      %v853 = vadd.f32 %v719, %v852
      %v854 = vpop.f32.mrf.mxu0
      %v855 = vadd.f32 %v721, %v854
      %856 = vmatmul.bf16.gmra.mxu0 %v480
      %v857 = vpop.f32.mrf.mxu0
      %v858 = vadd.f32 %v724, %v857
      %v859 = vpop.f32.mrf.mxu0
      %v860 = vadd.f32 %v726, %v859
      %861 = vmatmul.bf16.gmra.mxu0 %v482
      %v862 = vpop.f32.mrf.mxu0
      %v863 = vadd.f32 %v729, %v862
      %v864 = vpop.f32.mrf.mxu0
      %v865 = vadd.f32 %v731, %v864
      %866 = vmatmul.bf16.gmra.mxu0 %v484
      %v867 = vpop.f32.mrf.mxu0
      %v868 = vadd.f32 %v734, %v867
      %v869 = vpop.f32.mrf.mxu0
      %v870 = vadd.f32 %v736, %v869
      %871 = vmatmul.bf16.gmra.mxu0 %v486
      %v872 = vpop.f32.mrf.mxu0
      %v873 = vadd.f32 %v739, %v872
      %v874 = vpop.f32.mrf.mxu0
      %v875 = vadd.f32 %v741, %v874
      %876 = vmatmul.bf16.gmra.mxu0 %v488
      %v877 = vpop.f32.mrf.mxu0
      %v878 = vadd.f32 %v744, %v877
      %v879 = vpop.f32.mrf.mxu0
      %v880 = vadd.f32 %v746, %v879
      %881 = vmatmul.bf16.gmra.mxu0 %v490
      %v882 = vpop.f32.mrf.mxu0
      %v883 = vadd.f32 %v749, %v882
      %v884 = vpop.f32.mrf.mxu0
      %v885 = vadd.f32 %v751, %v884
      %886 = vmatmul.bf16.gmra.mxu0 %v492
      %v887 = vpop.f32.mrf.mxu0
      %v888 = vadd.f32 %v754, %v887
      %v889 = vpop.f32.mrf.mxu0
      %v890 = vadd.f32 %v756, %v889
      %891 = vmatmul.bf16.gmra.mxu0 %v494
      %v892 = vpop.f32.mrf.mxu0
      %v893 = vadd.f32 %v759, %v892
      %v894 = vpop.f32.mrf.mxu0
      %v895 = vadd.f32 %v761, %v894
      %896 = vmatmul.bf16.gmra.mxu0 %v496
      %v897 = vpop.f32.mrf.mxu0
      %v898 = vadd.f32 %v764, %v897
      %v899 = vpop.f32.mrf.mxu0
      %v900 = vadd.f32 %v766, %v899
      %901 = vmatmul.bf16.gmra.mxu0 %v498
      %v902 = vpop.f32.mrf.mxu0
      %v903 = vadd.f32 %v769, %v902
      %v904 = vpop.f32.mrf.mxu0
      %v905 = vadd.f32 %v771, %v904
      %906 = vmatmul.bf16.gmra.mxu0 %v500
      %v907 = vpop.f32.mrf.mxu0
      %v908 = vadd.f32 %v774, %v907
      %v909 = vpop.f32.mrf.mxu0
      %v910 = vadd.f32 %v776, %v909
      %911 = vmatmul.bf16.gmra.mxu0 %v502
      %v912 = vpop.f32.mrf.mxu0
      %v913 = vadd.f32 %v779, %v912
      %v914 = vpop.f32.mrf.mxu0
      %v915 = vadd.f32 %v781, %v914
      %916 = vdwg.mxu0
      %p917 = scmp.eq.s32.totalorder %s19, 0
      %p918 = scmp.eq.s32.totalorder %s20, 0
      %p919 = pnand %p917, %p918
      %p920 = pneg %p919
      // Predicated region
      $region37: #{classifier_forward.4} parent=35 // pred_check
        _
      $region38: #{classifier_forward.4} parent=35 // pred_check_branch
        %922 = sbr.rel (%p919) target = $region40
      $region39: #{classifier_forward.4} parent=35 // pred_region
        %923 = vst [vmem:[#allocation2] sm:$0x3] 0.0
      $region40: #{classifier_forward.4} parent=35 // pred_fallthru
        _
      // Predicated region
      $region41: #{classifier_forward.4} parent=35 // pred_check
        %p924 = pneg %p917
      $region42: #{classifier_forward.4} parent=35 // pred_check_branch
        %926 = sbr.rel (%p924) target = $region44
      $region43: #{classifier_forward.4} parent=35 // pred_region
        %v927 = vld [vmem:[#allocation2] sm:$0x3]
        %v928 = vadd.f32 %v793, %v795
        %v929 = vadd.f32 %v928, %v798
        %v930 = vadd.f32 %v929, %v800
        %v931 = vadd.f32 %v930, %v803
        %v932 = vadd.f32 %v931, %v805
        %v933 = vadd.f32 %v932, %v808
        %v934 = vadd.f32 %v933, %v810
        %v935 = vadd.f32 %v934, %v813
        %v936 = vadd.f32 %v935, %v815
        %v937 = vadd.f32 %v936, %v818
        %v938 = vadd.f32 %v937, %v820
        %v939 = vadd.f32 %v938, %v823
        %v940 = vadd.f32 %v939, %v825
        %v941 = vadd.f32 %v940, %v828
        %v942 = vadd.f32 %v941, %v830
        %v943 = vadd.f32 %v942, %v833
        %v944 = vadd.f32 %v943, %v835
        %v945 = vadd.f32 %v944, %v838
        %v946 = vadd.f32 %v945, %v840
        %v947 = vadd.f32 %v946, %v843
        %v948 = vadd.f32 %v947, %v845
        %v949 = vadd.f32 %v948, %v848
        %v950 = vadd.f32 %v949, %v850
        %v951 = vadd.f32 %v950, %v853
        %v952 = vadd.f32 %v951, %v855
        %v953 = vadd.f32 %v952, %v858
        %v954 = vadd.f32 %v953, %v860
        %v955 = vadd.f32 %v954, %v863
        %v956 = vadd.f32 %v955, %v865
        %v957 = vadd.f32 %v956, %v868
        %v958 = vadd.f32 %v957, %v870
        %v959 = vadd.f32 %v958, %v873
        %v960 = vadd.f32 %v959, %v875
        %v961 = vadd.f32 %v960, %v878
        %v962 = vadd.f32 %v961, %v880
        %v963 = vadd.f32 %v962, %v883
        %v964 = vadd.f32 %v963, %v885
        %v965 = vadd.f32 %v964, %v888
        %v966 = vadd.f32 %v965, %v890
        %v967 = vadd.f32 %v966, %v893
        %v968 = vadd.f32 %v967, %v895
        %v969 = vadd.f32 %v968, %v898
        %v970 = vadd.f32 %v969, %v900
        %v971 = vadd.f32 %v970, %v903
        %v972 = vadd.f32 %v971, %v905
        %v973 = vadd.f32 %v972, %v908
        %v974 = vadd.f32 %v973, %v910
        %v975 = vadd.f32 %v974, %v913
        %v976 = vadd.f32 %v975, %v915
        %v977 = vrot.slane %v976, 4
        %v978 = vadd.f32 %v976, %v977
        %v979 = vrot.slane %v978, 2
        %v980 = vadd.f32 %v978, %v979
        %v981 = vrot.slane %v980, 1
        %v982 = vadd.f32 %v980, %v981
        %v983 = vmul.f32 %v793, %v793
        %v984 = vmul.f32 %v795, %v795
        %v985 = vmul.f32 %v798, %v798
        %v986 = vmul.f32 %v800, %v800
        %v987 = vmul.f32 %v803, %v803
        %v988 = vmul.f32 %v805, %v805
        %v989 = vmul.f32 %v808, %v808
        %v990 = vmul.f32 %v810, %v810
        %v991 = vmul.f32 %v813, %v813
        %v992 = vmul.f32 %v815, %v815
        %v993 = vmul.f32 %v818, %v818
        %v994 = vmul.f32 %v820, %v820
        %v995 = vmul.f32 %v823, %v823
        %v996 = vmul.f32 %v825, %v825
        %v997 = vmul.f32 %v828, %v828
        %v998 = vmul.f32 %v830, %v830
        %v999 = vmul.f32 %v833, %v833
        %v1000 = vmul.f32 %v835, %v835
        %v1001 = vmul.f32 %v838, %v838
        %v1002 = vmul.f32 %v840, %v840
        %v1003 = vmul.f32 %v843, %v843
        %v1004 = vmul.f32 %v845, %v845
        %v1005 = vmul.f32 %v848, %v848
        %v1006 = vmul.f32 %v850, %v850
        %v1007 = vmul.f32 %v853, %v853
        %v1008 = vmul.f32 %v855, %v855
        %v1009 = vmul.f32 %v858, %v858
        %v1010 = vmul.f32 %v860, %v860
        %v1011 = vmul.f32 %v863, %v863
        %v1012 = vmul.f32 %v865, %v865
        %v1013 = vmul.f32 %v868, %v868
        %v1014 = vmul.f32 %v870, %v870
        %v1015 = vmul.f32 %v873, %v873
        %v1016 = vmul.f32 %v875, %v875
        %v1017 = vmul.f32 %v878, %v878
        %v1018 = vmul.f32 %v880, %v880
        %v1019 = vmul.f32 %v883, %v883
        %v1020 = vmul.f32 %v885, %v885
        %v1021 = vmul.f32 %v888, %v888
        %v1022 = vmul.f32 %v890, %v890
        %v1023 = vmul.f32 %v893, %v893
        %v1024 = vmul.f32 %v895, %v895
        %v1025 = vmul.f32 %v898, %v898
        %v1026 = vmul.f32 %v900, %v900
        %v1027 = vmul.f32 %v903, %v903
        %v1028 = vmul.f32 %v905, %v905
        %v1029 = vmul.f32 %v908, %v908
        %v1030 = vmul.f32 %v910, %v910
        %v1031 = vmul.f32 %v913, %v913
        %v1032 = vmul.f32 %v915, %v915
        %v1033 = vadd.f32 %v983, %v984
        %v1034 = vadd.f32 %v1033, %v985
        %v1035 = vadd.f32 %v1034, %v986
        %v1036 = vadd.f32 %v1035, %v987
        %v1037 = vadd.f32 %v1036, %v988
        %v1038 = vadd.f32 %v1037, %v989
        %v1039 = vadd.f32 %v1038, %v990
        %v1040 = vadd.f32 %v1039, %v991
        %v1041 = vadd.f32 %v1040, %v992
        %v1042 = vadd.f32 %v1041, %v993
        %v1043 = vadd.f32 %v1042, %v994
        %v1044 = vadd.f32 %v1043, %v995
        %v1045 = vadd.f32 %v1044, %v996
        %v1046 = vadd.f32 %v1045, %v997
        %v1047 = vadd.f32 %v1046, %v998
        %v1048 = vadd.f32 %v1047, %v999
        %v1049 = vadd.f32 %v1048, %v1000
        %v1050 = vadd.f32 %v1049, %v1001
        %v1051 = vadd.f32 %v1050, %v1002
        %v1052 = vadd.f32 %v1051, %v1003
        %v1053 = vadd.f32 %v1052, %v1004
        %v1054 = vadd.f32 %v1053, %v1005
        %v1055 = vadd.f32 %v1054, %v1006
        %v1056 = vadd.f32 %v1055, %v1007
        %v1057 = vadd.f32 %v1056, %v1008
        %v1058 = vadd.f32 %v1057, %v1009
        %v1059 = vadd.f32 %v1058, %v1010
        %v1060 = vadd.f32 %v1059, %v1011
        %v1061 = vadd.f32 %v1060, %v1012
        %v1062 = vadd.f32 %v1061, %v1013
        %v1063 = vadd.f32 %v1062, %v1014
        %v1064 = vadd.f32 %v1063, %v1015
        %v1065 = vadd.f32 %v1064, %v1016
        %v1066 = vadd.f32 %v1065, %v1017
        %v1067 = vadd.f32 %v1066, %v1018
        %v1068 = vadd.f32 %v1067, %v1019
        %v1069 = vadd.f32 %v1068, %v1020
        %v1070 = vadd.f32 %v1069, %v1021
        %v1071 = vadd.f32 %v1070, %v1022
        %v1072 = vadd.f32 %v1071, %v1023
        %v1073 = vadd.f32 %v1072, %v1024
        %v1074 = vadd.f32 %v1073, %v1025
        %v1075 = vadd.f32 %v1074, %v1026
        %v1076 = vadd.f32 %v1075, %v1027
        %v1077 = vadd.f32 %v1076, %v1028
        %v1078 = vadd.f32 %v1077, %v1029
        %v1079 = vadd.f32 %v1078, %v1030
        %v1080 = vadd.f32 %v1079, %v1031
        %v1081 = vadd.f32 %v1080, %v1032
        %v1082 = vrot.slane %v1081, 4
        %v1083 = vadd.f32 %v1081, %v1082
        %v1084 = vrot.slane %v1083, 2
        %v1085 = vadd.f32 %v1083, %v1084
        %v1086 = vrot.slane %v1085, 1
        %v1087 = vadd.f32 %v1085, %v1086
        %vm1088 = vcmask 1040384
        %v1089 = vsel %vm1088, %v982, %v1087
        %v1090 = vadd.f32 %v927, %v1089
        %1091 = vst [vmem:[#allocation2] sm:$0x3] %v1090
      $region44: #{classifier_forward.4} parent=35 // pred_fallthru
        _
      %p1092 = scmp.eq.s32.totalorder %s19, 1
      // Predicated region
      $region45: #{classifier_forward.4} parent=35 // pred_check
        %p1093 = pneg %p1092
      $region46: #{classifier_forward.4} parent=35 // pred_check_branch
        %1095 = sbr.rel (%p1093) target = $region48
      $region47: #{classifier_forward.4} parent=35 // pred_region
        %v1096 = vld [vmem:[#allocation2] sm:$0x1]
        %v1097 = vmul.f32 %v1096, 0.0025510204
        %v1098 = vld [vmem:[#allocation2 + $0x1] sm:$0x1]
        %v1099 = vmul.f32 %v1098, 0.0025510204
        %v1100 = vmul.f32 %v1097, %v1097
        %v1101 = vsub.f32 %v1099, %v1100
        %v1102 = vld [vmem:[%s2] sm:$0x1]
        %v1103 = vadd.f32 %v1101, 1e-05
        %v1104 = vrsqrt.pop %v1103
        %v1105 = vmul.f32 %v1104, %v1103
        %v1106 = vmul.f32 %v1105, %v1104
        %v1107 = vmul.f32 0.5, %v1106
        %v1108 = vsub.f32 1.5, %v1107
        %v1109 = vmul.f32 %v1104, %v1108
        %vm1110 = vweird.f32 %v1103
        %vm1111 = vweird.f32 %v1104
        %vm1112 = vmor %vm1110, %vm1111
        %v1113 = vsel %vm1112, %v1104, %v1109
        %v1114 = vmul.f32 %v1102, %v1113
        %v1115 = vld [vmem:[%s3] sm:$0x1]
        %v1116 = vmul.f32 %v1097, %v1114
        %v1117 = vsub.f32 %v1115, %v1116
        %v1119 = vperm.slane %v1114, 0
        %v1121 = vmul.f32 %v793, %v1119
        %v1122 = vmul.f32 %v795, %v1119
        %v1123 = vmul.f32 %v798, %v1119
        %v1124 = vmul.f32 %v800, %v1119
        %v1125 = vmul.f32 %v803, %v1119
        %v1126 = vmul.f32 %v805, %v1119
        %v1127 = vmul.f32 %v808, %v1119
        %v1128 = vmul.f32 %v810, %v1119
        %v1129 = vmul.f32 %v813, %v1119
        %v1130 = vmul.f32 %v815, %v1119
        %v1131 = vmul.f32 %v818, %v1119
        %v1132 = vmul.f32 %v820, %v1119
        %v1133 = vmul.f32 %v823, %v1119
        %v1134 = vmul.f32 %v825, %v1119
        %v1135 = vmul.f32 %v828, %v1119
        %v1136 = vmul.f32 %v830, %v1119
        %v1137 = vmul.f32 %v833, %v1119
        %v1138 = vmul.f32 %v835, %v1119
        %v1139 = vmul.f32 %v838, %v1119
        %v1140 = vmul.f32 %v840, %v1119
        %v1141 = vmul.f32 %v843, %v1119
        %v1142 = vmul.f32 %v845, %v1119
        %v1143 = vmul.f32 %v848, %v1119
        %v1144 = vmul.f32 %v850, %v1119
        %v1145 = vmul.f32 %v853, %v1119
        %v1146 = vmul.f32 %v855, %v1119
        %v1147 = vmul.f32 %v858, %v1119
        %v1148 = vmul.f32 %v860, %v1119
        %v1149 = vmul.f32 %v863, %v1119
        %v1150 = vmul.f32 %v865, %v1119
        %v1151 = vmul.f32 %v868, %v1119
        %v1152 = vmul.f32 %v870, %v1119
        %v1153 = vmul.f32 %v873, %v1119
        %v1154 = vmul.f32 %v875, %v1119
        %v1155 = vmul.f32 %v878, %v1119
        %v1156 = vmul.f32 %v880, %v1119
        %v1157 = vmul.f32 %v883, %v1119
        %v1158 = vmul.f32 %v885, %v1119
        %v1159 = vmul.f32 %v888, %v1119
        %v1160 = vmul.f32 %v890, %v1119
        %v1161 = vmul.f32 %v893, %v1119
        %v1162 = vmul.f32 %v895, %v1119
        %v1163 = vmul.f32 %v898, %v1119
        %v1164 = vmul.f32 %v900, %v1119
        %v1165 = vmul.f32 %v903, %v1119
        %v1166 = vmul.f32 %v905, %v1119
        %v1167 = vmul.f32 %v908, %v1119
        %v1168 = vmul.f32 %v910, %v1119
        %v1169 = vmul.f32 %v913, %v1119
        %v1170 = vmul.f32 %v915, %v1119
        %v1172 = vperm.slane %v1117, 0
        %v1174 = vadd.f32 %v1121, %v1172
        %v1175 = vadd.f32 %v1122, %v1172
        %v1176 = vadd.f32 %v1123, %v1172
        %v1177 = vadd.f32 %v1124, %v1172
        %v1178 = vadd.f32 %v1125, %v1172
        %v1179 = vadd.f32 %v1126, %v1172
        %v1180 = vadd.f32 %v1127, %v1172
        %v1181 = vadd.f32 %v1128, %v1172
        %v1182 = vadd.f32 %v1129, %v1172
        %v1183 = vadd.f32 %v1130, %v1172
        %v1184 = vadd.f32 %v1131, %v1172
        %v1185 = vadd.f32 %v1132, %v1172
        %v1186 = vadd.f32 %v1133, %v1172
        %v1187 = vadd.f32 %v1134, %v1172
        %v1188 = vadd.f32 %v1135, %v1172
        %v1189 = vadd.f32 %v1136, %v1172
        %v1190 = vadd.f32 %v1137, %v1172
        %v1191 = vadd.f32 %v1138, %v1172
        %v1192 = vadd.f32 %v1139, %v1172
        %v1193 = vadd.f32 %v1140, %v1172
        %v1194 = vadd.f32 %v1141, %v1172
        %v1195 = vadd.f32 %v1142, %v1172
        %v1196 = vadd.f32 %v1143, %v1172
        %v1197 = vadd.f32 %v1144, %v1172
        %v1198 = vadd.f32 %v1145, %v1172
        %v1199 = vadd.f32 %v1146, %v1172
        %v1200 = vadd.f32 %v1147, %v1172
        %v1201 = vadd.f32 %v1148, %v1172
        %v1202 = vadd.f32 %v1149, %v1172
        %v1203 = vadd.f32 %v1150, %v1172
        %v1204 = vadd.f32 %v1151, %v1172
        %v1205 = vadd.f32 %v1152, %v1172
        %v1206 = vadd.f32 %v1153, %v1172
        %v1207 = vadd.f32 %v1154, %v1172
        %v1208 = vadd.f32 %v1155, %v1172
        %v1209 = vadd.f32 %v1156, %v1172
        %v1210 = vadd.f32 %v1157, %v1172
        %v1211 = vadd.f32 %v1158, %v1172
        %v1212 = vadd.f32 %v1159, %v1172
        %v1213 = vadd.f32 %v1160, %v1172
        %v1214 = vadd.f32 %v1161, %v1172
        %v1215 = vadd.f32 %v1162, %v1172
        %v1216 = vadd.f32 %v1163, %v1172
        %v1217 = vadd.f32 %v1164, %v1172
        %v1218 = vadd.f32 %v1165, %v1172
        %v1219 = vadd.f32 %v1166, %v1172
        %v1220 = vadd.f32 %v1167, %v1172
        %v1221 = vadd.f32 %v1168, %v1172
        %v1222 = vadd.f32 %v1169, %v1172
        %v1223 = vadd.f32 %v1170, %v1172
        %vm1224 = vcmp.ge.f32.partialorder %v1174, 0.0
        %vm1225 = vcmp.ge.f32.partialorder %v1175, 0.0
        %vm1226 = vcmp.ge.f32.partialorder %v1176, 0.0
        %vm1227 = vcmp.ge.f32.partialorder %v1177, 0.0
        %vm1228 = vcmp.ge.f32.partialorder %v1178, 0.0
        %vm1229 = vcmp.ge.f32.partialorder %v1179, 0.0
        %vm1230 = vcmp.ge.f32.partialorder %v1180, 0.0
        %vm1231 = vcmp.ge.f32.partialorder %v1181, 0.0
        %vm1232 = vcmp.ge.f32.partialorder %v1182, 0.0
        %vm1233 = vcmp.ge.f32.partialorder %v1183, 0.0
        %vm1234 = vcmp.ge.f32.partialorder %v1184, 0.0
        %vm1235 = vcmp.ge.f32.partialorder %v1185, 0.0
        %vm1236 = vcmp.ge.f32.partialorder %v1186, 0.0
        %vm1237 = vcmp.ge.f32.partialorder %v1187, 0.0
        %vm1238 = vcmp.ge.f32.partialorder %v1188, 0.0
        %vm1239 = vcmp.ge.f32.partialorder %v1189, 0.0
        %vm1240 = vcmp.ge.f32.partialorder %v1190, 0.0
        %vm1241 = vcmp.ge.f32.partialorder %v1191, 0.0
        %vm1242 = vcmp.ge.f32.partialorder %v1192, 0.0
        %vm1243 = vcmp.ge.f32.partialorder %v1193, 0.0
        %vm1244 = vcmp.ge.f32.partialorder %v1194, 0.0
        %vm1245 = vcmp.ge.f32.partialorder %v1195, 0.0
        %vm1246 = vcmp.ge.f32.partialorder %v1196, 0.0
        %vm1247 = vcmp.ge.f32.partialorder %v1197, 0.0
        %vm1248 = vcmp.ge.f32.partialorder %v1198, 0.0
        %vm1249 = vcmp.ge.f32.partialorder %v1199, 0.0
        %vm1250 = vcmp.ge.f32.partialorder %v1200, 0.0
        %vm1251 = vcmp.ge.f32.partialorder %v1201, 0.0
        %vm1252 = vcmp.ge.f32.partialorder %v1202, 0.0
        %vm1253 = vcmp.ge.f32.partialorder %v1203, 0.0
        %vm1254 = vcmp.ge.f32.partialorder %v1204, 0.0
        %vm1255 = vcmp.ge.f32.partialorder %v1205, 0.0
        %vm1256 = vcmp.ge.f32.partialorder %v1206, 0.0
        %vm1257 = vcmp.ge.f32.partialorder %v1207, 0.0
        %vm1258 = vcmp.ge.f32.partialorder %v1208, 0.0
        %vm1259 = vcmp.ge.f32.partialorder %v1209, 0.0
        %vm1260 = vcmp.ge.f32.partialorder %v1210, 0.0
        %vm1261 = vcmp.ge.f32.partialorder %v1211, 0.0
        %vm1262 = vcmp.ge.f32.partialorder %v1212, 0.0
        %vm1263 = vcmp.ge.f32.partialorder %v1213, 0.0
        %vm1264 = vcmp.ge.f32.partialorder %v1214, 0.0
        %vm1265 = vcmp.ge.f32.partialorder %v1215, 0.0
        %vm1266 = vcmp.ge.f32.partialorder %v1216, 0.0
        %vm1267 = vcmp.ge.f32.partialorder %v1217, 0.0
        %vm1268 = vcmp.ge.f32.partialorder %v1218, 0.0
        %vm1269 = vcmp.ge.f32.partialorder %v1219, 0.0
        %vm1270 = vcmp.ge.f32.partialorder %v1220, 0.0
        %vm1271 = vcmp.ge.f32.partialorder %v1221, 0.0
        %vm1272 = vcmp.ge.f32.partialorder %v1222, 0.0
        %vm1273 = vcmp.ge.f32.partialorder %v1223, 0.0
        %v1274 = vmul.f32 %v1174, 0.2
        %v1275 = vmul.f32 %v1175, 0.2
        %v1276 = vmul.f32 %v1176, 0.2
        %v1277 = vmul.f32 %v1177, 0.2
        %v1278 = vmul.f32 %v1178, 0.2
        %v1279 = vmul.f32 %v1179, 0.2
        %v1280 = vmul.f32 %v1180, 0.2
        %v1281 = vmul.f32 %v1181, 0.2
        %v1282 = vmul.f32 %v1182, 0.2
        %v1283 = vmul.f32 %v1183, 0.2
        %v1284 = vmul.f32 %v1184, 0.2
        %v1285 = vmul.f32 %v1185, 0.2
        %v1286 = vmul.f32 %v1186, 0.2
        %v1287 = vmul.f32 %v1187, 0.2
        %v1288 = vmul.f32 %v1188, 0.2
        %v1289 = vmul.f32 %v1189, 0.2
        %v1290 = vmul.f32 %v1190, 0.2
        %v1291 = vmul.f32 %v1191, 0.2
        %v1292 = vmul.f32 %v1192, 0.2
        %v1293 = vmul.f32 %v1193, 0.2
        %v1294 = vmul.f32 %v1194, 0.2
        %v1295 = vmul.f32 %v1195, 0.2
        %v1296 = vmul.f32 %v1196, 0.2
        %v1297 = vmul.f32 %v1197, 0.2
        %v1298 = vmul.f32 %v1198, 0.2
        %v1299 = vmul.f32 %v1199, 0.2
        %v1300 = vmul.f32 %v1200, 0.2
        %v1301 = vmul.f32 %v1201, 0.2
        %v1302 = vmul.f32 %v1202, 0.2
        %v1303 = vmul.f32 %v1203, 0.2
        %v1304 = vmul.f32 %v1204, 0.2
        %v1305 = vmul.f32 %v1205, 0.2
        %v1306 = vmul.f32 %v1206, 0.2
        %v1307 = vmul.f32 %v1207, 0.2
        %v1308 = vmul.f32 %v1208, 0.2
        %v1309 = vmul.f32 %v1209, 0.2
        %v1310 = vmul.f32 %v1210, 0.2
        %v1311 = vmul.f32 %v1211, 0.2
        %v1312 = vmul.f32 %v1212, 0.2
        %v1313 = vmul.f32 %v1213, 0.2
        %v1314 = vmul.f32 %v1214, 0.2
        %v1315 = vmul.f32 %v1215, 0.2
        %v1316 = vmul.f32 %v1216, 0.2
        %v1317 = vmul.f32 %v1217, 0.2
        %v1318 = vmul.f32 %v1218, 0.2
        %v1319 = vmul.f32 %v1219, 0.2
        %v1320 = vmul.f32 %v1220, 0.2
        %v1321 = vmul.f32 %v1221, 0.2
        %v1322 = vmul.f32 %v1222, 0.2
        %v1323 = vmul.f32 %v1223, 0.2
        %v1324 = vsel %vm1224, %v1174, %v1274
        %v1325 = vsel %vm1225, %v1175, %v1275
        %v1326 = vsel %vm1226, %v1176, %v1276
        %v1327 = vsel %vm1227, %v1177, %v1277
        %v1328 = vsel %vm1228, %v1178, %v1278
        %v1329 = vsel %vm1229, %v1179, %v1279
        %v1330 = vsel %vm1230, %v1180, %v1280
        %v1331 = vsel %vm1231, %v1181, %v1281
        %v1332 = vsel %vm1232, %v1182, %v1282
        %v1333 = vsel %vm1233, %v1183, %v1283
        %v1334 = vsel %vm1234, %v1184, %v1284
        %v1335 = vsel %vm1235, %v1185, %v1285
        %v1336 = vsel %vm1236, %v1186, %v1286
        %v1337 = vsel %vm1237, %v1187, %v1287
        %v1338 = vsel %vm1238, %v1188, %v1288
        %v1339 = vsel %vm1239, %v1189, %v1289
        %v1340 = vsel %vm1240, %v1190, %v1290
        %v1341 = vsel %vm1241, %v1191, %v1291
        %v1342 = vsel %vm1242, %v1192, %v1292
        %v1343 = vsel %vm1243, %v1193, %v1293
        %v1344 = vsel %vm1244, %v1194, %v1294
        %v1345 = vsel %vm1245, %v1195, %v1295
        %v1346 = vsel %vm1246, %v1196, %v1296
        %v1347 = vsel %vm1247, %v1197, %v1297
        %v1348 = vsel %vm1248, %v1198, %v1298
        %v1349 = vsel %vm1249, %v1199, %v1299
        %v1350 = vsel %vm1250, %v1200, %v1300
        %v1351 = vsel %vm1251, %v1201, %v1301
        %v1352 = vsel %vm1252, %v1202, %v1302
        %v1353 = vsel %vm1253, %v1203, %v1303
        %v1354 = vsel %vm1254, %v1204, %v1304
        %v1355 = vsel %vm1255, %v1205, %v1305
        %v1356 = vsel %vm1256, %v1206, %v1306
        %v1357 = vsel %vm1257, %v1207, %v1307
        %v1358 = vsel %vm1258, %v1208, %v1308
        %v1359 = vsel %vm1259, %v1209, %v1309
        %v1360 = vsel %vm1260, %v1210, %v1310
        %v1361 = vsel %vm1261, %v1211, %v1311
        %v1362 = vsel %vm1262, %v1212, %v1312
        %v1363 = vsel %vm1263, %v1213, %v1313
        %v1364 = vsel %vm1264, %v1214, %v1314
        %v1365 = vsel %vm1265, %v1215, %v1315
        %v1366 = vsel %vm1266, %v1216, %v1316
        %v1367 = vsel %vm1267, %v1217, %v1317
        %v1368 = vsel %vm1268, %v1218, %v1318
        %v1369 = vsel %vm1269, %v1219, %v1319
        %v1370 = vsel %vm1270, %v1220, %v1320
        %v1371 = vsel %vm1271, %v1221, %v1321
        %v1372 = vsel %vm1272, %v1222, %v1322
        %v1373 = vsel %vm1273, %v1223, %v1323
        %1374 = vst [vmem:[%s218] sm:$0xff] %v1324
        %1375 = vst [vmem:[%s218 + $0x8] sm:$0xff] %v1325
        %1376 = vst [vmem:[%s218 + $0x10] sm:$0xff] %v1326
        %1377 = vst [vmem:[%s218 + $0x18] sm:$0xff] %v1327
        %1378 = vst [vmem:[%s218 + $0x20] sm:$0xff] %v1328
        %1379 = vst [vmem:[%s218 + $0x28] sm:$0xff] %v1329
        %1380 = vst [vmem:[%s218 + $0x30] sm:$0xff] %v1330
        %1381 = vst [vmem:[%s218 + $0x38] sm:$0xff] %v1331
        %1382 = vst [vmem:[%s218 + $0x40] sm:$0xff] %v1332
        %1383 = vst [vmem:[%s218 + $0x48] sm:$0xff] %v1333
        %1384 = vst [vmem:[%s218 + $0x50] sm:$0xff] %v1334
        %1385 = vst [vmem:[%s218 + $0x58] sm:$0xff] %v1335
        %1386 = vst [vmem:[%s218 + $0x60] sm:$0xff] %v1336
        %1387 = vst [vmem:[%s218 + $0x68] sm:$0xff] %v1337
        %1388 = vst [vmem:[%s218 + $0x70] sm:$0xff] %v1338
        %1389 = vst [vmem:[%s218 + $0x78] sm:$0xff] %v1339
        %1390 = vst [vmem:[%s218 + $0x80] sm:$0xff] %v1340
        %1391 = vst [vmem:[%s218 + $0x88] sm:$0xff] %v1341
        %1392 = vst [vmem:[%s218 + $0x90] sm:$0xff] %v1342
        %1393 = vst [vmem:[%s218 + $0x98] sm:$0xff] %v1343
        %1394 = vst [vmem:[%s218 + $0xa0] sm:$0xff] %v1344
        %1395 = vst [vmem:[%s218 + $0xa8] sm:$0xff] %v1345
        %1396 = vst [vmem:[%s218 + $0xb0] sm:$0xff] %v1346
        %1397 = vst [vmem:[%s218 + $0xb8] sm:$0xff] %v1347
        %1398 = vst [vmem:[%s218 + $0xc0] sm:$0xff] %v1348
        %1399 = vst [vmem:[%s218 + $0xc8] sm:$0xff] %v1349
        %1400 = vst [vmem:[%s218 + $0xd0] sm:$0xff] %v1350
        %1401 = vst [vmem:[%s218 + $0xd8] sm:$0xff] %v1351
        %1402 = vst [vmem:[%s218 + $0xe0] sm:$0xff] %v1352
        %1403 = vst [vmem:[%s218 + $0xe8] sm:$0xff] %v1353
        %1404 = vst [vmem:[%s218 + $0xf0] sm:$0xff] %v1354
        %1405 = vst [vmem:[%s218 + $0xf8] sm:$0xff] %v1355
        %1406 = vst [vmem:[%s218 + $0x100] sm:$0xff] %v1356
        %1407 = vst [vmem:[%s218 + $0x108] sm:$0xff] %v1357
        %1408 = vst [vmem:[%s218 + $0x110] sm:$0xff] %v1358
        %1409 = vst [vmem:[%s218 + $0x118] sm:$0xff] %v1359
        %1410 = vst [vmem:[%s218 + $0x120] sm:$0xff] %v1360
        %1411 = vst [vmem:[%s218 + $0x128] sm:$0xff] %v1361
        %1412 = vst [vmem:[%s218 + $0x130] sm:$0xff] %v1362
        %1413 = vst [vmem:[%s218 + $0x138] sm:$0xff] %v1363
        %1414 = vst [vmem:[%s218 + $0x140] sm:$0xff] %v1364
        %1415 = vst [vmem:[%s218 + $0x148] sm:$0xff] %v1365
        %1416 = vst [vmem:[%s218 + $0x150] sm:$0xff] %v1366
        %1417 = vst [vmem:[%s218 + $0x158] sm:$0xff] %v1367
        %1418 = vst [vmem:[%s218 + $0x160] sm:$0xff] %v1368
        %1419 = vst [vmem:[%s218 + $0x168] sm:$0xff] %v1369
        %1420 = vst [vmem:[%s218 + $0x170] sm:$0xff] %v1370
        %1421 = vst [vmem:[%s218 + $0x178] sm:$0xff] %v1371
        %1422 = vst [vmem:[%s218 + $0x180] sm:$0xff] %v1372
        %1423 = vst [vmem:[%s218 + $0x188] sm:$0xff] %v1373
      $region48: #{classifier_forward.4} parent=35 // pred_fallthru
        _
      %s1424 = smul.u32 %s19, %s20
      %s1425 = smul.u32 50, %s1424
      %p1426 = scmp.lt.s32.totalorder %s1425, 49
      %s1427 = scalar_select %p1426, %s1425, 49
      %s1428 = smul.addr %s1427, 8
      %s1429 = scalar_lea.vmem %s4, %s1428
      // Predicated region
      $region49: #{classifier_forward.4} parent=35 // pred_check
        %p1430 = pneg %p136
      $region50: #{classifier_forward.4} parent=35 // pred_check_branch
        %1432 = sbr.rel (%p1430) target = $region52
      $region51: #{classifier_forward.4} parent=35 // pred_region
        %s1433 = smul.u32 %s19, %s20
        %s1434 = smul.u32 50, %s1433
      $region52: #{classifier_forward.4} parent=35 // pred_fallthru
        _
    $region36: #{classifier_forward.4} parent=5 // pred_fallthru
      _
    %p1435 = scmp.le.s32.totalorder 2, %s10
    // Predicated region
    $region53: #{classifier_forward.4} parent=5 // pred_check
      %p1436 = pneg %p1435
    $region54: #{classifier_forward.4} parent=5 // pred_check_branch
      %1438 = sbr.rel (%p1436) target = $region56
    $region55: #{classifier_forward.4} parent=5 // pred_region
      %s1439 = ssub.s32 %s10, 2
      // Predicated region
      $region57: #{classifier_forward.4} parent=55 // pred_check
        %p1440 = pneg %p142
      $region58: #{classifier_forward.4} parent=55 // pred_check_branch
        %1442 = sbr.rel (%p1440) target = $region60
      $region59: #{classifier_forward.4} parent=55 // pred_region
        %s1443 = smul.u32 %s21, %s22
        %s1444 = smul.u32 50, %s1443
        %p1445 = scmp.lt.s32.totalorder %s1444, 49
        %s1446 = scalar_select %p1445, %s1444, 49
        %s1447 = smul.addr %s1446, 8
        %s1448 = scalar_lea.vmem %s4, %s1447
      $region60: #{classifier_forward.4} parent=55 // pred_fallthru
        _
    $region56: #{classifier_forward.4} parent=5 // pred_fallthru
      _
  $region6: #{classifier_forward.4} parent=0 // loop_footer
    %s14 = sadd.s32 1, %s10
  $region7: #{classifier_forward.4} parent=0 // loop_footer_branch
    %9 = sbr.rel target = $region3
  $region8: #{classifier_forward.4} parent=0 // loop_exit
    _

// kernel: classifier_forward.5
$region0: #{classifier_forward.5}
  #allocation0 [shape = 'u32[]', space=smem, size = 0x4, offset = 0x4, fixed_abs, tag = 'smem constant byte address 0x4 - core index']
  #allocation1 [shape = 'u32[72,128]{1,0:T(1,128)}', space=vmem, size = 0x9000, scoped, tag = 'internal scratch']
  #allocation2 [shape = 'f32[2,128]{1,0:T(2,128)}', space=vmem, size = 0x400, scoped, tag = 'scratch operand']
  %s0 = inlined_call_operand.vmem [shape: bf16[32,512], index: 0, kind: input, shape index: {}]
  %s1 = inlined_call_operand.vmem [shape: bf16[512,128], index: 1, kind: input, shape index: {}]
  %s2 = inlined_call_operand.vmem [shape: f32[1,128], index: 2, kind: input, shape index: {}]
  %s3 = inlined_call_operand.vmem [shape: f32[1,128], index: 3, kind: input, shape index: {}]
  %s4 = inlined_call_operand.vmem [shape: f32[32,128], index: 4, kind: output, shape index: {}]
  %s5 = sld [smem:[#allocation0]]
  $region61: #{classifier_forward.5} parent=0
    _
  %s7 = ssub.s32 1, %s5
  %s8 = scalar_select 0, %s7, %s5
  loop: start=0, step=1, limit=4
  $region2: #{classifier_forward.5} parent=0 // loop_pre_header
    _
  $region3: #{classifier_forward.5} parent=0 // loop_header
    %s10 = sphi 0, %s14
    %p11 = scmp.ge.s32.totalorder %s10, 4
    %s17 = sphi 0, %s29
    %s18 = sphi 0, %s25
    %s19 = sphi 0, %s17
    %s20 = sphi 0, %s18
    %s21 = sphi 0, %s19
    %s22 = sphi 0, %s20
    %s32 = sphi 0, %s34
    %s35 = sphi 0, %s32
    %s36 = sphi 0, %s35
    %s52 = sphi 0, %s36
    %s56 = sphi 0, %s56
    %s58 = sphi 0, %s56
    %s59 = sphi 0, %s58
    %s73 = sphi 0, %s59
    %s77 = sphi 0, %s77
    %s79 = sphi 0, %s77
    %s80 = sphi 0, %s79
    %s94 = sphi 0, %s80
    %s98 = sphi 0, %s98
    %s100 = sphi 0, %s98
    %s101 = sphi 0, %s100
    %s115 = sphi 0, %s101
    %s123 = sphi 0, %s125
    %s126 = sphi 0, %s123
    %s127 = sphi 0, %s126
    %s143 = sphi 0, %s127
  $region4: #{classifier_forward.5} parent=0 // loop_header_branch
    %13 = sbr.rel (%p11) target = $region8
  $region5: #{classifier_forward.5} parent=0 // loop_body
    %s15 = ssub.s32 %s10, 1
    %s16 = ssub.s32 %s10, 2
    %s23 = sadd.s32 1, %s18
    %p24 = scmp.ge.s32.totalorder %s23, 1
    %s25 = scalar_select %p24, 0, %s23
    %s26 = sadd.s32 1, %s17
    %s27 = scalar_select %p24, %s26, %s17
    %p28 = scmp.ge.s32.totalorder %s27, 2
    %s29 = scalar_select %p28, 0, %s27
    %s30 = ssub.s32 %s18, %s25
    %p31 = scmp.eq.s32.totalorder %s30, 0
    %s33 = sadd.s32 %s32, 1
    %s34 = scalar_select %p31, %s32, %s33
    %p37 = pneg %p31
    %p38 = scmp.eq.s32.totalorder %s10, 1
    %p39 = por %p37, %p38
    %p40 = scmp.ne.s32.totalorder %s32, %s35
    %p41 = scmp.eq.s32.totalorder %s10, 0
    %p42 = por %p40, %p41
    %p43 = scmp.ne.s32.totalorder %s32, %s35
    %p44 = scmp.eq.s32.totalorder %s15, 1
    %p45 = por %p43, %p44
    %p46 = scmp.ne.s32.totalorder %s35, %s36
    %p47 = scmp.eq.s32.totalorder %s15, 0
    %p48 = por %p46, %p47
    %p49 = scmp.ne.s32.totalorder %s35, %s36
    %p50 = scmp.eq.s32.totalorder %s16, 1
    %p51 = por %p49, %p50
    %p53 = scmp.ne.s32.totalorder %s36, %s52
    %p54 = scmp.eq.s32.totalorder %s16, 0
    %p55 = por %p53, %p54
    %s57 = sadd.s32 %s56, 1
    %p60 = scmp.eq.s32.totalorder %s10, 1
    %p61 = scmp.ne.s32.totalorder %s56, %s58
    %p62 = scmp.eq.s32.totalorder %s10, 0
    %p63 = por %p61, %p62
    %p64 = scmp.ne.s32.totalorder %s56, %s58
    %p65 = scmp.eq.s32.totalorder %s15, 1
    %p66 = por %p64, %p65
    %p67 = scmp.ne.s32.totalorder %s58, %s59
    %p68 = scmp.eq.s32.totalorder %s15, 0
    %p69 = por %p67, %p68
    %p70 = scmp.ne.s32.totalorder %s58, %s59
    %p71 = scmp.eq.s32.totalorder %s16, 1
    %p72 = por %p70, %p71
    %p74 = scmp.ne.s32.totalorder %s59, %s73
    %p75 = scmp.eq.s32.totalorder %s16, 0
    %p76 = por %p74, %p75
    %s78 = sadd.s32 %s77, 1
    %p81 = scmp.eq.s32.totalorder %s10, 1
    %p82 = scmp.ne.s32.totalorder %s77, %s79
    %p83 = scmp.eq.s32.totalorder %s10, 0
    %p84 = por %p82, %p83
    %p85 = scmp.ne.s32.totalorder %s77, %s79
    %p86 = scmp.eq.s32.totalorder %s15, 1
    %p87 = por %p85, %p86
    %p88 = scmp.ne.s32.totalorder %s79, %s80
    %p89 = scmp.eq.s32.totalorder %s15, 0
    %p90 = por %p88, %p89
    %p91 = scmp.ne.s32.totalorder %s79, %s80
    %p92 = scmp.eq.s32.totalorder %s16, 1
    %p93 = por %p91, %p92
    %p95 = scmp.ne.s32.totalorder %s80, %s94
    %p96 = scmp.eq.s32.totalorder %s16, 0
    %p97 = por %p95, %p96
    %s99 = sadd.s32 %s98, 1
    %p102 = scmp.eq.s32.totalorder %s10, 1
    %p103 = scmp.ne.s32.totalorder %s98, %s100
    %p104 = scmp.eq.s32.totalorder %s10, 0
    %p105 = por %p103, %p104
    %p106 = scmp.ne.s32.totalorder %s98, %s100
    %p107 = scmp.eq.s32.totalorder %s15, 1
    %p108 = por %p106, %p107
    %p109 = scmp.ne.s32.totalorder %s100, %s101
    %p110 = scmp.eq.s32.totalorder %s15, 0
    %p111 = por %p109, %p110
    %p112 = scmp.ne.s32.totalorder %s100, %s101
    %p113 = scmp.eq.s32.totalorder %s16, 1
    %p114 = por %p112, %p113
    %p116 = scmp.ne.s32.totalorder %s101, %s115
    %p117 = scmp.eq.s32.totalorder %s16, 0
    %p118 = por %p116, %p117
    %s119 = smul.u32 %s17, %s18
    %s120 = smul.u32 %s29, %s25
    %s121 = ssub.s32 %s119, %s120
    %p122 = scmp.eq.s32.totalorder %s121, 0
    %s124 = sadd.s32 %s123, 1
    %s125 = scalar_select %p122, %s123, %s124
    %p128 = pneg %p122
    %p129 = scmp.eq.s32.totalorder %s10, 1
    %p130 = por %p128, %p129
    %p131 = scmp.ne.s32.totalorder %s123, %s126
    %p132 = scmp.eq.s32.totalorder %s10, 0
    %p133 = por %p131, %p132
    %p134 = scmp.ne.s32.totalorder %s123, %s126
    %p135 = scmp.eq.s32.totalorder %s15, 1
    %p136 = por %p134, %p135
    %p137 = scmp.ne.s32.totalorder %s126, %s127
    %p138 = scmp.eq.s32.totalorder %s15, 0
    %p139 = por %p137, %p138
    %p140 = scmp.ne.s32.totalorder %s126, %s127
    %p141 = scmp.eq.s32.totalorder %s16, 1
    %p142 = por %p140, %p141
    %p144 = scmp.ne.s32.totalorder %s127, %s143
    %p145 = scmp.eq.s32.totalorder %s16, 0
    %p146 = por %p144, %p145
    %p147 = scmp.le.s32.totalorder 1, %s10
    %p148 = scmp.lt.s32.totalorder %s10, 3
    %p149 = pnand %p147, %p148
    %p150 = pneg %p149
    // Predicated region
    $region9: #{classifier_forward.5} parent=5 // pred_check
      _
    $region10: #{classifier_forward.5} parent=5 // pred_check_branch
      %152 = sbr.rel (%p149) target = $region12
    $region11: #{classifier_forward.5} parent=5 // pred_region
      %s153 = ssub.s32 %s10, 1
      // Predicated region
      $region13: #{classifier_forward.5} parent=11 // pred_check
        %p154 = pneg %p48
      $region14: #{classifier_forward.5} parent=11 // pred_check_branch
        %156 = sbr.rel (%p154) target = $region16
      $region15: #{classifier_forward.5} parent=11 // pred_region
        %s157 = smul.u32 4, %s20
        %p158 = scmp.lt.s32.totalorder %s157, 3
        %s159 = scalar_select %p158, %s157, 3
        %s160 = smul.addr %s159, 4
        %s161 = smul.addr %s160, 4
        %s162 = scalar_lea.vmem %s0, %s161
        %s163 = smul.u32 4, %s20
      $region16: #{classifier_forward.5} parent=11 // pred_fallthru
        _
      // Predicated region
      $region17: #{classifier_forward.5} parent=11 // pred_check
        %p164 = pneg %p69
      $region18: #{classifier_forward.5} parent=11 // pred_check_branch
        %166 = sbr.rel (%p164) target = $region20
      $region19: #{classifier_forward.5} parent=11 // pred_region
        _
      $region20: #{classifier_forward.5} parent=11 // pred_fallthru
        _
      // Predicated region
      $region21: #{classifier_forward.5} parent=11 // pred_check
        %p167 = pneg %p90
      $region22: #{classifier_forward.5} parent=11 // pred_check_branch
        %169 = sbr.rel (%p167) target = $region24
      $region23: #{classifier_forward.5} parent=11 // pred_region
        _
      $region24: #{classifier_forward.5} parent=11 // pred_fallthru
        _
      // Predicated region
      $region25: #{classifier_forward.5} parent=11 // pred_check
        %p170 = pneg %p111
      $region26: #{classifier_forward.5} parent=11 // pred_check_branch
        %172 = sbr.rel (%p170) target = $region28
      $region27: #{classifier_forward.5} parent=11 // pred_region
        _
      $region28: #{classifier_forward.5} parent=11 // pred_fallthru
        _
    $region12: #{classifier_forward.5} parent=5 // pred_fallthru
      _
    %p173 = scmp.lt.s32.totalorder %s10, 2
    // Predicated region
    $region29: #{classifier_forward.5} parent=5 // pred_check
      %p174 = pneg %p173
    $region30: #{classifier_forward.5} parent=5 // pred_check_branch
      %176 = sbr.rel (%p174) target = $region32
    $region31: #{classifier_forward.5} parent=5 // pred_region
      _
    $region32: #{classifier_forward.5} parent=5 // pred_fallthru
      _
    %p177 = scmp.le.s32.totalorder 1, %s10
    %p178 = scmp.lt.s32.totalorder %s10, 3
    %p179 = pnand %p177, %p178
    %p180 = pneg %p179
    // Predicated region
    $region33: #{classifier_forward.5} parent=5 // pred_check
      _
    $region34: #{classifier_forward.5} parent=5 // pred_check_branch
      %182 = sbr.rel (%p179) target = $region36
    $region35: #{classifier_forward.5} parent=5 // pred_region
      %s183 = ssub.s32 %s10, 1
      %s184 = smul.u32 4, %s20
      %p185 = scmp.lt.s32.totalorder %s184, 3
      %s186 = scalar_select %p185, %s184, 3
      %s187 = smul.addr %s186, 4
      %s188 = smul.addr %s187, 4
      %s189 = scalar_lea.vmem %s0, %s188
      %p190 = pneg %p48
      %p191 = pneg %p45
      %p192 = pneg %p69
      %p193 = pneg %p66
      %p194 = pneg %p90
      %p195 = pneg %p87
      %p196 = pneg %p111
      %p197 = pneg %p108
      %p198 = pneg %p139
      %p199 = pneg %p136
      %s200 = smul.u32 %s19, %s20
      %s201 = smul.u32 4, %s200
      %p202 = scmp.lt.s32.totalorder %s201, 3
      %s203 = scalar_select %p202, %s201, 3
      %s204 = smul.addr %s203, 8
      %s205 = scalar_lea.vmem %s4, %s204
      %s206 = smul.u32 4, %s20
      %p207 = scmp.lt.s32.totalorder %s206, 3
      %s208 = scalar_select %p207, %s206, 3
      %s209 = smul.addr %s208, 4
      %s210 = smul.addr %s209, 4
      %s211 = scalar_lea.vmem %s0, %s210
      %s212 = smul.u32 4, %s20
      %s213 = smul.u32 %s19, %s20
      %s214 = smul.u32 4, %s213
      %p215 = scmp.lt.s32.totalorder %s214, 3
      %s216 = scalar_select %p215, %s214, 3
      %s217 = smul.addr %s216, 8
      %s218 = scalar_lea.vmem %s4, %s217
      %s219 = smul.u32 %s19, %s20
      %s220 = smul.u32 4, %s219
      %v221 = vld [vmem:[%s211] sm:$0xff]
      %v222 = vld [vmem:[%s211 + $0x8] sm:$0xff]
      %v223 = vld [vmem:[%s211 + $0x10] sm:$0xff]
      %v224 = vld [vmem:[%s211 + $0x18] sm:$0xff]
      %v225 = vld [vmem:[%s211 + $0x20] sm:$0xff]
      %v226 = vld [vmem:[%s211 + $0x28] sm:$0xff]
      %v227 = vld [vmem:[%s211 + $0x30] sm:$0xff]
      %v228 = vld [vmem:[%s211 + $0x38] sm:$0xff]
      %v229 = vld [vmem:[%s1] sm:$0xf]
      %v230 = vld [vmem:[%s1 + $0x4] sm:$0xf]
      %v231 = vld [vmem:[%s1 + $0x8] sm:$0xf]
      %v232 = vld [vmem:[%s1 + $0xc] sm:$0xf]
      %v233 = vld [vmem:[%s1 + $0x10] sm:$0xf]
      %v234 = vld [vmem:[%s1 + $0x14] sm:$0xf]
      %v235 = vld [vmem:[%s1 + $0x18] sm:$0xf]
      %v236 = vld [vmem:[%s1 + $0x1c] sm:$0xf]
      %v237 = vld [vmem:[%s1 + $0x20] sm:$0xf]
      %v238 = vld [vmem:[%s1 + $0x24] sm:$0xf]
      %v239 = vld [vmem:[%s1 + $0x28] sm:$0xf]
      %v240 = vld [vmem:[%s1 + $0x2c] sm:$0xf]
      %v241 = vld [vmem:[%s1 + $0x30] sm:$0xf]
      %v242 = vld [vmem:[%s1 + $0x34] sm:$0xf]
      %v243 = vld [vmem:[%s1 + $0x38] sm:$0xf]
      %v244 = vld [vmem:[%s1 + $0x3c] sm:$0xf]
      %v245 = vld [vmem:[%s1 + $0x40] sm:$0xf]
      %v246 = vld [vmem:[%s1 + $0x44] sm:$0xf]
      %v247 = vld [vmem:[%s1 + $0x48] sm:$0xf]
      %v248 = vld [vmem:[%s1 + $0x4c] sm:$0xf]
      %v249 = vld [vmem:[%s1 + $0x50] sm:$0xf]
      %v250 = vld [vmem:[%s1 + $0x54] sm:$0xf]
      %v251 = vld [vmem:[%s1 + $0x58] sm:$0xf]
      %v252 = vld [vmem:[%s1 + $0x5c] sm:$0xf]
      %v253 = vld [vmem:[%s1 + $0x60] sm:$0xf]
      %v254 = vld [vmem:[%s1 + $0x64] sm:$0xf]
      %v255 = vld [vmem:[%s1 + $0x68] sm:$0xf]
      %v256 = vld [vmem:[%s1 + $0x6c] sm:$0xf]
      %v257 = vld [vmem:[%s1 + $0x70] sm:$0xf]
      %v258 = vld [vmem:[%s1 + $0x74] sm:$0xf]
      %v259 = vld [vmem:[%s1 + $0x78] sm:$0xf]
      %v260 = vld [vmem:[%s1 + $0x7c] sm:$0xf]
      %v261 = vld [vmem:[%s1 + $0x80] sm:$0xf]
      %v262 = vld [vmem:[%s1 + $0x84] sm:$0xf]
      %v263 = vld [vmem:[%s1 + $0x88] sm:$0xf]
      %v264 = vld [vmem:[%s1 + $0x8c] sm:$0xf]
      %v265 = vld [vmem:[%s1 + $0x90] sm:$0xf]
      %v266 = vld [vmem:[%s1 + $0x94] sm:$0xf]
      %v267 = vld [vmem:[%s1 + $0x98] sm:$0xf]
      %v268 = vld [vmem:[%s1 + $0x9c] sm:$0xf]
      %v269 = vld [vmem:[%s1 + $0xa0] sm:$0xf]
      %v270 = vld [vmem:[%s1 + $0xa4] sm:$0xf]
      %v271 = vld [vmem:[%s1 + $0xa8] sm:$0xf]
      %v272 = vld [vmem:[%s1 + $0xac] sm:$0xf]
      %v273 = vld [vmem:[%s1 + $0xb0] sm:$0xf]
      %v274 = vld [vmem:[%s1 + $0xb4] sm:$0xf]
      %v275 = vld [vmem:[%s1 + $0xb8] sm:$0xf]
      %v276 = vld [vmem:[%s1 + $0xbc] sm:$0xf]
      %v277 = vld [vmem:[%s1 + $0xc0] sm:$0xf]
      %v278 = vld [vmem:[%s1 + $0xc4] sm:$0xf]
      %v279 = vld [vmem:[%s1 + $0xc8] sm:$0xf]
      %v280 = vld [vmem:[%s1 + $0xcc] sm:$0xf]
      %v281 = vld [vmem:[%s1 + $0xd0] sm:$0xf]
      %v282 = vld [vmem:[%s1 + $0xd4] sm:$0xf]
      %v283 = vld [vmem:[%s1 + $0xd8] sm:$0xf]
      %v284 = vld [vmem:[%s1 + $0xdc] sm:$0xf]
      %v285 = vld [vmem:[%s1 + $0xe0] sm:$0xf]
      %v286 = vld [vmem:[%s1 + $0xe4] sm:$0xf]
      %v287 = vld [vmem:[%s1 + $0xe8] sm:$0xf]
      %v288 = vld [vmem:[%s1 + $0xec] sm:$0xf]
      %v289 = vld [vmem:[%s1 + $0xf0] sm:$0xf]
      %v290 = vld [vmem:[%s1 + $0xf4] sm:$0xf]
      %v291 = vld [vmem:[%s1 + $0xf8] sm:$0xf]
      %v292 = vld [vmem:[%s1 + $0xfc] sm:$0xf]
      %v301 = vunpack.c.l.b16 %v221
      %v302 = vunpack.c.h.b16 %v221
      %v303 = vunpack.c.l.b16 %v222
      %v304 = vunpack.c.h.b16 %v222
      %v305 = vunpack.c.l.b16 %v223
      %v306 = vunpack.c.h.b16 %v223
      %v307 = vunpack.c.l.b16 %v224
      %v308 = vunpack.c.h.b16 %v224
      %v309 = vunpack.c.l.b16 %v225
      %v310 = vunpack.c.h.b16 %v225
      %v311 = vunpack.c.l.b16 %v226
      %v312 = vunpack.c.h.b16 %v226
      %v313 = vunpack.c.l.b16 %v227
      %v314 = vunpack.c.h.b16 %v227
      %v315 = vunpack.c.l.b16 %v228
      %v316 = vunpack.c.h.b16 %v228
      %v317 = vpack.c.b16 %v305, %v301
      %v318 = vpack.c.b16 %v306, %v302
      %v319 = vpack.c.b16 %v307, %v303
      %v320 = vpack.c.b16 %v308, %v304
      %v321 = vpack.c.b16 %v313, %v309
      %v322 = vpack.c.b16 %v314, %v310
      %v323 = vpack.c.b16 %v315, %v311
      %v324 = vpack.c.b16 %v316, %v312
      %v397 = vunpack.c.l.b16 %v229
      %v398 = vunpack.c.l.b16 %v230
      %v399 = vunpack.c.l.b16 %v231
      %v400 = vunpack.c.l.b16 %v232
      %v401 = vunpack.c.l.b16 %v233
      %v402 = vunpack.c.l.b16 %v234
      %v403 = vunpack.c.l.b16 %v235
      %v404 = vunpack.c.l.b16 %v236
      %v405 = vunpack.c.l.b16 %v237
      %v406 = vunpack.c.l.b16 %v238
      %v407 = vunpack.c.l.b16 %v239
      %v408 = vunpack.c.l.b16 %v240
      %v409 = vunpack.c.l.b16 %v241
      %v410 = vunpack.c.l.b16 %v242
      %v411 = vunpack.c.l.b16 %v243
      %v412 = vunpack.c.l.b16 %v244
      %v413 = vunpack.c.l.b16 %v245
      %v414 = vunpack.c.l.b16 %v246
      %v415 = vunpack.c.l.b16 %v247
      %v416 = vunpack.c.l.b16 %v248
      %v417 = vunpack.c.l.b16 %v249
      %v418 = vunpack.c.l.b16 %v250
      %v419 = vunpack.c.l.b16 %v251
      %v420 = vunpack.c.l.b16 %v252
      %v421 = vunpack.c.l.b16 %v253
      %v422 = vunpack.c.l.b16 %v254
      %v423 = vunpack.c.l.b16 %v255
      %v424 = vunpack.c.l.b16 %v256
      %v425 = vunpack.c.l.b16 %v257
      %v426 = vunpack.c.l.b16 %v258
      %v427 = vunpack.c.l.b16 %v259
      %v428 = vunpack.c.l.b16 %v260
      %v429 = vunpack.c.l.b16 %v261
      %v430 = vunpack.c.l.b16 %v262
      %v431 = vunpack.c.l.b16 %v263
      %v432 = vunpack.c.l.b16 %v264
      %v433 = vunpack.c.l.b16 %v265
      %v434 = vunpack.c.l.b16 %v266
      %v435 = vunpack.c.l.b16 %v267
      %v436 = vunpack.c.l.b16 %v268
      %v437 = vunpack.c.l.b16 %v269
      %v438 = vunpack.c.l.b16 %v270
      %v439 = vunpack.c.l.b16 %v271
      %v440 = vunpack.c.l.b16 %v272
      %v441 = vunpack.c.l.b16 %v273
      %v442 = vunpack.c.l.b16 %v274
      %v443 = vunpack.c.l.b16 %v275
      %v444 = vunpack.c.l.b16 %v276
      %v445 = vunpack.c.l.b16 %v277
      %v446 = vunpack.c.l.b16 %v278
      %v447 = vunpack.c.l.b16 %v279
      %v448 = vunpack.c.l.b16 %v280
      %v449 = vunpack.c.l.b16 %v281
      %v450 = vunpack.c.l.b16 %v282
      %v451 = vunpack.c.l.b16 %v283
      %v452 = vunpack.c.l.b16 %v284
      %v453 = vunpack.c.l.b16 %v285
      %v454 = vunpack.c.l.b16 %v286
      %v455 = vunpack.c.l.b16 %v287
      %v456 = vunpack.c.l.b16 %v288
      %v457 = vunpack.c.l.b16 %v289
      %v458 = vunpack.c.l.b16 %v290
      %v459 = vunpack.c.l.b16 %v291
      %v460 = vunpack.c.l.b16 %v292
      %v461 = vpack.c.b16 %v398, %v397
      %v462 = vpack.c.b16 %v400, %v399
      %v463 = vpack.c.b16 %v402, %v401
      %v464 = vpack.c.b16 %v404, %v403
      %v465 = vpack.c.b16 %v406, %v405
      %v466 = vpack.c.b16 %v408, %v407
      %v467 = vpack.c.b16 %v410, %v409
      %v468 = vpack.c.b16 %v412, %v411
      %v469 = vpack.c.b16 %v414, %v413
      %v470 = vpack.c.b16 %v416, %v415
      %v471 = vpack.c.b16 %v418, %v417
      %v472 = vpack.c.b16 %v420, %v419
      %v473 = vpack.c.b16 %v422, %v421
      %v474 = vpack.c.b16 %v424, %v423
      %v475 = vpack.c.b16 %v426, %v425
      %v476 = vpack.c.b16 %v428, %v427
      %v477 = vpack.c.b16 %v430, %v429
      %v478 = vpack.c.b16 %v432, %v431
      %v479 = vpack.c.b16 %v434, %v433
      %v480 = vpack.c.b16 %v436, %v435
      %v481 = vpack.c.b16 %v438, %v437
      %v482 = vpack.c.b16 %v440, %v439
      %v483 = vpack.c.b16 %v442, %v441
      %v484 = vpack.c.b16 %v444, %v443
      %v485 = vpack.c.b16 %v446, %v445
      %v486 = vpack.c.b16 %v448, %v447
      %v487 = vpack.c.b16 %v450, %v449
      %v488 = vpack.c.b16 %v452, %v451
      %v489 = vpack.c.b16 %v454, %v453
      %v490 = vpack.c.b16 %v456, %v455
      %v491 = vpack.c.b16 %v458, %v457
      %v492 = vpack.c.b16 %v460, %v459
      %525 = vmatpush.bf16.msra.mxu0 %v468
      %526 = vmatpush.bf16.msra.mxu0 %v467
      %527 = vmatpush.bf16.msra.mxu0 %v466
      %528 = vmatpush.bf16.msra.mxu0 %v465
      %529 = vmatpush.bf16.msra.mxu0 %v464
      %530 = vmatpush.bf16.msra.mxu0 %v463
      %531 = vmatpush.bf16.msra.mxu0 %v462
      %532 = vmatpush.bf16.msra.mxu0 %v461
      %533 = vmatmul.bf16.gmra.mxu0 %v317
      %v534 = vpop.f32.mrf.mxu0
      %v535 = vadd.f32 0.0, %v534
      %v536 = vpop.f32.mrf.mxu0
      %v537 = vadd.f32 0.0, %v536
      %538 = vmatmul.bf16.gmra.mxu0 %v321
      %v539 = vpop.f32.mrf.mxu0
      %v540 = vadd.f32 0.0, %v539
      %v541 = vpop.f32.mrf.mxu0
      %v542 = vadd.f32 0.0, %v541
      %543 = vdwg.mxu0
      %544 = vmatpush.bf16.msra.mxu0 %v476
      %545 = vmatpush.bf16.msra.mxu0 %v475
      %546 = vmatpush.bf16.msra.mxu0 %v474
      %547 = vmatpush.bf16.msra.mxu0 %v473
      %548 = vmatpush.bf16.msra.mxu0 %v472
      %549 = vmatpush.bf16.msra.mxu0 %v471
      %550 = vmatpush.bf16.msra.mxu0 %v470
      %551 = vmatpush.bf16.msra.mxu0 %v469
      %552 = vmatmul.bf16.gmra.mxu0 %v318
      %v553 = vpop.f32.mrf.mxu0
      %v554 = vadd.f32 %v535, %v553
      %v555 = vpop.f32.mrf.mxu0
      %v556 = vadd.f32 %v537, %v555
      %557 = vmatmul.bf16.gmra.mxu0 %v322
      %v558 = vpop.f32.mrf.mxu0
      %v559 = vadd.f32 %v540, %v558
      %v560 = vpop.f32.mrf.mxu0
      %v561 = vadd.f32 %v542, %v560
      %562 = vdwg.mxu0
      %563 = vmatpush.bf16.msra.mxu0 %v484
      %564 = vmatpush.bf16.msra.mxu0 %v483
      %565 = vmatpush.bf16.msra.mxu0 %v482
      %566 = vmatpush.bf16.msra.mxu0 %v481
      %567 = vmatpush.bf16.msra.mxu0 %v480
      %568 = vmatpush.bf16.msra.mxu0 %v479
      %569 = vmatpush.bf16.msra.mxu0 %v478
      %570 = vmatpush.bf16.msra.mxu0 %v477
      %571 = vmatmul.bf16.gmra.mxu0 %v319
      %v572 = vpop.f32.mrf.mxu0
      %v573 = vadd.f32 %v554, %v572
      %v574 = vpop.f32.mrf.mxu0
      %v575 = vadd.f32 %v556, %v574
      %576 = vmatmul.bf16.gmra.mxu0 %v323
      %v577 = vpop.f32.mrf.mxu0
      %v578 = vadd.f32 %v559, %v577
      %v579 = vpop.f32.mrf.mxu0
      %v580 = vadd.f32 %v561, %v579
      %581 = vdwg.mxu0
      %582 = vmatpush.bf16.msra.mxu0 %v492
      %583 = vmatpush.bf16.msra.mxu0 %v491
      %584 = vmatpush.bf16.msra.mxu0 %v490
      %585 = vmatpush.bf16.msra.mxu0 %v489
      %586 = vmatpush.bf16.msra.mxu0 %v488
      %587 = vmatpush.bf16.msra.mxu0 %v487
      %588 = vmatpush.bf16.msra.mxu0 %v486
      %589 = vmatpush.bf16.msra.mxu0 %v485
      %590 = vmatmul.bf16.gmra.mxu0 %v320
      %v591 = vpop.f32.mrf.mxu0
      %v592 = vadd.f32 %v573, %v591
      %v593 = vpop.f32.mrf.mxu0
      %v594 = vadd.f32 %v575, %v593
      %595 = vmatmul.bf16.gmra.mxu0 %v324
      %v596 = vpop.f32.mrf.mxu0
      %v597 = vadd.f32 %v578, %v596
      %v598 = vpop.f32.mrf.mxu0
      %v599 = vadd.f32 %v580, %v598
      %600 = vdwg.mxu0
      %p601 = scmp.eq.s32.totalorder %s19, 0
      %p602 = scmp.eq.s32.totalorder %s20, 0
      %p603 = pnand %p601, %p602
      %p604 = pneg %p603
      // Predicated region
      $region37: #{classifier_forward.5} parent=35 // pred_check
        _
      $region38: #{classifier_forward.5} parent=35 // pred_check_branch
        %606 = sbr.rel (%p603) target = $region40
      $region39: #{classifier_forward.5} parent=35 // pred_region
        %607 = vst [vmem:[#allocation2] sm:$0x3] 0.0
      $region40: #{classifier_forward.5} parent=35 // pred_fallthru
        _
      // Predicated region
      $region41: #{classifier_forward.5} parent=35 // pred_check
        %p608 = pneg %p601
      $region42: #{classifier_forward.5} parent=35 // pred_check_branch
        %610 = sbr.rel (%p608) target = $region44
      $region43: #{classifier_forward.5} parent=35 // pred_region
        %v611 = vld [vmem:[#allocation2] sm:$0x3]
        %v612 = vadd.f32 %v592, %v594
        %v613 = vadd.f32 %v612, %v597
        %v614 = vadd.f32 %v613, %v599
        %v615 = vrot.slane %v614, 4
        %v616 = vadd.f32 %v614, %v615
        %v617 = vrot.slane %v616, 2
        %v618 = vadd.f32 %v616, %v617
        %v619 = vrot.slane %v618, 1
        %v620 = vadd.f32 %v618, %v619
        %v621 = vmul.f32 %v592, %v592
        %v622 = vmul.f32 %v594, %v594
        %v623 = vmul.f32 %v597, %v597
        %v624 = vmul.f32 %v599, %v599
        %v625 = vadd.f32 %v621, %v622
        %v626 = vadd.f32 %v625, %v623
        %v627 = vadd.f32 %v626, %v624
        %v628 = vrot.slane %v627, 4
        %v629 = vadd.f32 %v627, %v628
        %v630 = vrot.slane %v629, 2
        %v631 = vadd.f32 %v629, %v630
        %v632 = vrot.slane %v631, 1
        %v633 = vadd.f32 %v631, %v632
        %vm634 = vcmask 1040384
        %v635 = vsel %vm634, %v620, %v633
        %v636 = vadd.f32 %v611, %v635
        %637 = vst [vmem:[#allocation2] sm:$0x3] %v636
      $region44: #{classifier_forward.5} parent=35 // pred_fallthru
        _
      %p638 = scmp.eq.s32.totalorder %s19, 1
      // Predicated region
      $region45: #{classifier_forward.5} parent=35 // pred_check
        %p639 = pneg %p638
      $region46: #{classifier_forward.5} parent=35 // pred_check_branch
        %641 = sbr.rel (%p639) target = $region48
      $region47: #{classifier_forward.5} parent=35 // pred_region
        %v642 = vld [vmem:[#allocation2] sm:$0x1]
        %v643 = vmul.f32 %v642, 0.03125
        %v644 = vld [vmem:[#allocation2 + $0x1] sm:$0x1]
        %v645 = vmul.f32 %v644, 0.03125
        %v646 = vmul.f32 %v643, %v643
        %v647 = vsub.f32 %v645, %v646
        %v648 = vld [vmem:[%s2] sm:$0x1]
        %v649 = vadd.f32 %v647, 1e-05
        %v650 = vrsqrt.pop %v649
        %v651 = vmul.f32 %v650, %v649
        %v652 = vmul.f32 %v651, %v650
        %v653 = vmul.f32 0.5, %v652
        %v654 = vsub.f32 1.5, %v653
        %v655 = vmul.f32 %v650, %v654
        %vm656 = vweird.f32 %v649
        %vm657 = vweird.f32 %v650
        %vm658 = vmor %vm656, %vm657
        %v659 = vsel %vm658, %v650, %v655
        %v660 = vmul.f32 %v648, %v659
        %v661 = vld [vmem:[%s3] sm:$0x1]
        %v662 = vmul.f32 %v643, %v660
        %v663 = vsub.f32 %v661, %v662
        %v665 = vperm.slane %v660, 0
        %v667 = vmul.f32 %v592, %v665
        %v668 = vmul.f32 %v594, %v665
        %v669 = vmul.f32 %v597, %v665
        %v670 = vmul.f32 %v599, %v665
        %v672 = vperm.slane %v663, 0
        %v674 = vadd.f32 %v667, %v672
        %v675 = vadd.f32 %v668, %v672
        %v676 = vadd.f32 %v669, %v672
        %v677 = vadd.f32 %v670, %v672
        %vm678 = vcmp.ge.f32.partialorder %v674, 0.0
        %vm679 = vcmp.ge.f32.partialorder %v675, 0.0
        %vm680 = vcmp.ge.f32.partialorder %v676, 0.0
        %vm681 = vcmp.ge.f32.partialorder %v677, 0.0
        %v682 = vmul.f32 %v674, 0.2
        %v683 = vmul.f32 %v675, 0.2
        %v684 = vmul.f32 %v676, 0.2
        %v685 = vmul.f32 %v677, 0.2
        %v686 = vsel %vm678, %v674, %v682
        %v687 = vsel %vm679, %v675, %v683
        %v688 = vsel %vm680, %v676, %v684
        %v689 = vsel %vm681, %v677, %v685
        %690 = vst [vmem:[%s218] sm:$0xff] %v686
        %691 = vst [vmem:[%s218 + $0x8] sm:$0xff] %v687
        %692 = vst [vmem:[%s218 + $0x10] sm:$0xff] %v688
        %693 = vst [vmem:[%s218 + $0x18] sm:$0xff] %v689
      $region48: #{classifier_forward.5} parent=35 // pred_fallthru
        _
      %s694 = smul.u32 %s19, %s20
      %s695 = smul.u32 4, %s694
      %p696 = scmp.lt.s32.totalorder %s695, 3
      %s697 = scalar_select %p696, %s695, 3
      %s698 = smul.addr %s697, 8
      %s699 = scalar_lea.vmem %s4, %s698
      // Predicated region
      $region49: #{classifier_forward.5} parent=35 // pred_check
        %p700 = pneg %p136
      $region50: #{classifier_forward.5} parent=35 // pred_check_branch
        %702 = sbr.rel (%p700) target = $region52
      $region51: #{classifier_forward.5} parent=35 // pred_region
        %s703 = smul.u32 %s19, %s20
        %s704 = smul.u32 4, %s703
      $region52: #{classifier_forward.5} parent=35 // pred_fallthru
        _
    $region36: #{classifier_forward.5} parent=5 // pred_fallthru
      _
    %p705 = scmp.le.s32.totalorder 2, %s10
    // Predicated region
    $region53: #{classifier_forward.5} parent=5 // pred_check
      %p706 = pneg %p705
    $region54: #{classifier_forward.5} parent=5 // pred_check_branch
      %708 = sbr.rel (%p706) target = $region56
    $region55: #{classifier_forward.5} parent=5 // pred_region
      %s709 = ssub.s32 %s10, 2
      // Predicated region
      $region57: #{classifier_forward.5} parent=55 // pred_check
        %p710 = pneg %p142
      $region58: #{classifier_forward.5} parent=55 // pred_check_branch
        %712 = sbr.rel (%p710) target = $region60
      $region59: #{classifier_forward.5} parent=55 // pred_region
        %s713 = smul.u32 %s21, %s22
        %s714 = smul.u32 4, %s713
        %p715 = scmp.lt.s32.totalorder %s714, 3
        %s716 = scalar_select %p715, %s714, 3
        %s717 = smul.addr %s716, 8
        %s718 = scalar_lea.vmem %s4, %s717
      $region60: #{classifier_forward.5} parent=55 // pred_fallthru
        _
    $region56: #{classifier_forward.5} parent=5 // pred_fallthru
      _
  $region6: #{classifier_forward.5} parent=0 // loop_footer
    %s14 = sadd.s32 1, %s10
  $region7: #{classifier_forward.5} parent=0 // loop_footer_branch
    %9 = sbr.rel target = $region3
  $region8: #{classifier_forward.5} parent=0 // loop_exit
    _

</llo_original>
